<compile_context>
chip_gen: v7x
topology: tpu7x:2x2x1
jax: 0.10.0
libtpu: 0.0.40
codegen_flags: <defaults>
</compile_context>

<pallas_src>
import functools
import math

import jax
import jax.numpy as jnp
from jax.experimental import pallas as pl
from jax.experimental.pallas import tpu as pltpu

NEG_INF = -1e30


# ----------------------------- in-kernel helpers -----------------------------

def _layernorm(x, g, b, eps=1e-5):
    mu = jnp.mean(x, axis=-1, keepdims=True)
    xc = x - mu
    var = jnp.mean(xc * xc, axis=-1, keepdims=True)
    return xc * jax.lax.rsqrt(var + eps) * g + b


def _mha(q, k, v, bias, n_heads, wo, bo):
    """Multi-head attention core on lane-packed activations.

    q: (Tq, D) f32, k/v: (Tk, D) f32 (heads contiguous blocks of dh in lanes),
    bias: (Tq or 1, Tk) additive mask (0 = keep, -1e30 = masked),
    wo: (D, D) bf16, bo: (1, D) f32.
    """
    Tq, D = q.shape
    dh = D // n_heads
    scale = 1.0 / math.sqrt(dh)
    qb = q.astype(jnp.bfloat16)
    kb = k.astype(jnp.bfloat16)
    vb = v.astype(jnp.bfloat16)
    zero_mask = bias < -1e20   # ESPnet: masked keys carry exactly-zero weight

    ctx_heads = []
    for h in range(n_heads):           # static unroll; scores are per-head
        lo = h * dh
        qh = qb[:, lo:lo + dh]
        kh = kb[:, lo:lo + dh]
        vh = vb[:, lo:lo + dh]
        # NT contraction; MXU consumes the RHS untransposed.
        sc = jax.lax.dot_general(qh, kh, (((1,), (1,)), ((), ())),
                                 preferred_element_type=jnp.float32)
        sc = sc * scale + bias                              # (Tq, Tk)
        m = jnp.max(sc, axis=-1, keepdims=True)
        e = jnp.exp(sc - m)
        s = jnp.sum(e, axis=-1, keepdims=True)
        p = e * pl.reciprocal(s, approx=True)               # EUP reciprocal
        p = jnp.where(zero_mask, 0.0, p)
        ctx_heads.append(jnp.dot(p.astype(jnp.bfloat16), vh,
                                 preferred_element_type=jnp.float32))  # (Tq,dh)

    ctx = jnp.concatenate(ctx_heads, axis=-1)               # (Tq, D) f32
    return jnp.dot(ctx.astype(jnp.bfloat16), wo,
                   preferred_element_type=jnp.float32) + bo


# --------------------------- decoder stack kernel -----------------------------

def _decoder_stack_kernel(
    n_heads, n_layers,
    # scalar-prefetch refs (SMEM)
    tlen_ref, mlen_ref,
    # per-batch tiles
    x_in_ref, mem_ref,
    # per-layer weight slices (layer axis squeezed by BlockSpec)
    ln1_g, ln1_b, ln2_g, ln2_b,
    w_qkv, b_qkv, sa_wo, sa_bo,
    ca_wq, ca_bq, ca_wkv, ca_bkv, ca_wo, ca_bo,
    ff_w1, ff_b1, ff_w2, ff_b2,
    # output (revisited across the layer axis) + VMEM carry
    out_ref, x_sc,
):
    b = pl.program_id(0)
    l = pl.program_id(1)
    T, D = x_sc.shape
    S = mem_ref.shape[0]

    tlen = tlen_ref[b]
    mlen = mlen_ref[b]

    @pl.when(l == 0)
    def _():
        x_sc[...] = x_in_ref[...]

    x = x_sc[...]                                            # (T, D) f32

    # Additive masks built in-kernel from lengths (no HBM mask tensors).
    qi = jax.lax.broadcasted_iota(jnp.int32, (T, T), 0)
    ki = jax.lax.broadcasted_iota(jnp.int32, (T, T), 1)
    tbias = jnp.where((ki < tlen) & (ki <= qi), 0.0, NEG_INF)   # (T, T)
    si = jax.lax.broadcasted_iota(jnp.int32, (1, S), 1)
    mbias = jnp.where(si < mlen, 0.0, NEG_INF)                  # (1, S)

    # ---- self-attention sub-layer (pre-norm) ----
    y = _layernorm(x, ln1_g[...], ln1_b[...])
    qkv = jnp.dot(y.astype(jnp.bfloat16), w_qkv[...],
                  preferred_element_type=jnp.float32) + b_qkv[...]   # (T, 3D)
    q, k, v = qkv[:, :D], qkv[:, D:2 * D], qkv[:, 2 * D:]
    x = x + _mha(q, k, v, tbias, n_heads, sa_wo[...], sa_bo[...])

    # ---- source-attention sub-layer (pre-norm) ----
    y = _layernorm(x, ln2_g[...], ln2_b[...])
    mem = mem_ref[...].astype(jnp.bfloat16)                          # (S, D)
    q = jnp.dot(y.astype(jnp.bfloat16), ca_wq[...],
                preferred_element_type=jnp.float32) + ca_bq[...]     # (T, D)
    kv = jnp.dot(mem, ca_wkv[...],
                 preferred_element_type=jnp.float32) + ca_bkv[...]   # (S, 2D)
    k, v = kv[:, :D], kv[:, D:]
    x = x + _mha(q, k, v, mbias, n_heads, ca_wo[...], ca_bo[...])

    # ---- position-wise feed-forward (reference block has no norm3) ----
    h1 = jnp.dot(x.astype(jnp.bfloat16), ff_w1[...],
                 preferred_element_type=jnp.float32) + ff_b1[...]
    h1 = jnp.maximum(h1, 0.0)
    x = x + (jnp.dot(h1.astype(jnp.bfloat16), ff_w2[...],
                     preferred_element_type=jnp.float32) + ff_b2[...])

    x_sc[...] = x

    @pl.when(l == n_layers - 1)
    def _():
        out_ref[...] = x.astype(out_ref.dtype)


def _final_norm_proj_kernel(x_ref, g_ref, b_ref, w_ref, wb_ref, out_ref):
    x = _layernorm(x_ref[...], g_ref[...], b_ref[...])
    out_ref[...] = (jnp.dot(x.astype(jnp.bfloat16), w_ref[...],
                            preferred_element_type=jnp.float32)
                    + wb_ref[...]).astype(out_ref.dtype)


# --------------------------------- wrappers -----------------------------------

STACK_PARAM_ORDER = (
    "ln1_g", "ln1_b", "ln2_g", "ln2_b",
    "w_qkv", "b_qkv", "sa_wo", "sa_bo",
    "ca_wq", "ca_bq", "ca_wkv", "ca_bkv", "ca_wo", "ca_bo",
    "ff_w1", "ff_b1", "ff_w2", "ff_b2",
)


def _layer_spec(a):
    """BlockSpec for a layer-stacked weight (L, *rest): select layer l."""
    rest = a.shape[1:]
    nd = len(rest)
    return pl.BlockSpec((None,) + rest,
                        lambda b, l, *_, _nd=nd: (l,) + (0,) * _nd)


def decoder_stack(x, memory, tlens, mlens, stack_params, n_heads):
    B, T, D = x.shape
    S = memory.shape[1]
    n_layers = stack_params["w_qkv"].shape[0]
    ordered = [stack_params[k] for k in STACK_PARAM_ORDER]

    in_specs = [
        pl.BlockSpec((None, T, D), lambda b, l, *_: (b, 0, 0)),   # embedded input
        pl.BlockSpec((None, S, D), lambda b, l, *_: (b, 0, 0)),   # encoder memory
    ] + [_layer_spec(p) for p in ordered]

    grid_spec = pltpu.PrefetchScalarGridSpec(
        num_scalar_prefetch=2,
        grid=(B, n_layers),
        in_specs=in_specs,
        out_specs=pl.BlockSpec((None, T, D), lambda b, l, *_: (b, 0, 0)),
        scratch_shapes=[pltpu.VMEM((T, D), jnp.float32)],   # layer-resident carry
    )
    return pl.pallas_call(
        functools.partial(_decoder_stack_kernel, n_heads, n_layers),
        out_shape=jax.ShapeDtypeStruct((B, T, D), jnp.float32),
        grid_spec=grid_spec,
        compiler_params=pltpu.CompilerParams(
            dimension_semantics=("parallel", "arbitrary")),
    )(tlens, mlens, x, memory, *ordered)


def final_norm_project(x, g, b, w, wb, tv=2048):
    B, T, D = x.shape
    V = w.shape[1]
    tv = min(tv, V)                      # lane-dense vocab tile (multiple of 128)
    nv = pl.cdiv(V, tv)
    return pl.pallas_call(
        _final_norm_proj_kernel,
        out_shape=jax.ShapeDtypeStruct((B, T, V), jnp.float32),
        grid=(B, nv),
        in_specs=[pl.BlockSpec((None, T, D), lambda i, j: (i, 0, 0)),
                  pl.BlockSpec((1, D), lambda i, j: (0, 0)),
                  pl.BlockSpec((1, D), lambda i, j: (0, 0)),
                  pl.BlockSpec((D, tv), lambda i, j: (0, j)),
                  pl.BlockSpec((1, tv), lambda i, j: (0, j))],
        out_specs=pl.BlockSpec((None, T, tv), lambda i, j: (i, 0, j)),
        compiler_params=pltpu.CompilerParams(
            dimension_semantics=("parallel", "parallel")),
    )(x, g, b, w, wb)


def _sinusoidal_pos_encoding(T, D):
    pos = jnp.arange(T, dtype=jnp.float32)[:, None]
    div = jnp.exp(jnp.arange(0, D, 2, dtype=jnp.float32) * (-math.log(10000.0) / D))
    pe = jnp.zeros((T, D), jnp.float32)
    pe = pe.at[:, 0::2].set(jnp.sin(pos * div))
    pe = pe.at[:, 1::2].set(jnp.cos(pos * div))
    return pe


def transformer_decoder_forward(params, encoder_outputs, encoder_outputs_length,
                                ys_in_pad, ys_in_lens, n_heads):
    B, S, D = encoder_outputs.shape
    T = ys_in_pad.shape[1]

    # Embedding + sinusoidal positional encoding (plain JAX: data-dependent gather).
    # TODO(synk): embedding gather left outside Pallas (row gather not worth a kernel here).
    x = (params["embed"][ys_in_pad] * math.sqrt(D)
         + _sinusoidal_pos_encoding(T, D)[None]).astype(jnp.float32)

    # Whole decoder stack in one kernel; encoder memory travels bf16 in HBM.
    x = decoder_stack(x, encoder_outputs.astype(jnp.bfloat16),
                      ys_in_lens.astype(jnp.int32),
                      encoder_outputs_length.astype(jnp.int32),
                      params["stack"], n_heads)

    logits = final_norm_project(x, params["norm_g"], params["norm_b"],
                                params["out_w"], params["out_b"])

    # olens mirrors the reference tgt_mask.sum(1)  -> (B, T)
    t = jnp.arange(T)
    tgt_keep = ((t[None, :] < ys_in_lens[:, None])[:, None, :]
                & (t[None, :] <= t[:, None])[None, :, :])
    olens = tgt_keep.sum(axis=1).astype(jnp.int32)
    return logits, olens


# ------------------------------ parameter init --------------------------------

def init_params(key, vocab, D, H, F, num_layers):
    # Fused, lane-dense weight packing (how PyTorch weights would map):
    #   w_qkv = concat([Wq.T, Wk.T, Wv.T], axis=1)  (D, 3D), heads contiguous
    #   ca_wkv = concat([Wk.T, Wv.T], axis=1)       (D, 2D)
    #   *_wo   = Wout.T                             (D, D)
    L = num_layers
    keys = jax.random.split(key, 16)

    def w(k, shape, fan_in):
        return (jax.random.normal(k, shape, jnp.float32)
                / math.sqrt(fan_in)).astype(jnp.bfloat16)

    def bias(k, shape):
        return jax.random.normal(k, shape, jnp.float32) * 0.01

    stack = {
        "ln1_g": jnp.ones((L, 1, D), jnp.float32),
        "ln1_b": jnp.zeros((L, 1, D), jnp.float32),
        "ln2_g": jnp.ones((L, 1, D), jnp.float32),
        "ln2_b": jnp.zeros((L, 1, D), jnp.float32),
        "w_qkv": w(keys[0], (L, D, 3 * D), D), "b_qkv": bias(keys[1], (L, 1, 3 * D)),
        "sa_wo": w(keys[2], (L, D, D), D),     "sa_bo": bias(keys[3], (L, 1, D)),
        "ca_wq": w(keys[4], (L, D, D), D),     "ca_bq": bias(keys[5], (L, 1, D)),
        "ca_wkv": w(keys[6], (L, D, 2 * D), D), "ca_bkv": bias(keys[7], (L, 1, 2 * D)),
        "ca_wo": w(keys[8], (L, D, D), D),     "ca_bo": bias(keys[9], (L, 1, D)),
        "ff_w1": w(keys[10], (L, D, F), D),    "ff_b1": jnp.zeros((L, 1, F), jnp.float32),
        "ff_w2": w(keys[11], (L, F, D), F),    "ff_b2": jnp.zeros((L, 1, D), jnp.float32),
    }
    return {
        "embed": jax.random.normal(keys[12], (vocab, D), jnp.float32) * 0.02,
        "stack": stack,
        "norm_g": jnp.ones((1, D), jnp.float32),
        "norm_b": jnp.zeros((1, D), jnp.float32),
        "out_w": w(keys[13], (D, vocab), D),
        "out_b": bias(keys[14], (1, vocab)),
    }


# ----------------------------------- main --------------------------------------

if __name__ == "__main__":
    key = jax.random.PRNGKey(0)
    B, T, S = 2, 16, 24            # batch, maxlen_out, maxlen_in
    D, H, F = 128, 4, 256          # attention_dim, attention_heads, linear_units
    V, L = 256, 2                  # vocab_size (lane-dense), num_layers

    k_enc, k_tok, k_par = jax.random.split(key, 3)
    encoder_outputs = jax.random.normal(k_enc, (B, S, D), jnp.float32)
    encoder_outputs_length = jnp.array([S, S - 8], jnp.int32)
    ys_in_pad = jax.random.randint(k_tok, (B, T), 0, V, jnp.int32)
    ys_in_lens = jnp.array([T, T - 4], jnp.int32)

    params = init_params(k_par, V, D, H, F, L)

    fwd = jax.jit(functools.partial(transformer_decoder_forward, n_heads=H))
    logits, olens = fwd(params, encoder_outputs, encoder_outputs_length,
                        ys_in_pad, ys_in_lens)
    jax.block_until_ready(logits)

    assert logits.shape == (B, T, V)
    assert olens.shape == (B, T)
    assert bool(jnp.all(jnp.isfinite(logits)))
    print("KERNEL_OK")
</pallas_src>

<mosaic_0001>
module attributes {stable_mosaic.version = 11 : i64} {
  func.func @_final_norm_proj_kernel(%arg0: i32, %arg1: i32, %arg2: memref<1x16x128xf32, #tpu.memory_space<vmem>>, %arg3: memref<1x128xf32, #tpu.memory_space<vmem>>, %arg4: memref<1x128xf32, #tpu.memory_space<vmem>>, %arg5: memref<128x256xbf16, #tpu.memory_space<vmem>>, %arg6: memref<1x256xf32, #tpu.memory_space<vmem>>, %arg7: memref<1x16x256xf32, #tpu.memory_space<vmem>>) attributes {dimension_semantics = [#tpu.dimension_semantics<parallel>, #tpu.dimension_semantics<parallel>], iteration_bounds = array<i64: 2, 1>, scalar_prefetch = 0 : i64, scratch_operands = 0 : i64, tpu.core_type = #tpu.core_type<tc>, window_params = [{transform_indices = @transform_0, window_bounds = array<i64: 1, 16, 128>}, {pipeline_mode = #tpu.pipeline_mode<synchronous>, transform_indices = @transform_1, window_bounds = array<i64: 1, 128>}, {pipeline_mode = #tpu.pipeline_mode<synchronous>, transform_indices = @transform_2, window_bounds = array<i64: 1, 128>}, {transform_indices = @transform_3, window_bounds = array<i64: 128, 256>}, {transform_indices = @transform_4, window_bounds = array<i64: 1, 256>}, {transform_indices = @transform_5, window_bounds = array<i64: 1, 16, 256>}]} {
    %c0 = arith.constant 0 : index
    %c0_0 = arith.constant 0 : index
    %c0_1 = arith.constant 0 : index
    %0 = vector.load %arg2[%c0, %c0_0, %c0_1] : memref<1x16x128xf32, #tpu.memory_space<vmem>>, vector<1x16x128xf32>
    %1 = vector.shape_cast %0 : vector<1x16x128xf32> to vector<16x128xf32>
    %c0_2 = arith.constant 0 : index
    %c0_3 = arith.constant 0 : index
    %2 = vector.load %arg3[%c0_2, %c0_3] : memref<1x128xf32, #tpu.memory_space<vmem>>, vector<1x128xf32>
    %c0_4 = arith.constant 0 : index
    %c0_5 = arith.constant 0 : index
    %3 = vector.load %arg4[%c0_4, %c0_5] : memref<1x128xf32, #tpu.memory_space<vmem>>, vector<1x128xf32>
    %cst = arith.constant dense<0.000000e+00> : vector<16xf32>
    %4 = vector.multi_reduction <add>, %1, %cst [1] : vector<16x128xf32> to vector<16xf32>
    %5 = vector.shape_cast %4 : vector<16xf32> to vector<16x1xf32>
    %cst_6 = arith.constant 1.280000e+02 : f32
    %6 = vector.broadcast %cst_6 : f32 to vector<16x1xf32>
    %7 = arith.divf %5, %6 : vector<16x1xf32>
    %8 = vector.broadcast %7 : vector<16x1xf32> to vector<16x128xf32>
    %9 = arith.subf %1, %8 : vector<16x128xf32>
    %10 = arith.mulf %9, %9 : vector<16x128xf32>
    %cst_7 = arith.constant dense<0.000000e+00> : vector<16xf32>
    %11 = vector.multi_reduction <add>, %10, %cst_7 [1] : vector<16x128xf32> to vector<16xf32>
    %12 = vector.shape_cast %11 : vector<16xf32> to vector<16x1xf32>
    %cst_8 = arith.constant 1.280000e+02 : f32
    %13 = vector.broadcast %cst_8 : f32 to vector<16x1xf32>
    %14 = arith.divf %12, %13 : vector<16x1xf32>
    %cst_9 = arith.constant 9.99999974E-6 : f32
    %15 = vector.broadcast %cst_9 : f32 to vector<16x1xf32>
    %16 = arith.addf %14, %15 : vector<16x1xf32>
    %17 = math.rsqrt %16 : vector<16x1xf32>
    %18 = vector.broadcast %17 : vector<16x1xf32> to vector<16x128xf32>
    %19 = arith.mulf %9, %18 : vector<16x128xf32>
    %20 = vector.broadcast %2 : vector<1x128xf32> to vector<16x128xf32>
    %21 = arith.mulf %19, %20 : vector<16x128xf32>
    %22 = vector.broadcast %3 : vector<1x128xf32> to vector<16x128xf32>
    %23 = arith.addf %21, %22 : vector<16x128xf32>
    %24 = arith.truncf %23 : vector<16x128xf32> to vector<16x128xbf16>
    %c0_10 = arith.constant 0 : index
    %c0_11 = arith.constant 0 : index
    %25 = vector.load %arg5[%c0_10, %c0_11] : memref<128x256xbf16, #tpu.memory_space<vmem>>, vector<128x256xbf16>
    %cst_12 = arith.constant dense<0.000000e+00> : vector<16x256xf32>
    %26 = tpu.matmul %24, %25, %cst_12 {dimension_numbers = #tpu.dot_dimension_numbers<[1], [0], [0], [1], [0, 0, 1, 1], [], []>} : vector<16x128xbf16>, vector<128x256xbf16>, vector<16x256xf32> -> vector<16x256xf32>
    %c0_13 = arith.constant 0 : index
    %c0_14 = arith.constant 0 : index
    %27 = vector.load %arg6[%c0_13, %c0_14] : memref<1x256xf32, #tpu.memory_space<vmem>>, vector<1x256xf32>
    %28 = vector.broadcast %27 : vector<1x256xf32> to vector<16x256xf32>
    %29 = arith.addf %26, %28 : vector<16x256xf32>
    %c0_15 = arith.constant 0 : index
    %c0_16 = arith.constant 0 : index
    %c0_17 = arith.constant 0 : index
    %30 = vector.load %arg7[%c0_15, %c0_16, %c0_17] : memref<1x16x256xf32, #tpu.memory_space<vmem>>, vector<1x16x256xf32>
    %31 = vector.shape_cast %30 : vector<1x16x256xf32> to vector<16x256xf32>
    %32 = vector.shape_cast %29 : vector<16x256xf32> to vector<1x16x256xf32>
    tpu.vector_store %arg7[%c0_15, %c0_16, %c0_17], %32 {strides = array<i32>} : memref<1x16x256xf32, #tpu.memory_space<vmem>>, vector<1x16x256xf32>,
    return
  }
  func.func @transform_0(%arg0: i32, %arg1: i32) -> (i32, i32, i32) {
    %c0_i32 = arith.constant 0 : i32
    %c0_i32_0 = arith.constant 0 : i32
    %c0_i32_1 = arith.constant 0 : i32
    return %arg0, %c0_i32, %c0_i32_0 : i32, i32, i32
  }
  func.func @transform_1(%arg0: i32, %arg1: i32) -> (i32, i32) {
    %c0_i32 = arith.constant 0 : i32
    %c0_i32_0 = arith.constant 0 : i32
    %c0_i32_1 = arith.constant 0 : i32
    return %c0_i32, %c0_i32_0 : i32, i32
  }
  func.func @transform_2(%arg0: i32, %arg1: i32) -> (i32, i32) {
    %c0_i32 = arith.constant 0 : i32
    %c0_i32_0 = arith.constant 0 : i32
    %c0_i32_1 = arith.constant 0 : i32
    return %c0_i32, %c0_i32_0 : i32, i32
  }
  func.func @transform_3(%arg0: i32, %arg1: i32) -> (i32, i32) {
    %c0_i32 = arith.constant 0 : i32
    %c0_i32_0 = arith.constant 0 : i32
    return %c0_i32, %arg1 : i32, i32
  }
  func.func @transform_4(%arg0: i32, %arg1: i32) -> (i32, i32) {
    %c0_i32 = arith.constant 0 : i32
    %c0_i32_0 = arith.constant 0 : i32
    return %c0_i32, %arg1 : i32, i32
  }
  func.func @transform_5(%arg0: i32, %arg1: i32) -> (i32, i32, i32) {
    %c0_i32 = arith.constant 0 : i32
    %c0_i32_0 = arith.constant 0 : i32
    return %arg0, %c0_i32, %arg1 : i32, i32, i32
  }
}

module attributes {stable_mosaic.version = 11 : i64} {
  func.func @_decoder_stack_kernel(%arg0: i32, %arg1: i32, %arg2: memref<2xi32, #tpu.memory_space<smem>>, %arg3: memref<2xi32, #tpu.memory_space<smem>>, %arg4: memref<1x16x128xf32, #tpu.memory_space<vmem>>, %arg5: memref<1x24x128xbf16, #tpu.memory_space<vmem>>, %arg6: memref<1x1x128xf32, #tpu.memory_space<vmem>>, %arg7: memref<1x1x128xf32, #tpu.memory_space<vmem>>, %arg8: memref<1x1x128xf32, #tpu.memory_space<vmem>>, %arg9: memref<1x1x128xf32, #tpu.memory_space<vmem>>, %arg10: memref<1x128x384xbf16, #tpu.memory_space<vmem>>, %arg11: memref<1x1x384xf32, #tpu.memory_space<vmem>>, %arg12: memref<1x128x128xbf16, #tpu.memory_space<vmem>>, %arg13: memref<1x1x128xf32, #tpu.memory_space<vmem>>, %arg14: memref<1x128x128xbf16, #tpu.memory_space<vmem>>, %arg15: memref<1x1x128xf32, #tpu.memory_space<vmem>>, %arg16: memref<1x128x256xbf16, #tpu.memory_space<vmem>>, %arg17: memref<1x1x256xf32, #tpu.memory_space<vmem>>, %arg18: memref<1x128x128xbf16, #tpu.memory_space<vmem>>, %arg19: memref<1x1x128xf32, #tpu.memory_space<vmem>>, %arg20: memref<1x128x256xbf16, #tpu.memory_space<vmem>>, %arg21: memref<1x1x256xf32, #tpu.memory_space<vmem>>, %arg22: memref<1x256x128xbf16, #tpu.memory_space<vmem>>, %arg23: memref<1x1x128xf32, #tpu.memory_space<vmem>>, %arg24: memref<1x16x128xf32, #tpu.memory_space<vmem>>, %arg25: memref<16x128xf32, #tpu.memory_space<vmem>>) attributes {dimension_semantics = [#tpu.dimension_semantics<parallel>, #tpu.dimension_semantics<arbitrary>], iteration_bounds = array<i64: 2, 2>, scalar_prefetch = 2 : i64, scratch_operands = 1 : i64, tpu.core_type = #tpu.core_type<tc>, window_params = [{transform_indices = @transform_0, window_bounds = array<i64: 1, 16, 128>}, {transform_indices = @transform_1, window_bounds = array<i64: 1, 24, 128>}, {transform_indices = @transform_2, window_bounds = array<i64: 1, 1, 128>}, {transform_indices = @transform_3, window_bounds = array<i64: 1, 1, 128>}, {transform_indices = @transform_4, window_bounds = array<i64: 1, 1, 128>}, {transform_indices = @transform_5, window_bounds = array<i64: 1, 1, 128>}, {transform_indices = @transform_6, window_bounds = array<i64: 1, 128, 384>}, {transform_indices = @transform_7, window_bounds = array<i64: 1, 1, 384>}, {transform_indices = @transform_8, window_bounds = array<i64: 1, 128, 128>}, {transform_indices = @transform_9, window_bounds = array<i64: 1, 1, 128>}, {transform_indices = @transform_10, window_bounds = array<i64: 1, 128, 128>}, {transform_indices = @transform_11, window_bounds = array<i64: 1, 1, 128>}, {transform_indices = @transform_12, window_bounds = array<i64: 1, 128, 256>}, {transform_indices = @transform_13, window_bounds = array<i64: 1, 1, 256>}, {transform_indices = @transform_14, window_bounds = array<i64: 1, 128, 128>}, {transform_indices = @transform_15, window_bounds = array<i64: 1, 1, 128>}, {transform_indices = @transform_16, window_bounds = array<i64: 1, 128, 256>}, {transform_indices = @transform_17, window_bounds = array<i64: 1, 1, 256>}, {transform_indices = @transform_18, window_bounds = array<i64: 1, 256, 128>}, {transform_indices = @transform_19, window_bounds = array<i64: 1, 1, 128>}, {transform_indices = @transform_20, window_bounds = array<i64: 1, 16, 128>}]} {
    %0 = arith.index_cast %arg0 : i32 to index
    %1 = memref.load %arg2[%0] : memref<2xi32, #tpu.memory_space<smem>>
    %2 = arith.index_cast %arg0 : i32 to index
    %3 = memref.load %arg3[%2] : memref<2xi32, #tpu.memory_space<smem>>
    %c0_i32 = arith.constant 0 : i32
    %4 = arith.cmpi eq, %arg1, %c0_i32 : i32
    %5 = arith.extui %4 : i1 to i32
    %c0_i32_0 = arith.constant 0 : i32
    %6 = arith.cmpi ne, %5, %c0_i32_0 : i32
    scf.if %6 {
      %c0_133 = arith.constant 0 : index
      %c0_134 = arith.constant 0 : index
      %c0_135 = arith.constant 0 : index
      %334 = vector.load %arg4[%c0_133, %c0_134, %c0_135] : memref<1x16x128xf32, #tpu.memory_space<vmem>>, vector<1x16x128xf32>
      %335 = vector.shape_cast %334 : vector<1x16x128xf32> to vector<16x128xf32>
      %c0_136 = arith.constant 0 : index
      %c0_137 = arith.constant 0 : index
      %336 = vector.load %arg25[%c0_136, %c0_137] : memref<16x128xf32, #tpu.memory_space<vmem>>, vector<16x128xf32>
      tpu.vector_store %arg25[%c0_136, %c0_137], %335 {strides = array<i32>} : memref<16x128xf32, #tpu.memory_space<vmem>>, vector<16x128xf32>,
    } else {
    }
    %c0 = arith.constant 0 : index
    %c0_1 = arith.constant 0 : index
    %7 = vector.load %arg25[%c0, %c0_1] : memref<16x128xf32, #tpu.memory_space<vmem>>, vector<16x128xf32>
    %8 = tpu.iota {dimensions = array<i32: 0>} : vector<16x16xi32>
    %9 = tpu.iota {dimensions = array<i32: 1>} : vector<16x16xi32>
    %10 = vector.broadcast %1 : i32 to vector<16x16xi32>
    %11 = arith.cmpi slt, %9, %10 : vector<16x16xi32>
    %12 = arith.cmpi sle, %9, %8 : vector<16x16xi32>
    %13 = arith.andi %11, %12 : vector<16x16xi1>
    %cst = arith.constant 0.000000e+00 : f32
    %cst_2 = arith.constant -1.000000e+30 : f32
    %14 = vector.broadcast %cst : f32 to vector<16x16xf32>
    %15 = vector.broadcast %cst_2 : f32 to vector<16x16xf32>
    %16 = arith.select %13, %14, %15 : vector<16x16xi1>, vector<16x16xf32>
    %17 = tpu.iota {dimensions = array<i32: 1>} : vector<1x24xi32>
    %18 = vector.broadcast %3 : i32 to vector<1x24xi32>
    %19 = arith.cmpi slt, %17, %18 : vector<1x24xi32>
    %cst_3 = arith.constant 0.000000e+00 : f32
    %cst_4 = arith.constant -1.000000e+30 : f32
    %20 = vector.broadcast %cst_3 : f32 to vector<1x24xf32>
    %21 = vector.broadcast %cst_4 : f32 to vector<1x24xf32>
    %22 = arith.select %19, %20, %21 : vector<1x24xi1>, vector<1x24xf32>
    %c0_5 = arith.constant 0 : index
    %c0_6 = arith.constant 0 : index
    %c0_7 = arith.constant 0 : index
    %23 = vector.load %arg6[%c0_5, %c0_6, %c0_7] : memref<1x1x128xf32, #tpu.memory_space<vmem>>, vector<1x1x128xf32>
    %24 = vector.shape_cast %23 : vector<1x1x128xf32> to vector<1x128xf32>
    %c0_8 = arith.constant 0 : index
    %c0_9 = arith.constant 0 : index
    %c0_10 = arith.constant 0 : index
    %25 = vector.load %arg7[%c0_8, %c0_9, %c0_10] : memref<1x1x128xf32, #tpu.memory_space<vmem>>, vector<1x1x128xf32>
    %26 = vector.shape_cast %25 : vector<1x1x128xf32> to vector<1x128xf32>
    %cst_11 = arith.constant dense<0.000000e+00> : vector<16xf32>
    %27 = vector.multi_reduction <add>, %7, %cst_11 [1] : vector<16x128xf32> to vector<16xf32>
    %28 = vector.shape_cast %27 : vector<16xf32> to vector<16x1xf32>
    %cst_12 = arith.constant 1.280000e+02 : f32
    %29 = vector.broadcast %cst_12 : f32 to vector<16x1xf32>
    %30 = arith.divf %28, %29 : vector<16x1xf32>
    %31 = vector.broadcast %30 : vector<16x1xf32> to vector<16x128xf32>
    %32 = arith.subf %7, %31 : vector<16x128xf32>
    %33 = arith.mulf %32, %32 : vector<16x128xf32>
    %cst_13 = arith.constant dense<0.000000e+00> : vector<16xf32>
    %34 = vector.multi_reduction <add>, %33, %cst_13 [1] : vector<16x128xf32> to vector<16xf32>
    %35 = vector.shape_cast %34 : vector<16xf32> to vector<16x1xf32>
    %cst_14 = arith.constant 1.280000e+02 : f32
    %36 = vector.broadcast %cst_14 : f32 to vector<16x1xf32>
    %37 = arith.divf %35, %36 : vector<16x1xf32>
    %cst_15 = arith.constant 9.99999974E-6 : f32
    %38 = vector.broadcast %cst_15 : f32 to vector<16x1xf32>
    %39 = arith.addf %37, %38 : vector<16x1xf32>
    %40 = math.rsqrt %39 : vector<16x1xf32>
    %41 = vector.broadcast %40 : vector<16x1xf32> to vector<16x128xf32>
    %42 = arith.mulf %32, %41 : vector<16x128xf32>
    %43 = vector.broadcast %24 : vector<1x128xf32> to vector<16x128xf32>
    %44 = arith.mulf %42, %43 : vector<16x128xf32>
    %45 = vector.broadcast %26 : vector<1x128xf32> to vector<16x128xf32>
    %46 = arith.addf %44, %45 : vector<16x128xf32>
    %47 = arith.truncf %46 : vector<16x128xf32> to vector<16x128xbf16>
    %c0_16 = arith.constant 0 : index
    %c0_17 = arith.constant 0 : index
    %c0_18 = arith.constant 0 : index
    %48 = vector.load %arg10[%c0_16, %c0_17, %c0_18] : memref<1x128x384xbf16, #tpu.memory_space<vmem>>, vector<1x128x384xbf16>
    %49 = vector.shape_cast %48 : vector<1x128x384xbf16> to vector<128x384xbf16>
    %cst_19 = arith.constant dense<0.000000e+00> : vector<16x384xf32>
    %50 = tpu.matmul %47, %49, %cst_19 {dimension_numbers = #tpu.dot_dimension_numbers<[1], [0], [0], [1], [0, 0, 1, 1], [], []>} : vector<16x128xbf16>, vector<128x384xbf16>, vector<16x384xf32> -> vector<16x384xf32>
    %c0_20 = arith.constant 0 : index
    %c0_21 = arith.constant 0 : index
    %c0_22 = arith.constant 0 : index
    %51 = vector.load %arg11[%c0_20, %c0_21, %c0_22] : memref<1x1x384xf32, #tpu.memory_space<vmem>>, vector<1x1x384xf32>
    %52 = vector.shape_cast %51 : vector<1x1x384xf32> to vector<1x384xf32>
    %53 = vector.broadcast %52 : vector<1x384xf32> to vector<16x384xf32>
    %54 = arith.addf %50, %53 : vector<16x384xf32>
    %55 = vector.extract_strided_slice %54 {offsets = [0, 0], sizes = [16, 128], strides = [1, 1]} : vector<16x384xf32> to vector<16x128xf32>
    %56 = vector.extract_strided_slice %54 {offsets = [0, 128], sizes = [16, 128], strides = [1, 1]} : vector<16x384xf32> to vector<16x128xf32>
    %57 = vector.extract_strided_slice %54 {offsets = [0, 256], sizes = [16, 128], strides = [1, 1]} : vector<16x384xf32> to vector<16x128xf32>
    %c0_23 = arith.constant 0 : index
    %c0_24 = arith.constant 0 : index
    %c0_25 = arith.constant 0 : index
    %58 = vector.load %arg12[%c0_23, %c0_24, %c0_25] : memref<1x128x128xbf16, #tpu.memory_space<vmem>>, vector<1x128x128xbf16>
    %59 = vector.shape_cast %58 : vector<1x128x128xbf16> to vector<128x128xbf16>
    %c0_26 = arith.constant 0 : index
    %c0_27 = arith.constant 0 : index
    %c0_28 = arith.constant 0 : index
    %60 = vector.load %arg13[%c0_26, %c0_27, %c0_28] : memref<1x1x128xf32, #tpu.memory_space<vmem>>, vector<1x1x128xf32>
    %61 = vector.shape_cast %60 : vector<1x1x128xf32> to vector<1x128xf32>
    %62 = arith.truncf %55 : vector<16x128xf32> to vector<16x128xbf16>
    %63 = arith.truncf %56 : vector<16x128xf32> to vector<16x128xbf16>
    %64 = arith.truncf %57 : vector<16x128xf32> to vector<16x128xbf16>
    %cst_29 = arith.constant -1.000000e+20 : f32
    %65 = vector.broadcast %cst_29 : f32 to vector<16x16xf32>
    %66 = arith.cmpf olt, %16, %65 : vector<16x16xf32>
    %67 = vector.extract_strided_slice %62 {offsets = [0, 0], sizes = [16, 32], strides = [1, 1]} : vector<16x128xbf16> to vector<16x32xbf16>
    %68 = vector.extract_strided_slice %63 {offsets = [0, 0], sizes = [16, 32], strides = [1, 1]} : vector<16x128xbf16> to vector<16x32xbf16>
    %69 = vector.extract_strided_slice %64 {offsets = [0, 0], sizes = [16, 32], strides = [1, 1]} : vector<16x128xbf16> to vector<16x32xbf16>
    %cst_30 = arith.constant dense<0.000000e+00> : vector<16x16xf32>
    %70 = tpu.matmul %67, %68, %cst_30 {dimension_numbers = #tpu.dot_dimension_numbers<[1], [1], [0], [0], [0, 0, 1, 0], [], []>} : vector<16x32xbf16>, vector<16x32xbf16>, vector<16x16xf32> -> vector<16x16xf32>
    %cst_31 = arith.constant 0.176776692 : f32
    %71 = vector.broadcast %cst_31 : f32 to vector<16x16xf32>
    %72 = arith.mulf %70, %71 : vector<16x16xf32>
    %73 = arith.addf %72, %16 : vector<16x16xf32>
    %cst_32 = arith.constant dense<0xFF800000> : vector<16xf32>
    %74 = vector.multi_reduction <maximumf>, %73, %cst_32 [1] : vector<16x16xf32> to vector<16xf32>
    %75 = vector.shape_cast %74 : vector<16xf32> to vector<16x1xf32>
    %76 = vector.broadcast %75 : vector<16x1xf32> to vector<16x16xf32>
    %77 = arith.subf %73, %76 : vector<16x16xf32>
    %78 = math.exp %77 : vector<16x16xf32>
    %cst_33 = arith.constant dense<0.000000e+00> : vector<16xf32>
    %79 = vector.multi_reduction <add>, %78, %cst_33 [1] : vector<16x16xf32> to vector<16xf32>
    %80 = vector.shape_cast %79 : vector<16xf32> to vector<16x1xf32>
    %81 = tpu.reciprocal %80 {approx = true} : vector<16x1xf32> -> vector<16x1xf32>
    %82 = vector.broadcast %81 : vector<16x1xf32> to vector<16x16xf32>
    %83 = arith.mulf %78, %82 : vector<16x16xf32>
    %cst_34 = arith.constant 0.000000e+00 : f32
    %84 = vector.broadcast %cst_34 : f32 to vector<16x16xf32>
    %85 = arith.select %66, %84, %83 : vector<16x16xi1>, vector<16x16xf32>
    %86 = arith.truncf %85 : vector<16x16xf32> to vector<16x16xbf16>
    %cst_35 = arith.constant dense<0.000000e+00> : vector<16x32xf32>
    %87 = tpu.matmul %86, %69, %cst_35 {dimension_numbers = #tpu.dot_dimension_numbers<[1], [0], [0], [1], [0, 0, 1, 1], [], []>} : vector<16x16xbf16>, vector<16x32xbf16>, vector<16x32xf32> -> vector<16x32xf32>
    %88 = vector.extract_strided_slice %62 {offsets = [0, 32], sizes = [16, 32], strides = [1, 1]} : vector<16x128xbf16> to vector<16x32xbf16>
    %89 = vector.extract_strided_slice %63 {offsets = [0, 32], sizes = [16, 32], strides = [1, 1]} : vector<16x128xbf16> to vector<16x32xbf16>
    %90 = vector.extract_strided_slice %64 {offsets = [0, 32], sizes = [16, 32], strides = [1, 1]} : vector<16x128xbf16> to vector<16x32xbf16>
    %cst_36 = arith.constant dense<0.000000e+00> : vector<16x16xf32>
    %91 = tpu.matmul %88, %89, %cst_36 {dimension_numbers = #tpu.dot_dimension_numbers<[1], [1], [0], [0], [0, 0, 1, 0], [], []>} : vector<16x32xbf16>, vector<16x32xbf16>, vector<16x16xf32> -> vector<16x16xf32>
    %cst_37 = arith.constant 0.176776692 : f32
    %92 = vector.broadcast %cst_37 : f32 to vector<16x16xf32>
    %93 = arith.mulf %91, %92 : vector<16x16xf32>
    %94 = arith.addf %93, %16 : vector<16x16xf32>
    %cst_38 = arith.constant dense<0xFF800000> : vector<16xf32>
    %95 = vector.multi_reduction <maximumf>, %94, %cst_38 [1] : vector<16x16xf32> to vector<16xf32>
    %96 = vector.shape_cast %95 : vector<16xf32> to vector<16x1xf32>
    %97 = vector.broadcast %96 : vector<16x1xf32> to vector<16x16xf32>
    %98 = arith.subf %94, %97 : vector<16x16xf32>
    %99 = math.exp %98 : vector<16x16xf32>
    %cst_39 = arith.constant dense<0.000000e+00> : vector<16xf32>
    %100 = vector.multi_reduction <add>, %99, %cst_39 [1] : vector<16x16xf32> to vector<16xf32>
    %101 = vector.shape_cast %100 : vector<16xf32> to vector<16x1xf32>
    %102 = tpu.reciprocal %101 {approx = true} : vector<16x1xf32> -> vector<16x1xf32>
    %103 = vector.broadcast %102 : vector<16x1xf32> to vector<16x16xf32>
    %104 = arith.mulf %99, %103 : vector<16x16xf32>
    %cst_40 = arith.constant 0.000000e+00 : f32
    %105 = vector.broadcast %cst_40 : f32 to vector<16x16xf32>
    %106 = arith.select %66, %105, %104 : vector<16x16xi1>, vector<16x16xf32>
    %107 = arith.truncf %106 : vector<16x16xf32> to vector<16x16xbf16>
    %cst_41 = arith.constant dense<0.000000e+00> : vector<16x32xf32>
    %108 = tpu.matmul %107, %90, %cst_41 {dimension_numbers = #tpu.dot_dimension_numbers<[1], [0], [0], [1], [0, 0, 1, 1], [], []>} : vector<16x16xbf16>, vector<16x32xbf16>, vector<16x32xf32> -> vector<16x32xf32>
    %109 = vector.extract_strided_slice %62 {offsets = [0, 64], sizes = [16, 32], strides = [1, 1]} : vector<16x128xbf16> to vector<16x32xbf16>
    %110 = vector.extract_strided_slice %63 {offsets = [0, 64], sizes = [16, 32], strides = [1, 1]} : vector<16x128xbf16> to vector<16x32xbf16>
    %111 = vector.extract_strided_slice %64 {offsets = [0, 64], sizes = [16, 32], strides = [1, 1]} : vector<16x128xbf16> to vector<16x32xbf16>
    %cst_42 = arith.constant dense<0.000000e+00> : vector<16x16xf32>
    %112 = tpu.matmul %109, %110, %cst_42 {dimension_numbers = #tpu.dot_dimension_numbers<[1], [1], [0], [0], [0, 0, 1, 0], [], []>} : vector<16x32xbf16>, vector<16x32xbf16>, vector<16x16xf32> -> vector<16x16xf32>
    %cst_43 = arith.constant 0.176776692 : f32
    %113 = vector.broadcast %cst_43 : f32 to vector<16x16xf32>
    %114 = arith.mulf %112, %113 : vector<16x16xf32>
    %115 = arith.addf %114, %16 : vector<16x16xf32>
    %cst_44 = arith.constant dense<0xFF800000> : vector<16xf32>
    %116 = vector.multi_reduction <maximumf>, %115, %cst_44 [1] : vector<16x16xf32> to vector<16xf32>
    %117 = vector.shape_cast %116 : vector<16xf32> to vector<16x1xf32>
    %118 = vector.broadcast %117 : vector<16x1xf32> to vector<16x16xf32>
    %119 = arith.subf %115, %118 : vector<16x16xf32>
    %120 = math.exp %119 : vector<16x16xf32>
    %cst_45 = arith.constant dense<0.000000e+00> : vector<16xf32>
    %121 = vector.multi_reduction <add>, %120, %cst_45 [1] : vector<16x16xf32> to vector<16xf32>
    %122 = vector.shape_cast %121 : vector<16xf32> to vector<16x1xf32>
    %123 = tpu.reciprocal %122 {approx = true} : vector<16x1xf32> -> vector<16x1xf32>
    %124 = vector.broadcast %123 : vector<16x1xf32> to vector<16x16xf32>
    %125 = arith.mulf %120, %124 : vector<16x16xf32>
    %cst_46 = arith.constant 0.000000e+00 : f32
    %126 = vector.broadcast %cst_46 : f32 to vector<16x16xf32>
    %127 = arith.select %66, %126, %125 : vector<16x16xi1>, vector<16x16xf32>
    %128 = arith.truncf %127 : vector<16x16xf32> to vector<16x16xbf16>
    %cst_47 = arith.constant dense<0.000000e+00> : vector<16x32xf32>
    %129 = tpu.matmul %128, %111, %cst_47 {dimension_numbers = #tpu.dot_dimension_numbers<[1], [0], [0], [1], [0, 0, 1, 1], [], []>} : vector<16x16xbf16>, vector<16x32xbf16>, vector<16x32xf32> -> vector<16x32xf32>
    %130 = vector.extract_strided_slice %62 {offsets = [0, 96], sizes = [16, 32], strides = [1, 1]} : vector<16x128xbf16> to vector<16x32xbf16>
    %131 = vector.extract_strided_slice %63 {offsets = [0, 96], sizes = [16, 32], strides = [1, 1]} : vector<16x128xbf16> to vector<16x32xbf16>
    %132 = vector.extract_strided_slice %64 {offsets = [0, 96], sizes = [16, 32], strides = [1, 1]} : vector<16x128xbf16> to vector<16x32xbf16>
    %cst_48 = arith.constant dense<0.000000e+00> : vector<16x16xf32>
    %133 = tpu.matmul %130, %131, %cst_48 {dimension_numbers = #tpu.dot_dimension_numbers<[1], [1], [0], [0], [0, 0, 1, 0], [], []>} : vector<16x32xbf16>, vector<16x32xbf16>, vector<16x16xf32> -> vector<16x16xf32>
    %cst_49 = arith.constant 0.176776692 : f32
    %134 = vector.broadcast %cst_49 : f32 to vector<16x16xf32>
    %135 = arith.mulf %133, %134 : vector<16x16xf32>
    %136 = arith.addf %135, %16 : vector<16x16xf32>
    %cst_50 = arith.constant dense<0xFF800000> : vector<16xf32>
    %137 = vector.multi_reduction <maximumf>, %136, %cst_50 [1] : vector<16x16xf32> to vector<16xf32>
    %138 = vector.shape_cast %137 : vector<16xf32> to vector<16x1xf32>
    %139 = vector.broadcast %138 : vector<16x1xf32> to vector<16x16xf32>
    %140 = arith.subf %136, %139 : vector<16x16xf32>
    %141 = math.exp %140 : vector<16x16xf32>
    %cst_51 = arith.constant dense<0.000000e+00> : vector<16xf32>
    %142 = vector.multi_reduction <add>, %141, %cst_51 [1] : vector<16x16xf32> to vector<16xf32>
    %143 = vector.shape_cast %142 : vector<16xf32> to vector<16x1xf32>
    %144 = tpu.reciprocal %143 {approx = true} : vector<16x1xf32> -> vector<16x1xf32>
    %145 = vector.broadcast %144 : vector<16x1xf32> to vector<16x16xf32>
    %146 = arith.mulf %141, %145 : vector<16x16xf32>
    %cst_52 = arith.constant 0.000000e+00 : f32
    %147 = vector.broadcast %cst_52 : f32 to vector<16x16xf32>
    %148 = arith.select %66, %147, %146 : vector<16x16xi1>, vector<16x16xf32>
    %149 = arith.truncf %148 : vector<16x16xf32> to vector<16x16xbf16>
    %cst_53 = arith.constant dense<0.000000e+00> : vector<16x32xf32>
    %150 = tpu.matmul %149, %132, %cst_53 {dimension_numbers = #tpu.dot_dimension_numbers<[1], [0], [0], [1], [0, 0, 1, 1], [], []>} : vector<16x16xbf16>, vector<16x32xbf16>, vector<16x32xf32> -> vector<16x32xf32>
    %151 = tpu.concatenate %87, %108, %129, %150 in 1 : vector<16x32xf32>, vector<16x32xf32>, vector<16x32xf32>, vector<16x32xf32> -> vector<16x128xf32>
    %152 = arith.truncf %151 : vector<16x128xf32> to vector<16x128xbf16>
    %cst_54 = arith.constant dense<0.000000e+00> : vector<16x128xf32>
    %153 = tpu.matmul %152, %59, %cst_54 {dimension_numbers = #tpu.dot_dimension_numbers<[1], [0], [0], [1], [0, 0, 1, 1], [], []>} : vector<16x128xbf16>, vector<128x128xbf16>, vector<16x128xf32> -> vector<16x128xf32>
    %154 = vector.broadcast %61 : vector<1x128xf32> to vector<16x128xf32>
    %155 = arith.addf %153, %154 : vector<16x128xf32>
    %156 = arith.addf %7, %155 : vector<16x128xf32>
    %c0_55 = arith.constant 0 : index
    %c0_56 = arith.constant 0 : index
    %c0_57 = arith.constant 0 : index
    %157 = vector.load %arg8[%c0_55, %c0_56, %c0_57] : memref<1x1x128xf32, #tpu.memory_space<vmem>>, vector<1x1x128xf32>
    %158 = vector.shape_cast %157 : vector<1x1x128xf32> to vector<1x128xf32>
    %c0_58 = arith.constant 0 : index
    %c0_59 = arith.constant 0 : index
    %c0_60 = arith.constant 0 : index
    %159 = vector.load %arg9[%c0_58, %c0_59, %c0_60] : memref<1x1x128xf32, #tpu.memory_space<vmem>>, vector<1x1x128xf32>
    %160 = vector.shape_cast %159 : vector<1x1x128xf32> to vector<1x128xf32>
    %cst_61 = arith.constant dense<0.000000e+00> : vector<16xf32>
    %161 = vector.multi_reduction <add>, %156, %cst_61 [1] : vector<16x128xf32> to vector<16xf32>
    %162 = vector.shape_cast %161 : vector<16xf32> to vector<16x1xf32>
    %cst_62 = arith.constant 1.280000e+02 : f32
    %163 = vector.broadcast %cst_62 : f32 to vector<16x1xf32>
    %164 = arith.divf %162, %163 : vector<16x1xf32>
    %165 = vector.broadcast %164 : vector<16x1xf32> to vector<16x128xf32>
    %166 = arith.subf %156, %165 : vector<16x128xf32>
    %167 = arith.mulf %166, %166 : vector<16x128xf32>
    %cst_63 = arith.constant dense<0.000000e+00> : vector<16xf32>
    %168 = vector.multi_reduction <add>, %167, %cst_63 [1] : vector<16x128xf32> to vector<16xf32>
    %169 = vector.shape_cast %168 : vector<16xf32> to vector<16x1xf32>
    %cst_64 = arith.constant 1.280000e+02 : f32
    %170 = vector.broadcast %cst_64 : f32 to vector<16x1xf32>
    %171 = arith.divf %169, %170 : vector<16x1xf32>
    %cst_65 = arith.constant 9.99999974E-6 : f32
    %172 = vector.broadcast %cst_65 : f32 to vector<16x1xf32>
    %173 = arith.addf %171, %172 : vector<16x1xf32>
    %174 = math.rsqrt %173 : vector<16x1xf32>
    %175 = vector.broadcast %174 : vector<16x1xf32> to vector<16x128xf32>
    %176 = arith.mulf %166, %175 : vector<16x128xf32>
    %177 = vector.broadcast %158 : vector<1x128xf32> to vector<16x128xf32>
    %178 = arith.mulf %176, %177 : vector<16x128xf32>
    %179 = vector.broadcast %160 : vector<1x128xf32> to vector<16x128xf32>
    %180 = arith.addf %178, %179 : vector<16x128xf32>
    %c0_66 = arith.constant 0 : index
    %c0_67 = arith.constant 0 : index
    %c0_68 = arith.constant 0 : index
    %181 = vector.load %arg5[%c0_66, %c0_67, %c0_68] : memref<1x24x128xbf16, #tpu.memory_space<vmem>>, vector<1x24x128xbf16>
    %182 = vector.shape_cast %181 : vector<1x24x128xbf16> to vector<24x128xbf16>
    %183 = arith.truncf %180 : vector<16x128xf32> to vector<16x128xbf16>
    %c0_69 = arith.constant 0 : index
    %c0_70 = arith.constant 0 : index
    %c0_71 = arith.constant 0 : index
    %184 = vector.load %arg14[%c0_69, %c0_70, %c0_71] : memref<1x128x128xbf16, #tpu.memory_space<vmem>>, vector<1x128x128xbf16>
    %185 = vector.shape_cast %184 : vector<1x128x128xbf16> to vector<128x128xbf16>
    %cst_72 = arith.constant dense<0.000000e+00> : vector<16x128xf32>
    %186 = tpu.matmul %183, %185, %cst_72 {dimension_numbers = #tpu.dot_dimension_numbers<[1], [0], [0], [1], [0, 0, 1, 1], [], []>} : vector<16x128xbf16>, vector<128x128xbf16>, vector<16x128xf32> -> vector<16x128xf32>
    %c0_73 = arith.constant 0 : index
    %c0_74 = arith.constant 0 : index
    %c0_75 = arith.constant 0 : index
    %187 = vector.load %arg15[%c0_73, %c0_74, %c0_75] : memref<1x1x128xf32, #tpu.memory_space<vmem>>, vector<1x1x128xf32>
    %188 = vector.shape_cast %187 : vector<1x1x128xf32> to vector<1x128xf32>
    %189 = vector.broadcast %188 : vector<1x128xf32> to vector<16x128xf32>
    %190 = arith.addf %186, %189 : vector<16x128xf32>
    %c0_76 = arith.constant 0 : index
    %c0_77 = arith.constant 0 : index
    %c0_78 = arith.constant 0 : index
    %191 = vector.load %arg16[%c0_76, %c0_77, %c0_78] : memref<1x128x256xbf16, #tpu.memory_space<vmem>>, vector<1x128x256xbf16>
    %192 = vector.shape_cast %191 : vector<1x128x256xbf16> to vector<128x256xbf16>
    %cst_79 = arith.constant dense<0.000000e+00> : vector<24x256xf32>
    %193 = tpu.matmul %182, %192, %cst_79 {dimension_numbers = #tpu.dot_dimension_numbers<[1], [0], [0], [1], [0, 0, 1, 1], [], []>} : vector<24x128xbf16>, vector<128x256xbf16>, vector<24x256xf32> -> vector<24x256xf32>
    %c0_80 = arith.constant 0 : index
    %c0_81 = arith.constant 0 : index
    %c0_82 = arith.constant 0 : index
    %194 = vector.load %arg17[%c0_80, %c0_81, %c0_82] : memref<1x1x256xf32, #tpu.memory_space<vmem>>, vector<1x1x256xf32>
    %195 = vector.shape_cast %194 : vector<1x1x256xf32> to vector<1x256xf32>
    %196 = vector.broadcast %195 : vector<1x256xf32> to vector<24x256xf32>
    %197 = arith.addf %193, %196 : vector<24x256xf32>
    %198 = vector.extract_strided_slice %197 {offsets = [0, 0], sizes = [24, 128], strides = [1, 1]} : vector<24x256xf32> to vector<24x128xf32>
    %199 = vector.extract_strided_slice %197 {offsets = [0, 128], sizes = [24, 128], strides = [1, 1]} : vector<24x256xf32> to vector<24x128xf32>
    %c0_83 = arith.constant 0 : index
    %c0_84 = arith.constant 0 : index
    %c0_85 = arith.constant 0 : index
    %200 = vector.load %arg18[%c0_83, %c0_84, %c0_85] : memref<1x128x128xbf16, #tpu.memory_space<vmem>>, vector<1x128x128xbf16>
    %201 = vector.shape_cast %200 : vector<1x128x128xbf16> to vector<128x128xbf16>
    %c0_86 = arith.constant 0 : index
    %c0_87 = arith.constant 0 : index
    %c0_88 = arith.constant 0 : index
    %202 = vector.load %arg19[%c0_86, %c0_87, %c0_88] : memref<1x1x128xf32, #tpu.memory_space<vmem>>, vector<1x1x128xf32>
    %203 = vector.shape_cast %202 : vector<1x1x128xf32> to vector<1x128xf32>
    %204 = arith.truncf %190 : vector<16x128xf32> to vector<16x128xbf16>
    %205 = arith.truncf %198 : vector<24x128xf32> to vector<24x128xbf16>
    %206 = arith.truncf %199 : vector<24x128xf32> to vector<24x128xbf16>
    %cst_89 = arith.constant -1.000000e+20 : f32
    %207 = vector.broadcast %cst_89 : f32 to vector<1x24xf32>
    %208 = arith.cmpf olt, %22, %207 : vector<1x24xf32>
    %209 = vector.extract_strided_slice %204 {offsets = [0, 0], sizes = [16, 32], strides = [1, 1]} : vector<16x128xbf16> to vector<16x32xbf16>
    %210 = vector.extract_strided_slice %205 {offsets = [0, 0], sizes = [24, 32], strides = [1, 1]} : vector<24x128xbf16> to vector<24x32xbf16>
    %211 = vector.extract_strided_slice %206 {offsets = [0, 0], sizes = [24, 32], strides = [1, 1]} : vector<24x128xbf16> to vector<24x32xbf16>
    %cst_90 = arith.constant dense<0.000000e+00> : vector<16x24xf32>
    %212 = tpu.matmul %209, %210, %cst_90 {dimension_numbers = #tpu.dot_dimension_numbers<[1], [1], [0], [0], [0, 0, 1, 0], [], []>} : vector<16x32xbf16>, vector<24x32xbf16>, vector<16x24xf32> -> vector<16x24xf32>
    %cst_91 = arith.constant 0.176776692 : f32
    %213 = vector.broadcast %cst_91 : f32 to vector<16x24xf32>
    %214 = arith.mulf %212, %213 : vector<16x24xf32>
    %215 = vector.broadcast %22 : vector<1x24xf32> to vector<16x24xf32>
    %216 = arith.addf %214, %215 : vector<16x24xf32>
    %cst_92 = arith.constant dense<0xFF800000> : vector<16xf32>
    %217 = vector.multi_reduction <maximumf>, %216, %cst_92 [1] : vector<16x24xf32> to vector<16xf32>
    %218 = vector.shape_cast %217 : vector<16xf32> to vector<16x1xf32>
    %219 = vector.broadcast %218 : vector<16x1xf32> to vector<16x24xf32>
    %220 = arith.subf %216, %219 : vector<16x24xf32>
    %221 = math.exp %220 : vector<16x24xf32>
    %cst_93 = arith.constant dense<0.000000e+00> : vector<16xf32>
    %222 = vector.multi_reduction <add>, %221, %cst_93 [1] : vector<16x24xf32> to vector<16xf32>
    %223 = vector.shape_cast %222 : vector<16xf32> to vector<16x1xf32>
    %224 = tpu.reciprocal %223 {approx = true} : vector<16x1xf32> -> vector<16x1xf32>
    %225 = vector.broadcast %224 : vector<16x1xf32> to vector<16x24xf32>
    %226 = arith.mulf %221, %225 : vector<16x24xf32>
    %cst_94 = arith.constant 0.000000e+00 : f32
    %227 = vector.shape_cast %208 : vector<1x24xi1> to vector<1x24xi1>
    %228 = vector.broadcast %227 : vector<1x24xi1> to vector<16x24xi1>
    %229 = vector.broadcast %cst_94 : f32 to vector<16x24xf32>
    %230 = arith.select %228, %229, %226 : vector<16x24xi1>, vector<16x24xf32>
    %231 = arith.truncf %230 : vector<16x24xf32> to vector<16x24xbf16>
    %cst_95 = arith.constant dense<0.000000e+00> : vector<16x32xf32>
    %232 = tpu.matmul %231, %211, %cst_95 {dimension_numbers = #tpu.dot_dimension_numbers<[1], [0], [0], [1], [0, 0, 1, 1], [], []>} : vector<16x24xbf16>, vector<24x32xbf16>, vector<16x32xf32> -> vector<16x32xf32>
    %233 = vector.extract_strided_slice %204 {offsets = [0, 32], sizes = [16, 32], strides = [1, 1]} : vector<16x128xbf16> to vector<16x32xbf16>
    %234 = vector.extract_strided_slice %205 {offsets = [0, 32], sizes = [24, 32], strides = [1, 1]} : vector<24x128xbf16> to vector<24x32xbf16>
    %235 = vector.extract_strided_slice %206 {offsets = [0, 32], sizes = [24, 32], strides = [1, 1]} : vector<24x128xbf16> to vector<24x32xbf16>
    %cst_96 = arith.constant dense<0.000000e+00> : vector<16x24xf32>
    %236 = tpu.matmul %233, %234, %cst_96 {dimension_numbers = #tpu.dot_dimension_numbers<[1], [1], [0], [0], [0, 0, 1, 0], [], []>} : vector<16x32xbf16>, vector<24x32xbf16>, vector<16x24xf32> -> vector<16x24xf32>
    %cst_97 = arith.constant 0.176776692 : f32
    %237 = vector.broadcast %cst_97 : f32 to vector<16x24xf32>
    %238 = arith.mulf %236, %237 : vector<16x24xf32>
    %239 = vector.broadcast %22 : vector<1x24xf32> to vector<16x24xf32>
    %240 = arith.addf %238, %239 : vector<16x24xf32>
    %cst_98 = arith.constant dense<0xFF800000> : vector<16xf32>
    %241 = vector.multi_reduction <maximumf>, %240, %cst_98 [1] : vector<16x24xf32> to vector<16xf32>
    %242 = vector.shape_cast %241 : vector<16xf32> to vector<16x1xf32>
    %243 = vector.broadcast %242 : vector<16x1xf32> to vector<16x24xf32>
    %244 = arith.subf %240, %243 : vector<16x24xf32>
    %245 = math.exp %244 : vector<16x24xf32>
    %cst_99 = arith.constant dense<0.000000e+00> : vector<16xf32>
    %246 = vector.multi_reduction <add>, %245, %cst_99 [1] : vector<16x24xf32> to vector<16xf32>
    %247 = vector.shape_cast %246 : vector<16xf32> to vector<16x1xf32>
    %248 = tpu.reciprocal %247 {approx = true} : vector<16x1xf32> -> vector<16x1xf32>
    %249 = vector.broadcast %248 : vector<16x1xf32> to vector<16x24xf32>
    %250 = arith.mulf %245, %249 : vector<16x24xf32>
    %cst_100 = arith.constant 0.000000e+00 : f32
    %251 = vector.shape_cast %208 : vector<1x24xi1> to vector<1x24xi1>
    %252 = vector.broadcast %251 : vector<1x24xi1> to vector<16x24xi1>
    %253 = vector.broadcast %cst_100 : f32 to vector<16x24xf32>
    %254 = arith.select %252, %253, %250 : vector<16x24xi1>, vector<16x24xf32>
    %255 = arith.truncf %254 : vector<16x24xf32> to vector<16x24xbf16>
    %cst_101 = arith.constant dense<0.000000e+00> : vector<16x32xf32>
    %256 = tpu.matmul %255, %235, %cst_101 {dimension_numbers = #tpu.dot_dimension_numbers<[1], [0], [0], [1], [0, 0, 1, 1], [], []>} : vector<16x24xbf16>, vector<24x32xbf16>, vector<16x32xf32> -> vector<16x32xf32>
    %257 = vector.extract_strided_slice %204 {offsets = [0, 64], sizes = [16, 32], strides = [1, 1]} : vector<16x128xbf16> to vector<16x32xbf16>
    %258 = vector.extract_strided_slice %205 {offsets = [0, 64], sizes = [24, 32], strides = [1, 1]} : vector<24x128xbf16> to vector<24x32xbf16>
    %259 = vector.extract_strided_slice %206 {offsets = [0, 64], sizes = [24, 32], strides = [1, 1]} : vector<24x128xbf16> to vector<24x32xbf16>
    %cst_102 = arith.constant dense<0.000000e+00> : vector<16x24xf32>
    %260 = tpu.matmul %257, %258, %cst_102 {dimension_numbers = #tpu.dot_dimension_numbers<[1], [1], [0], [0], [0, 0, 1, 0], [], []>} : vector<16x32xbf16>, vector<24x32xbf16>, vector<16x24xf32> -> vector<16x24xf32>
    %cst_103 = arith.constant 0.176776692 : f32
    %261 = vector.broadcast %cst_103 : f32 to vector<16x24xf32>
    %262 = arith.mulf %260, %261 : vector<16x24xf32>
    %263 = vector.broadcast %22 : vector<1x24xf32> to vector<16x24xf32>
    %264 = arith.addf %262, %263 : vector<16x24xf32>
    %cst_104 = arith.constant dense<0xFF800000> : vector<16xf32>
    %265 = vector.multi_reduction <maximumf>, %264, %cst_104 [1] : vector<16x24xf32> to vector<16xf32>
    %266 = vector.shape_cast %265 : vector<16xf32> to vector<16x1xf32>
    %267 = vector.broadcast %266 : vector<16x1xf32> to vector<16x24xf32>
    %268 = arith.subf %264, %267 : vector<16x24xf32>
    %269 = math.exp %268 : vector<16x24xf32>
    %cst_105 = arith.constant dense<0.000000e+00> : vector<16xf32>
    %270 = vector.multi_reduction <add>, %269, %cst_105 [1] : vector<16x24xf32> to vector<16xf32>
    %271 = vector.shape_cast %270 : vector<16xf32> to vector<16x1xf32>
    %272 = tpu.reciprocal %271 {approx = true} : vector<16x1xf32> -> vector<16x1xf32>
    %273 = vector.broadcast %272 : vector<16x1xf32> to vector<16x24xf32>
    %274 = arith.mulf %269, %273 : vector<16x24xf32>
    %cst_106 = arith.constant 0.000000e+00 : f32
    %275 = vector.shape_cast %208 : vector<1x24xi1> to vector<1x24xi1>
    %276 = vector.broadcast %275 : vector<1x24xi1> to vector<16x24xi1>
    %277 = vector.broadcast %cst_106 : f32 to vector<16x24xf32>
    %278 = arith.select %276, %277, %274 : vector<16x24xi1>, vector<16x24xf32>
    %279 = arith.truncf %278 : vector<16x24xf32> to vector<16x24xbf16>
    %cst_107 = arith.constant dense<0.000000e+00> : vector<16x32xf32>
    %280 = tpu.matmul %279, %259, %cst_107 {dimension_numbers = #tpu.dot_dimension_numbers<[1], [0], [0], [1], [0, 0, 1, 1], [], []>} : vector<16x24xbf16>, vector<24x32xbf16>, vector<16x32xf32> -> vector<16x32xf32>
    %281 = vector.extract_strided_slice %204 {offsets = [0, 96], sizes = [16, 32], strides = [1, 1]} : vector<16x128xbf16> to vector<16x32xbf16>
    %282 = vector.extract_strided_slice %205 {offsets = [0, 96], sizes = [24, 32], strides = [1, 1]} : vector<24x128xbf16> to vector<24x32xbf16>
    %283 = vector.extract_strided_slice %206 {offsets = [0, 96], sizes = [24, 32], strides = [1, 1]} : vector<24x128xbf16> to vector<24x32xbf16>
    %cst_108 = arith.constant dense<0.000000e+00> : vector<16x24xf32>
    %284 = tpu.matmul %281, %282, %cst_108 {dimension_numbers = #tpu.dot_dimension_numbers<[1], [1], [0], [0], [0, 0, 1, 0], [], []>} : vector<16x32xbf16>, vector<24x32xbf16>, vector<16x24xf32> -> vector<16x24xf32>
    %cst_109 = arith.constant 0.176776692 : f32
    %285 = vector.broadcast %cst_109 : f32 to vector<16x24xf32>
    %286 = arith.mulf %284, %285 : vector<16x24xf32>
    %287 = vector.broadcast %22 : vector<1x24xf32> to vector<16x24xf32>
    %288 = arith.addf %286, %287 : vector<16x24xf32>
    %cst_110 = arith.constant dense<0xFF800000> : vector<16xf32>
    %289 = vector.multi_reduction <maximumf>, %288, %cst_110 [1] : vector<16x24xf32> to vector<16xf32>
    %290 = vector.shape_cast %289 : vector<16xf32> to vector<16x1xf32>
    %291 = vector.broadcast %290 : vector<16x1xf32> to vector<16x24xf32>
    %292 = arith.subf %288, %291 : vector<16x24xf32>
    %293 = math.exp %292 : vector<16x24xf32>
    %cst_111 = arith.constant dense<0.000000e+00> : vector<16xf32>
    %294 = vector.multi_reduction <add>, %293, %cst_111 [1] : vector<16x24xf32> to vector<16xf32>
    %295 = vector.shape_cast %294 : vector<16xf32> to vector<16x1xf32>
    %296 = tpu.reciprocal %295 {approx = true} : vector<16x1xf32> -> vector<16x1xf32>
    %297 = vector.broadcast %296 : vector<16x1xf32> to vector<16x24xf32>
    %298 = arith.mulf %293, %297 : vector<16x24xf32>
    %cst_112 = arith.constant 0.000000e+00 : f32
    %299 = vector.shape_cast %208 : vector<1x24xi1> to vector<1x24xi1>
    %300 = vector.broadcast %299 : vector<1x24xi1> to vector<16x24xi1>
    %301 = vector.broadcast %cst_112 : f32 to vector<16x24xf32>
    %302 = arith.select %300, %301, %298 : vector<16x24xi1>, vector<16x24xf32>
    %303 = arith.truncf %302 : vector<16x24xf32> to vector<16x24xbf16>
    %cst_113 = arith.constant dense<0.000000e+00> : vector<16x32xf32>
    %304 = tpu.matmul %303, %283, %cst_113 {dimension_numbers = #tpu.dot_dimension_numbers<[1], [0], [0], [1], [0, 0, 1, 1], [], []>} : vector<16x24xbf16>, vector<24x32xbf16>, vector<16x32xf32> -> vector<16x32xf32>
    %305 = tpu.concatenate %232, %256, %280, %304 in 1 : vector<16x32xf32>, vector<16x32xf32>, vector<16x32xf32>, vector<16x32xf32> -> vector<16x128xf32>
    %306 = arith.truncf %305 : vector<16x128xf32> to vector<16x128xbf16>
    %cst_114 = arith.constant dense<0.000000e+00> : vector<16x128xf32>
    %307 = tpu.matmul %306, %201, %cst_114 {dimension_numbers = #tpu.dot_dimension_numbers<[1], [0], [0], [1], [0, 0, 1, 1], [], []>} : vector<16x128xbf16>, vector<128x128xbf16>, vector<16x128xf32> -> vector<16x128xf32>
    %308 = vector.broadcast %203 : vector<1x128xf32> to vector<16x128xf32>
    %309 = arith.addf %307, %308 : vector<16x128xf32>
    %310 = arith.addf %156, %309 : vector<16x128xf32>
    %311 = arith.truncf %310 : vector<16x128xf32> to vector<16x128xbf16>
    %c0_115 = arith.constant 0 : index
    %c0_116 = arith.constant 0 : index
    %c0_117 = arith.constant 0 : index
    %312 = vector.load %arg20[%c0_115, %c0_116, %c0_117] : memref<1x128x256xbf16, #tpu.memory_space<vmem>>, vector<1x128x256xbf16>
    %313 = vector.shape_cast %312 : vector<1x128x256xbf16> to vector<128x256xbf16>
    %cst_118 = arith.constant dense<0.000000e+00> : vector<16x256xf32>
    %314 = tpu.matmul %311, %313, %cst_118 {dimension_numbers = #tpu.dot_dimension_numbers<[1], [0], [0], [1], [0, 0, 1, 1], [], []>} : vector<16x128xbf16>, vector<128x256xbf16>, vector<16x256xf32> -> vector<16x256xf32>
    %c0_119 = arith.constant 0 : index
    %c0_120 = arith.constant 0 : index
    %c0_121 = arith.constant 0 : index
    %315 = vector.load %arg21[%c0_119, %c0_120, %c0_121] : memref<1x1x256xf32, #tpu.memory_space<vmem>>, vector<1x1x256xf32>
    %316 = vector.shape_cast %315 : vector<1x1x256xf32> to vector<1x256xf32>
    %317 = vector.broadcast %316 : vector<1x256xf32> to vector<16x256xf32>
    %318 = arith.addf %314, %317 : vector<16x256xf32>
    %cst_122 = arith.constant 0.000000e+00 : f32
    %319 = vector.broadcast %cst_122 : f32 to vector<16x256xf32>
    %320 = arith.maximumf %318, %319 : vector<16x256xf32>
    %321 = arith.truncf %320 : vector<16x256xf32> to vector<16x256xbf16>
    %c0_123 = arith.constant 0 : index
    %c0_124 = arith.constant 0 : index
    %c0_125 = arith.constant 0 : index
    %322 = vector.load %arg22[%c0_123, %c0_124, %c0_125] : memref<1x256x128xbf16, #tpu.memory_space<vmem>>, vector<1x256x128xbf16>
    %323 = vector.shape_cast %322 : vector<1x256x128xbf16> to vector<256x128xbf16>
    %cst_126 = arith.constant dense<0.000000e+00> : vector<16x128xf32>
    %324 = tpu.matmul %321, %323, %cst_126 {dimension_numbers = #tpu.dot_dimension_numbers<[1], [0], [0], [1], [0, 0, 1, 1], [], []>} : vector<16x256xbf16>, vector<256x128xbf16>, vector<16x128xf32> -> vector<16x128xf32>
    %c0_127 = arith.constant 0 : index
    %c0_128 = arith.constant 0 : index
    %c0_129 = arith.constant 0 : index
    %325 = vector.load %arg23[%c0_127, %c0_128, %c0_129] : memref<1x1x128xf32, #tpu.memory_space<vmem>>, vector<1x1x128xf32>
    %326 = vector.shape_cast %325 : vector<1x1x128xf32> to vector<1x128xf32>
    %327 = vector.broadcast %326 : vector<1x128xf32> to vector<16x128xf32>
    %328 = arith.addf %324, %327 : vector<16x128xf32>
    %329 = arith.addf %310, %328 : vector<16x128xf32>
    %c0_130 = arith.constant 0 : index
    %c0_131 = arith.constant 0 : index
    %330 = vector.load %arg25[%c0_130, %c0_131] : memref<16x128xf32, #tpu.memory_space<vmem>>, vector<16x128xf32>
    tpu.vector_store %arg25[%c0_130, %c0_131], %329 {strides = array<i32>} : memref<16x128xf32, #tpu.memory_space<vmem>>, vector<16x128xf32>,
    %c1_i32 = arith.constant 1 : i32
    %331 = arith.cmpi eq, %arg1, %c1_i32 : i32
    %332 = arith.extui %331 : i1 to i32
    %c0_i32_132 = arith.constant 0 : i32
    %333 = arith.cmpi ne, %332, %c0_i32_132 : i32
    scf.if %333 {
      %c0_133 = arith.constant 0 : index
      %c0_134 = arith.constant 0 : index
      %c0_135 = arith.constant 0 : index
      %334 = vector.load %arg24[%c0_133, %c0_134, %c0_135] : memref<1x16x128xf32, #tpu.memory_space<vmem>>, vector<1x16x128xf32>
      %335 = vector.shape_cast %334 : vector<1x16x128xf32> to vector<16x128xf32>
      %336 = vector.shape_cast %329 : vector<16x128xf32> to vector<1x16x128xf32>
      tpu.vector_store %arg24[%c0_133, %c0_134, %c0_135], %336 {strides = array<i32>} : memref<1x16x128xf32, #tpu.memory_space<vmem>>, vector<1x16x128xf32>,
    } else {
    }
    return
  }
  func.func @transform_0(%arg0: i32, %arg1: i32, %arg2: memref<2xi32, #tpu.memory_space<smem>>, %arg3: memref<2xi32, #tpu.memory_space<smem>>) -> (i32, i32, i32) {
    %c0_i32 = arith.constant 0 : i32
    %c0_i32_0 = arith.constant 0 : i32
    %c0_i32_1 = arith.constant 0 : i32
    return %arg0, %c0_i32, %c0_i32_0 : i32, i32, i32
  }
  func.func @transform_1(%arg0: i32, %arg1: i32, %arg2: memref<2xi32, #tpu.memory_space<smem>>, %arg3: memref<2xi32, #tpu.memory_space<smem>>) -> (i32, i32, i32) {
    %c0_i32 = arith.constant 0 : i32
    %c0_i32_0 = arith.constant 0 : i32
    %c0_i32_1 = arith.constant 0 : i32
    return %arg0, %c0_i32, %c0_i32_0 : i32, i32, i32
  }
  func.func @transform_2(%arg0: i32, %arg1: i32, %arg2: memref<2xi32, #tpu.memory_space<smem>>, %arg3: memref<2xi32, #tpu.memory_space<smem>>) -> (i32, i32, i32) {
    %c0_i32 = arith.constant 0 : i32
    %c0_i32_0 = arith.constant 0 : i32
    %c0_i32_1 = arith.constant 0 : i32
    return %arg1, %c0_i32, %c0_i32_0 : i32, i32, i32
  }
  func.func @transform_3(%arg0: i32, %arg1: i32, %arg2: memref<2xi32, #tpu.memory_space<smem>>, %arg3: memref<2xi32, #tpu.memory_space<smem>>) -> (i32, i32, i32) {
    %c0_i32 = arith.constant 0 : i32
    %c0_i32_0 = arith.constant 0 : i32
    %c0_i32_1 = arith.constant 0 : i32
    return %arg1, %c0_i32, %c0_i32_0 : i32, i32, i32
  }
  func.func @transform_4(%arg0: i32, %arg1: i32, %arg2: memref<2xi32, #tpu.memory_space<smem>>, %arg3: memref<2xi32, #tpu.memory_space<smem>>) -> (i32, i32, i32) {
    %c0_i32 = arith.constant 0 : i32
    %c0_i32_0 = arith.constant 0 : i32
    %c0_i32_1 = arith.constant 0 : i32
    return %arg1, %c0_i32, %c0_i32_0 : i32, i32, i32
  }
  func.func @transform_5(%arg0: i32, %arg1: i32, %arg2: memref<2xi32, #tpu.memory_space<smem>>, %arg3: memref<2xi32, #tpu.memory_space<smem>>) -> (i32, i32, i32) {
    %c0_i32 = arith.constant 0 : i32
    %c0_i32_0 = arith.constant 0 : i32
    %c0_i32_1 = arith.constant 0 : i32
    return %arg1, %c0_i32, %c0_i32_0 : i32, i32, i32
  }
  func.func @transform_6(%arg0: i32, %arg1: i32, %arg2: memref<2xi32, #tpu.memory_space<smem>>, %arg3: memref<2xi32, #tpu.memory_space<smem>>) -> (i32, i32, i32) {
    %c0_i32 = arith.constant 0 : i32
    %c0_i32_0 = arith.constant 0 : i32
    %c0_i32_1 = arith.constant 0 : i32
    return %arg1, %c0_i32, %c0_i32_0 : i32, i32, i32
  }
  func.func @transform_7(%arg0: i32, %arg1: i32, %arg2: memref<2xi32, #tpu.memory_space<smem>>, %arg3: memref<2xi32, #tpu.memory_space<smem>>) -> (i32, i32, i32) {
    %c0_i32 = arith.constant 0 : i32
    %c0_i32_0 = arith.constant 0 : i32
    %c0_i32_1 = arith.constant 0 : i32
    return %arg1, %c0_i32, %c0_i32_0 : i32, i32, i32
  }
  func.func @transform_8(%arg0: i32, %arg1: i32, %arg2: memref<2xi32, #tpu.memory_space<smem>>, %arg3: memref<2xi32, #tpu.memory_space<smem>>) -> (i32, i32, i32) {
    %c0_i32 = arith.constant 0 : i32
    %c0_i32_0 = arith.constant 0 : i32
    %c0_i32_1 = arith.constant 0 : i32
    return %arg1, %c0_i32, %c0_i32_0 : i32, i32, i32
  }
  func.func @transform_9(%arg0: i32, %arg1: i32, %arg2: memref<2xi32, #tpu.memory_space<smem>>, %arg3: memref<2xi32, #tpu.memory_space<smem>>) -> (i32, i32, i32) {
    %c0_i32 = arith.constant 0 : i32
    %c0_i32_0 = arith.constant 0 : i32
    %c0_i32_1 = arith.constant 0 : i32
    return %arg1, %c0_i32, %c0_i32_0 : i32, i32, i32
  }
  func.func @transform_10(%arg0: i32, %arg1: i32, %arg2: memref<2xi32, #tpu.memory_space<smem>>, %arg3: memref<2xi32, #tpu.memory_space<smem>>) -> (i32, i32, i32) {
    %c0_i32 = arith.constant 0 : i32
    %c0_i32_0 = arith.constant 0 : i32
    %c0_i32_1 = arith.constant 0 : i32
    return %arg1, %c0_i32, %c0_i32_0 : i32, i32, i32
  }
  func.func @transform_11(%arg0: i32, %arg1: i32, %arg2: memref<2xi32, #tpu.memory_space<smem>>, %arg3: memref<2xi32, #tpu.memory_space<smem>>) -> (i32, i32, i32) {
    %c0_i32 = arith.constant 0 : i32
    %c0_i32_0 = arith.constant 0 : i32
    %c0_i32_1 = arith.constant 0 : i32
    return %arg1, %c0_i32, %c0_i32_0 : i32, i32, i32
  }
  func.func @transform_12(%arg0: i32, %arg1: i32, %arg2: memref<2xi32, #tpu.memory_space<smem>>, %arg3: memref<2xi32, #tpu.memory_space<smem>>) -> (i32, i32, i32) {
    %c0_i32 = arith.constant 0 : i32
    %c0_i32_0 = arith.constant 0 : i32
    %c0_i32_1 = arith.constant 0 : i32
    return %arg1, %c0_i32, %c0_i32_0 : i32, i32, i32
  }
  func.func @transform_13(%arg0: i32, %arg1: i32, %arg2: memref<2xi32, #tpu.memory_space<smem>>, %arg3: memref<2xi32, #tpu.memory_space<smem>>) -> (i32, i32, i32) {
    %c0_i32 = arith.constant 0 : i32
    %c0_i32_0 = arith.constant 0 : i32
    %c0_i32_1 = arith.constant 0 : i32
    return %arg1, %c0_i32, %c0_i32_0 : i32, i32, i32
  }
  func.func @transform_14(%arg0: i32, %arg1: i32, %arg2: memref<2xi32, #tpu.memory_space<smem>>, %arg3: memref<2xi32, #tpu.memory_space<smem>>) -> (i32, i32, i32) {
    %c0_i32 = arith.constant 0 : i32
    %c0_i32_0 = arith.constant 0 : i32
    %c0_i32_1 = arith.constant 0 : i32
    return %arg1, %c0_i32, %c0_i32_0 : i32, i32, i32
  }
  func.func @transform_15(%arg0: i32, %arg1: i32, %arg2: memref<2xi32, #tpu.memory_space<smem>>, %arg3: memref<2xi32, #tpu.memory_space<smem>>) -> (i32, i32, i32) {
    %c0_i32 = arith.constant 0 : i32
    %c0_i32_0 = arith.constant 0 : i32
    %c0_i32_1 = arith.constant 0 : i32
    return %arg1, %c0_i32, %c0_i32_0 : i32, i32, i32
  }
  func.func @transform_16(%arg0: i32, %arg1: i32, %arg2: memref<2xi32, #tpu.memory_space<smem>>, %arg3: memref<2xi32, #tpu.memory_space<smem>>) -> (i32, i32, i32) {
    %c0_i32 = arith.constant 0 : i32
    %c0_i32_0 = arith.constant 0 : i32
    %c0_i32_1 = arith.constant 0 : i32
    return %arg1, %c0_i32, %c0_i32_0 : i32, i32, i32
  }
  func.func @transform_17(%arg0: i32, %arg1: i32, %arg2: memref<2xi32, #tpu.memory_space<smem>>, %arg3: memref<2xi32, #tpu.memory_space<smem>>) -> (i32, i32, i32) {
    %c0_i32 = arith.constant 0 : i32
    %c0_i32_0 = arith.constant 0 : i32
    %c0_i32_1 = arith.constant 0 : i32
    return %arg1, %c0_i32, %c0_i32_0 : i32, i32, i32
  }
  func.func @transform_18(%arg0: i32, %arg1: i32, %arg2: memref<2xi32, #tpu.memory_space<smem>>, %arg3: memref<2xi32, #tpu.memory_space<smem>>) -> (i32, i32, i32) {
    %c0_i32 = arith.constant 0 : i32
    %c0_i32_0 = arith.constant 0 : i32
    %c0_i32_1 = arith.constant 0 : i32
    return %arg1, %c0_i32, %c0_i32_0 : i32, i32, i32
  }
  func.func @transform_19(%arg0: i32, %arg1: i32, %arg2: memref<2xi32, #tpu.memory_space<smem>>, %arg3: memref<2xi32, #tpu.memory_space<smem>>) -> (i32, i32, i32) {
    %c0_i32 = arith.constant 0 : i32
    %c0_i32_0 = arith.constant 0 : i32
    %c0_i32_1 = arith.constant 0 : i32
    return %arg1, %c0_i32, %c0_i32_0 : i32, i32, i32
  }
  func.func @transform_20(%arg0: i32, %arg1: i32, %arg2: memref<2xi32, #tpu.memory_space<smem>>, %arg3: memref<2xi32, #tpu.memory_space<smem>>) -> (i32, i32, i32) {
    %c0_i32 = arith.constant 0 : i32
    %c0_i32_0 = arith.constant 0 : i32
    %c0_i32_1 = arith.constant 0 : i32
    return %arg0, %c0_i32, %c0_i32_0 : i32, i32, i32
  }
}

</mosaic_0001>

<llo_original>
// kernel: transformer_decoder_forward.3
$region0: #{transformer_decoder_forward.3}
  #allocation0 [shape = 'u32[]', space=smem, size = 0x4, offset = 0x4, fixed_abs, tag = 'smem constant byte address 0x4 - core index']
  #allocation1 [shape = 'u32[144,128]{1,0:T(1,128)}', space=vmem, size = 0x12000, scoped, tag = 'internal scratch']
  %s0 = inlined_call_operand.vmem [shape: f32[2,16,128], index: 0, kind: input, shape index: {}]
  %s1 = inlined_call_operand.vmem [shape: f32[1,128], index: 1, kind: input, shape index: {}]
  %s2 = inlined_call_operand.vmem [shape: f32[1,128], index: 2, kind: input, shape index: {}]
  %s3 = inlined_call_operand.vmem [shape: bf16[128,256], index: 3, kind: input, shape index: {}]
  %s4 = inlined_call_operand.vmem [shape: f32[1,256], index: 4, kind: input, shape index: {}]
  %s5 = inlined_call_operand.hbm [shape: f32[2,16,256], index: 5, kind: output, shape index: {}]
  %s6 = sld [smem:[#allocation0]]
  $region53: #{transformer_decoder_forward.3} parent=0
    _
  %s8 = ssub.s32 1, %s6
  %s9 = scalar_select 0, %s8, %s6
  $region1: #{transformer_decoder_forward.3} parent=0
    #allocation2 [shape = 'u8[32768]{0}', space=vmem, size = 0x8000, scoped, tag = 'output window, operand 0']
    #allocation3 [shape = 's32[2]{0}', space=sflag, size = 0x8, scoped, tag = 'scoped memory for transformer_decoder_forward.3']
    %10 = vsyncpa [#allocation3], 0
    %s11 = scalar_lea.sflag [#allocation3], 1
    %12 = vsyncpa %s11, 0
    loop: start=0, step=1, limit=4
    $region2: #{transformer_decoder_forward.3} parent=1 // loop_pre_header
      _
    $region3: #{transformer_decoder_forward.3} parent=1 // loop_header
      %s14 = sphi 0, %s18
      %p15 = scmp.ge.s32.totalorder %s14, 4
      %s21 = sphi 0, %s33
      %s22 = sphi 0, %s29
      %s23 = sphi 0, %s21
      %s24 = sphi 0, %s22
      %s25 = sphi 0, %s23
      %s26 = sphi 0, %s24
      %s36 = sphi 0, %s38
      %s39 = sphi 0, %s36
      %s40 = sphi 0, %s39
      %s56 = sphi 0, %s40
      %s60 = sphi 0, %s60
      %s62 = sphi 0, %s60
      %s63 = sphi 0, %s62
      %s77 = sphi 0, %s63
      %s81 = sphi 0, %s81
      %s83 = sphi 0, %s81
      %s84 = sphi 0, %s83
      %s98 = sphi 0, %s84
      %s104 = sphi 0, %s106
      %s107 = sphi 0, %s104
      %s108 = sphi 0, %s107
      %s124 = sphi 0, %s108
      %s130 = sphi 0, %s132
      %s133 = sphi 0, %s130
      %s134 = sphi 0, %s133
      %s150 = sphi 0, %s134
      %s158 = sphi 0, %s160
      %s161 = sphi 0, %s158
      %s162 = sphi 0, %s161
      %s178 = sphi 0, %s162
    $region4: #{transformer_decoder_forward.3} parent=1 // loop_header_branch
      %17 = sbr.rel (%p15) target = $region8
    $region5: #{transformer_decoder_forward.3} parent=1 // loop_body
      %s19 = ssub.s32 %s14, 1
      %s20 = ssub.s32 %s14, 2
      %s27 = sadd.s32 1, %s22
      %p28 = scmp.ge.s32.totalorder %s27, 1
      %s29 = scalar_select %p28, 0, %s27
      %s30 = sadd.s32 1, %s21
      %s31 = scalar_select %p28, %s30, %s21
      %p32 = scmp.ge.s32.totalorder %s31, 2
      %s33 = scalar_select %p32, 0, %s31
      %s34 = ssub.s32 %s21, %s33
      %p35 = scmp.eq.s32.totalorder %s34, 0
      %s37 = sadd.s32 %s36, 1
      %s38 = scalar_select %p35, %s36, %s37
      %p41 = pneg %p35
      %p42 = scmp.eq.s32.totalorder %s14, 1
      %p43 = por %p41, %p42
      %p44 = scmp.ne.s32.totalorder %s36, %s39
      %p45 = scmp.eq.s32.totalorder %s14, 0
      %p46 = por %p44, %p45
      %p47 = scmp.ne.s32.totalorder %s36, %s39
      %p48 = scmp.eq.s32.totalorder %s19, 1
      %p49 = por %p47, %p48
      %p50 = scmp.ne.s32.totalorder %s39, %s40
      %p51 = scmp.eq.s32.totalorder %s19, 0
      %p52 = por %p50, %p51
      %p53 = scmp.ne.s32.totalorder %s39, %s40
      %p54 = scmp.eq.s32.totalorder %s20, 1
      %p55 = por %p53, %p54
      %p57 = scmp.ne.s32.totalorder %s40, %s56
      %p58 = scmp.eq.s32.totalorder %s20, 0
      %p59 = por %p57, %p58
      %s61 = sadd.s32 %s60, 1
      %p64 = scmp.eq.s32.totalorder %s14, 1
      %p65 = scmp.ne.s32.totalorder %s60, %s62
      %p66 = scmp.eq.s32.totalorder %s14, 0
      %p67 = por %p65, %p66
      %p68 = scmp.ne.s32.totalorder %s60, %s62
      %p69 = scmp.eq.s32.totalorder %s19, 1
      %p70 = por %p68, %p69
      %p71 = scmp.ne.s32.totalorder %s62, %s63
      %p72 = scmp.eq.s32.totalorder %s19, 0
      %p73 = por %p71, %p72
      %p74 = scmp.ne.s32.totalorder %s62, %s63
      %p75 = scmp.eq.s32.totalorder %s20, 1
      %p76 = por %p74, %p75
      %p78 = scmp.ne.s32.totalorder %s63, %s77
      %p79 = scmp.eq.s32.totalorder %s20, 0
      %p80 = por %p78, %p79
      %s82 = sadd.s32 %s81, 1
      %p85 = scmp.eq.s32.totalorder %s14, 1
      %p86 = scmp.ne.s32.totalorder %s81, %s83
      %p87 = scmp.eq.s32.totalorder %s14, 0
      %p88 = por %p86, %p87
      %p89 = scmp.ne.s32.totalorder %s81, %s83
      %p90 = scmp.eq.s32.totalorder %s19, 1
      %p91 = por %p89, %p90
      %p92 = scmp.ne.s32.totalorder %s83, %s84
      %p93 = scmp.eq.s32.totalorder %s19, 0
      %p94 = por %p92, %p93
      %p95 = scmp.ne.s32.totalorder %s83, %s84
      %p96 = scmp.eq.s32.totalorder %s20, 1
      %p97 = por %p95, %p96
      %p99 = scmp.ne.s32.totalorder %s84, %s98
      %p100 = scmp.eq.s32.totalorder %s20, 0
      %p101 = por %p99, %p100
      %s102 = ssub.s32 %s22, %s29
      %p103 = scmp.eq.s32.totalorder %s102, 0
      %s105 = sadd.s32 %s104, 1
      %s106 = scalar_select %p103, %s104, %s105
      %p109 = pneg %p103
      %p110 = scmp.eq.s32.totalorder %s14, 1
      %p111 = por %p109, %p110
      %p112 = scmp.ne.s32.totalorder %s104, %s107
      %p113 = scmp.eq.s32.totalorder %s14, 0
      %p114 = por %p112, %p113
      %p115 = scmp.ne.s32.totalorder %s104, %s107
      %p116 = scmp.eq.s32.totalorder %s19, 1
      %p117 = por %p115, %p116
      %p118 = scmp.ne.s32.totalorder %s107, %s108
      %p119 = scmp.eq.s32.totalorder %s19, 0
      %p120 = por %p118, %p119
      %p121 = scmp.ne.s32.totalorder %s107, %s108
      %p122 = scmp.eq.s32.totalorder %s20, 1
      %p123 = por %p121, %p122
      %p125 = scmp.ne.s32.totalorder %s108, %s124
      %p126 = scmp.eq.s32.totalorder %s20, 0
      %p127 = por %p125, %p126
      %s128 = ssub.s32 %s22, %s29
      %p129 = scmp.eq.s32.totalorder %s128, 0
      %s131 = sadd.s32 %s130, 1
      %s132 = scalar_select %p129, %s130, %s131
      %p135 = pneg %p129
      %p136 = scmp.eq.s32.totalorder %s14, 1
      %p137 = por %p135, %p136
      %p138 = scmp.ne.s32.totalorder %s130, %s133
      %p139 = scmp.eq.s32.totalorder %s14, 0
      %p140 = por %p138, %p139
      %p141 = scmp.ne.s32.totalorder %s130, %s133
      %p142 = scmp.eq.s32.totalorder %s19, 1
      %p143 = por %p141, %p142
      %p144 = scmp.ne.s32.totalorder %s133, %s134
      %p145 = scmp.eq.s32.totalorder %s19, 0
      %p146 = por %p144, %p145
      %p147 = scmp.ne.s32.totalorder %s133, %s134
      %p148 = scmp.eq.s32.totalorder %s20, 1
      %p149 = por %p147, %p148
      %p151 = scmp.ne.s32.totalorder %s134, %s150
      %p152 = scmp.eq.s32.totalorder %s20, 0
      %p153 = por %p151, %p152
      %s154 = ssub.s32 %s21, %s33
      %s155 = ssub.s32 %s22, %s29
      %s156 = sor.u32 %s154, %s155
      %p157 = scmp.eq.s32.totalorder %s156, 0
      %s159 = sadd.s32 %s158, 1
      %s160 = scalar_select %p157, %s158, %s159
      %p163 = pneg %p157
      %p164 = scmp.eq.s32.totalorder %s14, 1
      %p165 = por %p163, %p164
      %p166 = scmp.ne.s32.totalorder %s158, %s161
      %p167 = scmp.eq.s32.totalorder %s14, 0
      %p168 = por %p166, %p167
      %p169 = scmp.ne.s32.totalorder %s158, %s161
      %p170 = scmp.eq.s32.totalorder %s19, 1
      %p171 = por %p169, %p170
      %p172 = scmp.ne.s32.totalorder %s161, %s162
      %p173 = scmp.eq.s32.totalorder %s19, 0
      %p174 = por %p172, %p173
      %p175 = scmp.ne.s32.totalorder %s161, %s162
      %p176 = scmp.eq.s32.totalorder %s20, 1
      %p177 = por %p175, %p176
      %p179 = scmp.ne.s32.totalorder %s162, %s178
      %p180 = scmp.eq.s32.totalorder %s20, 0
      %p181 = por %p179, %p180
      %p182 = scmp.le.s32.totalorder 1, %s14
      %p183 = scmp.lt.s32.totalorder %s14, 3
      %p184 = pnand %p182, %p183
      %p185 = pneg %p184
      // Predicated region
      $region9: #{transformer_decoder_forward.3} parent=5 // pred_check
        _
      $region10: #{transformer_decoder_forward.3} parent=5 // pred_check_branch
        %187 = sbr.rel (%p184) target = $region12
      $region11: #{transformer_decoder_forward.3} parent=5 // pred_region
        %s188 = ssub.s32 %s14, 1
        // Predicated region
        $region13: #{transformer_decoder_forward.3} parent=11 // pred_check
          %p189 = pneg %p73
        $region14: #{transformer_decoder_forward.3} parent=11 // pred_check_branch
          %191 = sbr.rel (%p189) target = $region16
        $region15: #{transformer_decoder_forward.3} parent=11 // pred_region
          _
        $region16: #{transformer_decoder_forward.3} parent=11 // pred_fallthru
          _
        // Predicated region
        $region17: #{transformer_decoder_forward.3} parent=11 // pred_check
          %p192 = pneg %p94
        $region18: #{transformer_decoder_forward.3} parent=11 // pred_check_branch
          %194 = sbr.rel (%p192) target = $region20
        $region19: #{transformer_decoder_forward.3} parent=11 // pred_region
          _
        $region20: #{transformer_decoder_forward.3} parent=11 // pred_fallthru
          _
        // Predicated region
        $region21: #{transformer_decoder_forward.3} parent=11 // pred_check
          %p195 = pneg %p120
        $region22: #{transformer_decoder_forward.3} parent=11 // pred_check_branch
          %197 = sbr.rel (%p195) target = $region24
        $region23: #{transformer_decoder_forward.3} parent=11 // pred_region
          %s198 = smul.u32 2, %s24
          %p199 = scmp.lt.s32.totalorder %s198, 1
          %s200 = scalar_select %p199, %s198, 1
          %s201 = smul.addr %s200, 4
          %s202 = scalar_lea.vmem %s3, %s201
          %s203 = smul.u32 2, %s24
        $region24: #{transformer_decoder_forward.3} parent=11 // pred_fallthru
          _
        // Predicated region
        $region25: #{transformer_decoder_forward.3} parent=11 // pred_check
          %p204 = pneg %p146
        $region26: #{transformer_decoder_forward.3} parent=11 // pred_check_branch
          %206 = sbr.rel (%p204) target = $region28
        $region27: #{transformer_decoder_forward.3} parent=11 // pred_region
          %s207 = smul.u32 2, %s24
          %p208 = scmp.lt.s32.totalorder %s207, 1
          %s209 = scalar_select %p208, %s207, 1
          %s210 = scalar_lea.vmem %s4, %s209
          %s211 = smul.u32 2, %s24
        $region28: #{transformer_decoder_forward.3} parent=11 // pred_fallthru
          _
      $region12: #{transformer_decoder_forward.3} parent=5 // pred_fallthru
        _
      %p212 = scmp.lt.s32.totalorder %s14, 2
      // Predicated region
      $region29: #{transformer_decoder_forward.3} parent=5 // pred_check
        %p213 = pneg %p212
      $region30: #{transformer_decoder_forward.3} parent=5 // pred_check_branch
        %215 = sbr.rel (%p213) target = $region32
      $region31: #{transformer_decoder_forward.3} parent=5 // pred_region
        // Predicated region
        $region33: #{transformer_decoder_forward.3} parent=31 // pred_check
          %p216 = pneg %p46
        $region34: #{transformer_decoder_forward.3} parent=31 // pred_check_branch
          %218 = sbr.rel (%p216) target = $region36
        $region35: #{transformer_decoder_forward.3} parent=31 // pred_region
          %p219 = scmp.lt.s32.totalorder %s21, 1
          %s220 = scalar_select %p219, %s21, 1
          %s221 = smul.addr %s220, 2
          %s222 = smul.addr %s221, 8
          %s223 = scalar_lea.vmem %s0, %s222
        $region36: #{transformer_decoder_forward.3} parent=31 // pred_fallthru
          _
      $region32: #{transformer_decoder_forward.3} parent=5 // pred_fallthru
        _
      %p224 = scmp.le.s32.totalorder 1, %s14
      %p225 = scmp.lt.s32.totalorder %s14, 3
      %p226 = pnand %p224, %p225
      %p227 = pneg %p226
      // Predicated region
      $region37: #{transformer_decoder_forward.3} parent=5 // pred_check
        _
      $region38: #{transformer_decoder_forward.3} parent=5 // pred_check_branch
        %229 = sbr.rel (%p226) target = $region40
      $region39: #{transformer_decoder_forward.3} parent=5 // pred_region
        %s230 = ssub.s32 %s14, 1
        %p231 = scmp.lt.s32.totalorder %s23, 1
        %s232 = scalar_select %p231, %s23, 1
        %s233 = smul.addr %s232, 2
        %s234 = smul.addr %s233, 8
        %s235 = scalar_lea.vmem %s0, %s234
        %p236 = pneg %p52
        %p237 = pneg %p49
        %p238 = pneg %p73
        %p239 = pneg %p70
        %p240 = pneg %p94
        %p241 = pneg %p91
        %s242 = smul.u32 2, %s24
        %p243 = scmp.lt.s32.totalorder %s242, 1
        %s244 = scalar_select %p243, %s242, 1
        %s245 = smul.addr %s244, 4
        %s246 = scalar_lea.vmem %s3, %s245
        %p247 = pneg %p120
        %p248 = pneg %p117
        %s249 = smul.u32 2, %s24
        %p250 = scmp.lt.s32.totalorder %s249, 1
        %s251 = scalar_select %p250, %s249, 1
        %s252 = scalar_lea.vmem %s4, %s251
        %p253 = pneg %p146
        %p254 = pneg %p143
        %p255 = pneg %p174
        %p256 = pneg %p171
        %s257 = sand.u32 %s161, 1
        %s258 = scalar_lea.sflag [#allocation3], %s257
        %s259 = sand.u32 %s161, 1
        %s260 = smul.addr %s259, 32
        %s261 = scalar_lea.vmem [#allocation2], %s260
        %p262 = scmp.lt.s32.totalorder %s23, 1
        %s263 = scalar_select %p262, %s23, 1
        %s264 = smul.addr %s263, 2
        %s265 = smul.addr %s264, 8
        %s266 = scalar_lea.vmem %s0, %s265
        %s267 = smul.u32 2, %s24
        %p268 = scmp.lt.s32.totalorder %s267, 1
        %s269 = scalar_select %p268, %s267, 1
        %s270 = smul.addr %s269, 4
        %s271 = scalar_lea.vmem %s3, %s270
        %s272 = smul.u32 2, %s24
        %s273 = smul.u32 2, %s24
        %p274 = scmp.lt.s32.totalorder %s273, 1
        %s275 = scalar_select %p274, %s273, 1
        %s276 = scalar_lea.vmem %s4, %s275
        %s277 = smul.u32 2, %s24
        %s278 = smul.u32 2, %s24
        %v280 = vld [vmem:[%s266] sm:$0xff]
        %v281 = vld [vmem:[%s266 + $0x8] sm:$0xff]
        %v282 = vld [vmem:[%s1] sm:$0x1]
        %v283 = vld [vmem:[%s2] sm:$0x1]
        %284 = vadd.xlane.f32.xlu0 %v280
        %v285 = vpop.xlane.xlu0 %284
        %286 = vadd.xlane.f32.xlu0 %v281
        %v287 = vpop.xlane.xlu0 %286
        %v288 = vrcp.pop 128.0
        %v289 = vmul.f32 %v285, %v288
        %v290 = vmul.f32 %v287, %v288
        %v291 = vsub.f32 %v280, %v289
        %v292 = vsub.f32 %v281, %v290
        %v293 = vmul.f32 %v291, %v291
        %v294 = vmul.f32 %v292, %v292
        %295 = vadd.xlane.f32.xlu0 %v293
        %v296 = vpop.xlane.xlu0 %295
        %297 = vadd.xlane.f32.xlu0 %v294
        %v298 = vpop.xlane.xlu0 %297
        %v299 = vmul.f32 %v296, %v288
        %v300 = vmul.f32 %v298, %v288
        %v301 = vadd.f32 %v299, 1e-05
        %v302 = vadd.f32 %v300, 1e-05
        %v303 = vrsqrt.pop %v301
        %v304 = vrsqrt.pop %v302
        %v305 = vmul.f32 %v291, %v303
        %v306 = vmul.f32 %v292, %v304
        %v308 = vlaneseq
        %v309 = vshrl.u32 %v308, 7
        %v310 = vsub.s32 0, %v309
        %v311 = vrot.slane %v282, %v310
        %v313 = vmul.f32 %v305, %v311
        %v314 = vmul.f32 %v306, %v311
        %v316 = vlaneseq
        %v317 = vshrl.u32 %v316, 7
        %v318 = vsub.s32 0, %v317
        %v319 = vrot.slane %v283, %v318
        %v321 = vadd.f32 %v313, %v319
        %v322 = vadd.f32 %v314, %v319
        %v323 = vpack.c.bf16 %v322, %v321
        %v324 = vld [vmem:[%s271] sm:$0xff]
        %v325 = vld [vmem:[%s271 + $0x8] sm:$0xff]
        %v326 = vld [vmem:[%s271 + $0x10] sm:$0xff]
        %v327 = vld [vmem:[%s271 + $0x18] sm:$0xff]
        %v328 = vld [vmem:[%s271 + $0x20] sm:$0xff]
        %v329 = vld [vmem:[%s271 + $0x28] sm:$0xff]
        %v330 = vld [vmem:[%s271 + $0x30] sm:$0xff]
        %v331 = vld [vmem:[%s271 + $0x38] sm:$0xff]
        %v332 = vld [vmem:[%s271 + $0x40] sm:$0xff]
        %v333 = vld [vmem:[%s271 + $0x48] sm:$0xff]
        %v334 = vld [vmem:[%s271 + $0x50] sm:$0xff]
        %v335 = vld [vmem:[%s271 + $0x58] sm:$0xff]
        %v336 = vld [vmem:[%s271 + $0x60] sm:$0xff]
        %v337 = vld [vmem:[%s271 + $0x68] sm:$0xff]
        %v338 = vld [vmem:[%s271 + $0x70] sm:$0xff]
        %v339 = vld [vmem:[%s271 + $0x78] sm:$0xff]
        %v340 = vld [vmem:[%s276] sm:$0x3]
        %v342 = vlaneseq
        %v343 = vshrl.u32 %v342, 7
        %v344 = vsub.s32 0, %v343
        %v345 = vrot.slane %v340, %v344
        %v346 = vlaneseq
        %v347 = vshrl.u32 %v346, 7
        %v348 = vsub.s32 1, %v347
        %v349 = vrot.slane %v340, %v348
        %v368 = vunpack.c.l.b16 %v324
        %v369 = vunpack.c.h.b16 %v324
        %v370 = vunpack.c.l.b16 %v325
        %v371 = vunpack.c.h.b16 %v325
        %v372 = vunpack.c.l.b16 %v326
        %v373 = vunpack.c.h.b16 %v326
        %v374 = vunpack.c.l.b16 %v327
        %v375 = vunpack.c.h.b16 %v327
        %v376 = vunpack.c.l.b16 %v328
        %v377 = vunpack.c.h.b16 %v328
        %v378 = vunpack.c.l.b16 %v329
        %v379 = vunpack.c.h.b16 %v329
        %v380 = vunpack.c.l.b16 %v330
        %v381 = vunpack.c.h.b16 %v330
        %v382 = vunpack.c.l.b16 %v331
        %v383 = vunpack.c.h.b16 %v331
        %v384 = vunpack.c.l.b16 %v332
        %v385 = vunpack.c.h.b16 %v332
        %v386 = vunpack.c.l.b16 %v333
        %v387 = vunpack.c.h.b16 %v333
        %v388 = vunpack.c.l.b16 %v334
        %v389 = vunpack.c.h.b16 %v334
        %v390 = vunpack.c.l.b16 %v335
        %v391 = vunpack.c.h.b16 %v335
        %v392 = vunpack.c.l.b16 %v336
        %v393 = vunpack.c.h.b16 %v336
        %v394 = vunpack.c.l.b16 %v337
        %v395 = vunpack.c.h.b16 %v337
        %v396 = vunpack.c.l.b16 %v338
        %v397 = vunpack.c.h.b16 %v338
        %v398 = vunpack.c.l.b16 %v339
        %v399 = vunpack.c.h.b16 %v339
        %v400 = vpack.c.b16 %v370, %v368
        %v401 = vpack.c.b16 %v371, %v369
        %v402 = vpack.c.b16 %v374, %v372
        %v403 = vpack.c.b16 %v375, %v373
        %v404 = vpack.c.b16 %v378, %v376
        %v405 = vpack.c.b16 %v379, %v377
        %v406 = vpack.c.b16 %v382, %v380
        %v407 = vpack.c.b16 %v383, %v381
        %v408 = vpack.c.b16 %v386, %v384
        %v409 = vpack.c.b16 %v387, %v385
        %v410 = vpack.c.b16 %v390, %v388
        %v411 = vpack.c.b16 %v391, %v389
        %v412 = vpack.c.b16 %v394, %v392
        %v413 = vpack.c.b16 %v395, %v393
        %v414 = vpack.c.b16 %v398, %v396
        %v415 = vpack.c.b16 %v399, %v397
        %432 = vmatprep.subr.bf16.mxu0 %v401
        %433 = vmatpush1.bf16.msra.mxu0 %v400
        %434 = vmatprep.subr.bf16.mxu0 %v403
        %435 = vmatpush1.bf16.msra.mxu0 %v402
        %436 = vmatprep.subr.bf16.mxu0 %v405
        %437 = vmatpush1.bf16.msra.mxu0 %v404
        %438 = vmatprep.subr.bf16.mxu0 %v407
        %439 = vmatpush1.bf16.msra.mxu0 %v406
        %440 = vmatprep.subr.bf16.mxu0 %v409
        %441 = vmatpush1.bf16.msra.mxu0 %v408
        %442 = vmatprep.subr.bf16.mxu0 %v411
        %443 = vmatpush1.bf16.msra.mxu0 %v410
        %444 = vmatprep.subr.bf16.mxu0 %v413
        %445 = vmatpush1.bf16.msra.mxu0 %v412
        %446 = vmatprep.subr.bf16.mxu0 %v415
        %447 = vmatpush1.bf16.msra.mxu0 %v414
        %448 = vmatprep.subr.bf16.mxu0 0
        %449 = vmatpush1.bf16.msra.mxu0 0
        %450 = vmatprep.subr.bf16.mxu0 0
        %451 = vmatpush1.bf16.msra.mxu0 0
        %452 = vmatprep.subr.bf16.mxu0 0
        %453 = vmatpush1.bf16.msra.mxu0 0
        %454 = vmatprep.subr.bf16.mxu0 0
        %455 = vmatpush1.bf16.msra.mxu0 0
        %456 = vmatprep.subr.bf16.mxu0 0
        %457 = vmatpush1.bf16.msra.mxu0 0
        %458 = vmatprep.subr.bf16.mxu0 0
        %459 = vmatpush1.bf16.msra.mxu0 0
        %460 = vmatprep.subr.bf16.mxu0 0
        %461 = vmatpush1.bf16.msra.mxu0 0
        %462 = vmatprep.subr.bf16.mxu0 0
        %463 = vmatpush1.bf16.msra.mxu0 0
        %464 = vmatprep.mubr.bf16.mxu0 0
        %465 = vmatmul.mubr.bf16.gmra.mrb[0].mxu0 %v323
        %v466 = vpop.f32.mrb[0].mxu0
        %v467 = vadd.f32 %v345, %v466
        %v468 = vpop.f32.mrb[0].mxu0
        %v469 = vadd.f32 %v349, %v468
        %v470 = vpop.f32.mrb[0].mxu0
        %v471 = vadd.f32 %v345, %v470
        %v472 = vpop.f32.mrb[0].mxu0
        %v473 = vadd.f32 %v349, %v472
        %474 = vdwg.mxu0
        %475 = vst [vmem:[%s261] sm:$0xff] %v467
        %476 = vst [vmem:[%s261 + $0x8] sm:$0xff] %v469
        %477 = vst [vmem:[%s261 + $0x10] sm:$0xff] %v471
        %478 = vst [vmem:[%s261 + $0x18] sm:$0xff] %v473
        %s479 = sand.u32 %s161, 1
        %s480 = scalar_lea.sflag [#allocation3], %s479
        %s481 = sand.u32 %s161, 1
        %s482 = smul.addr %s481, 32
        %s483 = scalar_lea.vmem [#allocation2], %s482
        // Predicated region
        $region41: #{transformer_decoder_forward.3} parent=39 // pred_check
          %p484 = pneg %p171
        $region42: #{transformer_decoder_forward.3} parent=39 // pred_check_branch
          %486 = sbr.rel (%p484) target = $region44
        $region43: #{transformer_decoder_forward.3} parent=39 // pred_region
          %s487 = smul.u32 2, %s24
          %s489 = ssub.s32 512, 512
          %490 = vsyncadd %s480, %s489
          %s491 = smul.addr %s23, 4
          %s492 = sadd.s32 %s487, %s491
          %s493 = smul.addr %s492, 128
          %s494 = scalar_lea.hbm %s5, %s493
          %s495 = sshll.u32 %s483, 4
          %s496 = int_to_ptr.vmem [resolvable:$true] %s495
          %501 = dma.vmem_to_hbm [thread:$0]  %s496, 512, %s494, %s480, 256, 256, 16
        $region44: #{transformer_decoder_forward.3} parent=39 // pred_fallthru
          _
      $region40: #{transformer_decoder_forward.3} parent=5 // pred_fallthru
        _
      %p502 = scmp.le.s32.totalorder 2, %s14
      // Predicated region
      $region45: #{transformer_decoder_forward.3} parent=5 // pred_check
        %p503 = pneg %p502
      $region46: #{transformer_decoder_forward.3} parent=5 // pred_check_branch
        %505 = sbr.rel (%p503) target = $region48
      $region47: #{transformer_decoder_forward.3} parent=5 // pred_region
        %s506 = ssub.s32 %s14, 2
        // Predicated region
        $region49: #{transformer_decoder_forward.3} parent=47 // pred_check
          %p507 = pneg %p177
        $region50: #{transformer_decoder_forward.3} parent=47 // pred_check_branch
          %509 = sbr.rel (%p507) target = $region52
        $region51: #{transformer_decoder_forward.3} parent=47 // pred_region
          %s510 = sand.u32 %s162, 1
          %s511 = scalar_lea.sflag [#allocation3], %s510
          %s512 = sand.u32 %s162, 1
          %s513 = smul.addr %s512, 32
          %s514 = scalar_lea.vmem [#allocation2], %s513
          %515 = dma.done %s511, 512
        $region52: #{transformer_decoder_forward.3} parent=47 // pred_fallthru
          _
      $region48: #{transformer_decoder_forward.3} parent=5 // pred_fallthru
        _
    $region6: #{transformer_decoder_forward.3} parent=1 // loop_footer
      %s18 = sadd.s32 1, %s14
    $region7: #{transformer_decoder_forward.3} parent=1 // loop_footer_branch
      %13 = sbr.rel target = $region3
    $region8: #{transformer_decoder_forward.3} parent=1 // loop_exit
      _
    %516 = vsyncpa [#allocation3], 1
    %s517 = scalar_lea.sflag [#allocation3], 1
    %518 = vsyncpa %s517, 1

// kernel: transformer_decoder_forward.2
$region0: #{transformer_decoder_forward.2}
  #allocation0 [shape = 'u32[]', space=smem, size = 0x4, offset = 0x4, fixed_abs, tag = 'smem constant byte address 0x4 - core index']
  #allocation1 [shape = 'u32[144,128]{1,0:T(1,128)}', space=vmem, size = 0x12000, scoped, tag = 'internal scratch']
  #allocation2 [shape = 'f32[16,128]{1,0:T(8,128)}', space=vmem, size = 0x2000, scoped, tag = 'scratch operand']
  #allocation3 [shape = 's32[1]{0}', space=sflag, size = 0x4, scoped, tag = 'scoped memory for transformer_decoder_forward.2']
  #allocation4 [shape = 'u8[512]{0}', space=smem, size = 0x200, scoped, tag = 'prefetched SMEM operand 0']
  #allocation5 [shape = 'u8[512]{0}', space=smem, size = 0x200, scoped, tag = 'prefetched SMEM operand 1']
  %s0 = inlined_call_operand.hbm [shape: s32[2], index: 0, kind: input, shape index: {}]
  %s1 = inlined_call_operand.vmem [shape: s32[2], index: 1, kind: input, shape index: {}]
  %s2 = inlined_call_operand.vmem [shape: f32[2,16,128], index: 2, kind: input, shape index: {}]
  %s3 = inlined_call_operand.vmem [shape: bf16[2,24,128], index: 3, kind: input, shape index: {}]
  %s4 = inlined_call_operand.vmem [shape: f32[2,1,128], index: 4, kind: input, shape index: {}]
  %s5 = inlined_call_operand.vmem [shape: f32[2,1,128], index: 5, kind: input, shape index: {}]
  %s6 = inlined_call_operand.vmem [shape: f32[2,1,128], index: 6, kind: input, shape index: {}]
  %s7 = inlined_call_operand.vmem [shape: f32[2,1,128], index: 7, kind: input, shape index: {}]
  %s8 = inlined_call_operand.vmem [shape: bf16[2,128,384], index: 8, kind: input, shape index: {}]
  %s9 = inlined_call_operand.vmem [shape: f32[2,1,384], index: 9, kind: input, shape index: {}]
  %s10 = inlined_call_operand.hbm [shape: bf16[2,128,128], index: 10, kind: input, shape index: {}]
  %s11 = inlined_call_operand.hbm [shape: f32[2,1,128], index: 11, kind: input, shape index: {}]
  %s12 = inlined_call_operand.hbm [shape: bf16[2,128,128], index: 12, kind: input, shape index: {}]
  %s13 = inlined_call_operand.vmem [shape: f32[2,1,128], index: 13, kind: input, shape index: {}]
  %s14 = inlined_call_operand.vmem [shape: bf16[2,128,256], index: 14, kind: input, shape index: {}]
  %s15 = inlined_call_operand.vmem [shape: f32[2,1,256], index: 15, kind: input, shape index: {}]
  %s16 = inlined_call_operand.hbm [shape: bf16[2,128,128], index: 16, kind: input, shape index: {}]
  %s17 = inlined_call_operand.vmem [shape: f32[2,1,128], index: 17, kind: input, shape index: {}]
  %s18 = inlined_call_operand.vmem [shape: bf16[2,128,256], index: 18, kind: input, shape index: {}]
  %s19 = inlined_call_operand.vmem [shape: f32[2,1,256], index: 19, kind: input, shape index: {}]
  %s20 = inlined_call_operand.hbm [shape: bf16[2,256,128], index: 20, kind: input, shape index: {}]
  %s21 = inlined_call_operand.vmem [shape: f32[2,1,128], index: 21, kind: input, shape index: {}]
  %s22 = inlined_call_operand.vmem [shape: f32[2,16,128], index: 22, kind: output, shape index: {}]
  %s23 = sld [smem:[#allocation0]]
  $region141: #{transformer_decoder_forward.2} parent=0
    _
  %s25 = ssub.s32 1, %s23
  %s26 = scalar_select 0, %s25, %s23
  %28 = dma.hbm_to_smem %s0, 16, [#allocation4], [#allocation3]
  %s29 = sshll.u32 %s1, 4
  %s30 = int_to_ptr.vmem [resolvable:$true] %s29
  %32 = dma.vmem_to_smem %s30, 16, [#allocation5], [#allocation3]
  %33 = dma.done [#allocation3], 32
  %34 = sfence
  $region1: #{transformer_decoder_forward.2} parent=0
    #allocation6 [shape = 'u8[65536]{0}', space=vmem, size = 0x10000, scoped, tag = 'input window, operand 10']
    #allocation7 [shape = 's32[2]{0}', space=sflag, size = 0x8, scoped, tag = 'scoped memory for transformer_decoder_forward.2']
    #allocation8 [shape = 'u8[1024]{0}', space=vmem, size = 0x400, scoped, tag = 'input window, operand 11']
    #allocation9 [shape = 's32[2]{0}', space=sflag, size = 0x8, scoped, tag = 'scoped memory for transformer_decoder_forward.2']
    #allocation10 [shape = 'u8[65536]{0}', space=vmem, size = 0x10000, scoped, tag = 'input window, operand 12']
    #allocation11 [shape = 'u8[65536]{0}', space=vmem, size = 0x10000, scoped, tag = 'input window, operand 16']
    #allocation12 [shape = 's32[2]{0}', space=sflag, size = 0x8, scoped, tag = 'scoped memory for transformer_decoder_forward.2']
    #allocation13 [shape = 'u8[131072]{0}', space=vmem, size = 0x20000, scoped, tag = 'input window, operand 20']
    %35 = vsyncpa [#allocation7], 0
    %s36 = scalar_lea.sflag [#allocation7], 1
    %37 = vsyncpa %s36, 0
    %38 = vsyncpa [#allocation9], 0
    %s39 = scalar_lea.sflag [#allocation9], 1
    %40 = vsyncpa %s39, 0
    %41 = vsyncpa [#allocation12], 0
    %s42 = scalar_lea.sflag [#allocation12], 1
    %43 = vsyncpa %s42, 0
    loop: start=0, step=1, limit=6
    $region2: #{transformer_decoder_forward.2} parent=1 // loop_pre_header
      _
    $region3: #{transformer_decoder_forward.2} parent=1 // loop_header
      %s45 = sphi 0, %s49
      %p46 = scmp.ge.s32.totalorder %s45, 6
      %s52 = sphi 0, %s64
      %s53 = sphi 0, %s60
      %s54 = sphi 0, %s52
      %s55 = sphi 0, %s53
      %s56 = sphi 0, %s54
      %s57 = sphi 0, %s55
      %s67 = sphi 0, %s69
      %s70 = sphi 0, %s67
      %s71 = sphi 0, %s70
      %s87 = sphi 0, %s71
      %s93 = sphi 0, %s95
      %s96 = sphi 0, %s93
      %s97 = sphi 0, %s96
      %s113 = sphi 0, %s97
      %s119 = sphi 0, %s121
      %s122 = sphi 0, %s119
      %s123 = sphi 0, %s122
      %s139 = sphi 0, %s123
      %s145 = sphi 0, %s147
      %s148 = sphi 0, %s145
      %s149 = sphi 0, %s148
      %s165 = sphi 0, %s149
      %s171 = sphi 0, %s173
      %s174 = sphi 0, %s171
      %s175 = sphi 0, %s174
      %s191 = sphi 0, %s175
      %s197 = sphi 0, %s199
      %s200 = sphi 0, %s197
      %s201 = sphi 0, %s200
      %s217 = sphi 0, %s201
      %s223 = sphi 0, %s225
      %s226 = sphi 0, %s223
      %s227 = sphi 0, %s226
      %s243 = sphi 0, %s227
      %s249 = sphi 0, %s251
      %s252 = sphi 0, %s249
      %s253 = sphi 0, %s252
      %s269 = sphi 0, %s253
      %s275 = sphi 0, %s277
      %s278 = sphi 0, %s275
      %s279 = sphi 0, %s278
      %s295 = sphi 0, %s279
      %s301 = sphi 0, %s303
      %s304 = sphi 0, %s301
      %s305 = sphi 0, %s304
      %s321 = sphi 0, %s305
      %s327 = sphi 0, %s329
      %s330 = sphi 0, %s327
      %s331 = sphi 0, %s330
      %s347 = sphi 0, %s331
      %s353 = sphi 0, %s355
      %s356 = sphi 0, %s353
      %s357 = sphi 0, %s356
      %s373 = sphi 0, %s357
      %s379 = sphi 0, %s381
      %s382 = sphi 0, %s379
      %s383 = sphi 0, %s382
      %s399 = sphi 0, %s383
      %s405 = sphi 0, %s407
      %s408 = sphi 0, %s405
      %s409 = sphi 0, %s408
      %s425 = sphi 0, %s409
      %s431 = sphi 0, %s433
      %s434 = sphi 0, %s431
      %s435 = sphi 0, %s434
      %s451 = sphi 0, %s435
      %s457 = sphi 0, %s459
      %s460 = sphi 0, %s457
      %s461 = sphi 0, %s460
      %s477 = sphi 0, %s461
      %s483 = sphi 0, %s485
      %s486 = sphi 0, %s483
      %s487 = sphi 0, %s486
      %s503 = sphi 0, %s487
      %s509 = sphi 0, %s511
      %s512 = sphi 0, %s509
      %s513 = sphi 0, %s512
      %s529 = sphi 0, %s513
      %s535 = sphi 0, %s537
      %s538 = sphi 0, %s535
      %s539 = sphi 0, %s538
      %s555 = sphi 0, %s539
      %s561 = sphi 0, %s563
      %s564 = sphi 0, %s561
      %s565 = sphi 0, %s564
      %s581 = sphi 0, %s565
      %s587 = sphi 0, %s589
      %s590 = sphi 0, %s587
      %s591 = sphi 0, %s590
      %s607 = sphi 0, %s591
    $region4: #{transformer_decoder_forward.2} parent=1 // loop_header_branch
      %48 = sbr.rel (%p46) target = $region8
    $region5: #{transformer_decoder_forward.2} parent=1 // loop_body
      %s50 = ssub.s32 %s45, 1
      %s51 = ssub.s32 %s45, 2
      %s58 = sadd.s32 1, %s53
      %p59 = scmp.ge.s32.totalorder %s58, 2
      %s60 = scalar_select %p59, 0, %s58
      %s61 = sadd.s32 1, %s52
      %s62 = scalar_select %p59, %s61, %s52
      %p63 = scmp.ge.s32.totalorder %s62, 2
      %s64 = scalar_select %p63, 0, %s62
      %s65 = ssub.s32 %s52, %s64
      %p66 = scmp.eq.s32.totalorder %s65, 0
      %s68 = sadd.s32 %s67, 1
      %s69 = scalar_select %p66, %s67, %s68
      %p72 = pneg %p66
      %p73 = scmp.eq.s32.totalorder %s45, 3
      %p74 = por %p72, %p73
      %p75 = scmp.ne.s32.totalorder %s67, %s70
      %p76 = scmp.eq.s32.totalorder %s45, 0
      %p77 = por %p75, %p76
      %p78 = scmp.ne.s32.totalorder %s67, %s70
      %p79 = scmp.eq.s32.totalorder %s50, 3
      %p80 = por %p78, %p79
      %p81 = scmp.ne.s32.totalorder %s70, %s71
      %p82 = scmp.eq.s32.totalorder %s50, 0
      %p83 = por %p81, %p82
      %p84 = scmp.ne.s32.totalorder %s70, %s71
      %p85 = scmp.eq.s32.totalorder %s51, 3
      %p86 = por %p84, %p85
      %p88 = scmp.ne.s32.totalorder %s71, %s87
      %p89 = scmp.eq.s32.totalorder %s51, 0
      %p90 = por %p88, %p89
      %s91 = ssub.s32 %s52, %s64
      %p92 = scmp.eq.s32.totalorder %s91, 0
      %s94 = sadd.s32 %s93, 1
      %s95 = scalar_select %p92, %s93, %s94
      %p98 = pneg %p92
      %p99 = scmp.eq.s32.totalorder %s45, 3
      %p100 = por %p98, %p99
      %p101 = scmp.ne.s32.totalorder %s93, %s96
      %p102 = scmp.eq.s32.totalorder %s45, 0
      %p103 = por %p101, %p102
      %p104 = scmp.ne.s32.totalorder %s93, %s96
      %p105 = scmp.eq.s32.totalorder %s50, 3
      %p106 = por %p104, %p105
      %p107 = scmp.ne.s32.totalorder %s96, %s97
      %p108 = scmp.eq.s32.totalorder %s50, 0
      %p109 = por %p107, %p108
      %p110 = scmp.ne.s32.totalorder %s96, %s97
      %p111 = scmp.eq.s32.totalorder %s51, 3
      %p112 = por %p110, %p111
      %p114 = scmp.ne.s32.totalorder %s97, %s113
      %p115 = scmp.eq.s32.totalorder %s51, 0
      %p116 = por %p114, %p115
      %s117 = ssub.s32 %s53, %s60
      %p118 = scmp.eq.s32.totalorder %s117, 0
      %s120 = sadd.s32 %s119, 1
      %s121 = scalar_select %p118, %s119, %s120
      %p124 = pneg %p118
      %p125 = scmp.eq.s32.totalorder %s45, 3
      %p126 = por %p124, %p125
      %p127 = scmp.ne.s32.totalorder %s119, %s122
      %p128 = scmp.eq.s32.totalorder %s45, 0
      %p129 = por %p127, %p128
      %p130 = scmp.ne.s32.totalorder %s119, %s122
      %p131 = scmp.eq.s32.totalorder %s50, 3
      %p132 = por %p130, %p131
      %p133 = scmp.ne.s32.totalorder %s122, %s123
      %p134 = scmp.eq.s32.totalorder %s50, 0
      %p135 = por %p133, %p134
      %p136 = scmp.ne.s32.totalorder %s122, %s123
      %p137 = scmp.eq.s32.totalorder %s51, 3
      %p138 = por %p136, %p137
      %p140 = scmp.ne.s32.totalorder %s123, %s139
      %p141 = scmp.eq.s32.totalorder %s51, 0
      %p142 = por %p140, %p141
      %s143 = ssub.s32 %s53, %s60
      %p144 = scmp.eq.s32.totalorder %s143, 0
      %s146 = sadd.s32 %s145, 1
      %s147 = scalar_select %p144, %s145, %s146
      %p150 = pneg %p144
      %p151 = scmp.eq.s32.totalorder %s45, 3
      %p152 = por %p150, %p151
      %p153 = scmp.ne.s32.totalorder %s145, %s148
      %p154 = scmp.eq.s32.totalorder %s45, 0
      %p155 = por %p153, %p154
      %p156 = scmp.ne.s32.totalorder %s145, %s148
      %p157 = scmp.eq.s32.totalorder %s50, 3
      %p158 = por %p156, %p157
      %p159 = scmp.ne.s32.totalorder %s148, %s149
      %p160 = scmp.eq.s32.totalorder %s50, 0
      %p161 = por %p159, %p160
      %p162 = scmp.ne.s32.totalorder %s148, %s149
      %p163 = scmp.eq.s32.totalorder %s51, 3
      %p164 = por %p162, %p163
      %p166 = scmp.ne.s32.totalorder %s149, %s165
      %p167 = scmp.eq.s32.totalorder %s51, 0
      %p168 = por %p166, %p167
      %s169 = ssub.s32 %s53, %s60
      %p170 = scmp.eq.s32.totalorder %s169, 0
      %s172 = sadd.s32 %s171, 1
      %s173 = scalar_select %p170, %s171, %s172
      %p176 = pneg %p170
      %p177 = scmp.eq.s32.totalorder %s45, 3
      %p178 = por %p176, %p177
      %p179 = scmp.ne.s32.totalorder %s171, %s174
      %p180 = scmp.eq.s32.totalorder %s45, 0
      %p181 = por %p179, %p180
      %p182 = scmp.ne.s32.totalorder %s171, %s174
      %p183 = scmp.eq.s32.totalorder %s50, 3
      %p184 = por %p182, %p183
      %p185 = scmp.ne.s32.totalorder %s174, %s175
      %p186 = scmp.eq.s32.totalorder %s50, 0
      %p187 = por %p185, %p186
      %p188 = scmp.ne.s32.totalorder %s174, %s175
      %p189 = scmp.eq.s32.totalorder %s51, 3
      %p190 = por %p188, %p189
      %p192 = scmp.ne.s32.totalorder %s175, %s191
      %p193 = scmp.eq.s32.totalorder %s51, 0
      %p194 = por %p192, %p193
      %s195 = ssub.s32 %s53, %s60
      %p196 = scmp.eq.s32.totalorder %s195, 0
      %s198 = sadd.s32 %s197, 1
      %s199 = scalar_select %p196, %s197, %s198
      %p202 = pneg %p196
      %p203 = scmp.eq.s32.totalorder %s45, 3
      %p204 = por %p202, %p203
      %p205 = scmp.ne.s32.totalorder %s197, %s200
      %p206 = scmp.eq.s32.totalorder %s45, 0
      %p207 = por %p205, %p206
      %p208 = scmp.ne.s32.totalorder %s197, %s200
      %p209 = scmp.eq.s32.totalorder %s50, 3
      %p210 = por %p208, %p209
      %p211 = scmp.ne.s32.totalorder %s200, %s201
      %p212 = scmp.eq.s32.totalorder %s50, 0
      %p213 = por %p211, %p212
      %p214 = scmp.ne.s32.totalorder %s200, %s201
      %p215 = scmp.eq.s32.totalorder %s51, 3
      %p216 = por %p214, %p215
      %p218 = scmp.ne.s32.totalorder %s201, %s217
      %p219 = scmp.eq.s32.totalorder %s51, 0
      %p220 = por %p218, %p219
      %s221 = ssub.s32 %s53, %s60
      %p222 = scmp.eq.s32.totalorder %s221, 0
      %s224 = sadd.s32 %s223, 1
      %s225 = scalar_select %p222, %s223, %s224
      %p228 = pneg %p222
      %p229 = scmp.eq.s32.totalorder %s45, 3
      %p230 = por %p228, %p229
      %p231 = scmp.ne.s32.totalorder %s223, %s226
      %p232 = scmp.eq.s32.totalorder %s45, 0
      %p233 = por %p231, %p232
      %p234 = scmp.ne.s32.totalorder %s223, %s226
      %p235 = scmp.eq.s32.totalorder %s50, 3
      %p236 = por %p234, %p235
      %p237 = scmp.ne.s32.totalorder %s226, %s227
      %p238 = scmp.eq.s32.totalorder %s50, 0
      %p239 = por %p237, %p238
      %p240 = scmp.ne.s32.totalorder %s226, %s227
      %p241 = scmp.eq.s32.totalorder %s51, 3
      %p242 = por %p240, %p241
      %p244 = scmp.ne.s32.totalorder %s227, %s243
      %p245 = scmp.eq.s32.totalorder %s51, 0
      %p246 = por %p244, %p245
      %s247 = ssub.s32 %s53, %s60
      %p248 = scmp.eq.s32.totalorder %s247, 0
      %s250 = sadd.s32 %s249, 1
      %s251 = scalar_select %p248, %s249, %s250
      %p254 = pneg %p248
      %p255 = scmp.eq.s32.totalorder %s45, 3
      %p256 = por %p254, %p255
      %p257 = scmp.ne.s32.totalorder %s249, %s252
      %p258 = scmp.eq.s32.totalorder %s45, 0
      %p259 = por %p257, %p258
      %p260 = scmp.ne.s32.totalorder %s249, %s252
      %p261 = scmp.eq.s32.totalorder %s50, 3
      %p262 = por %p260, %p261
      %p263 = scmp.ne.s32.totalorder %s252, %s253
      %p264 = scmp.eq.s32.totalorder %s50, 0
      %p265 = por %p263, %p264
      %p266 = scmp.ne.s32.totalorder %s252, %s253
      %p267 = scmp.eq.s32.totalorder %s51, 3
      %p268 = por %p266, %p267
      %p270 = scmp.ne.s32.totalorder %s253, %s269
      %p271 = scmp.eq.s32.totalorder %s51, 0
      %p272 = por %p270, %p271
      %s273 = ssub.s32 %s53, %s60
      %p274 = scmp.eq.s32.totalorder %s273, 0
      %s276 = sadd.s32 %s275, 1
      %s277 = scalar_select %p274, %s275, %s276
      %p280 = pneg %p274
      %p281 = scmp.eq.s32.totalorder %s45, 3
      %p282 = por %p280, %p281
      %p283 = scmp.ne.s32.totalorder %s275, %s278
      %p284 = scmp.eq.s32.totalorder %s45, 0
      %p285 = por %p283, %p284
      %p286 = scmp.ne.s32.totalorder %s275, %s278
      %p287 = scmp.eq.s32.totalorder %s50, 3
      %p288 = por %p286, %p287
      %p289 = scmp.ne.s32.totalorder %s278, %s279
      %p290 = scmp.eq.s32.totalorder %s50, 0
      %p291 = por %p289, %p290
      %p292 = scmp.ne.s32.totalorder %s278, %s279
      %p293 = scmp.eq.s32.totalorder %s51, 3
      %p294 = por %p292, %p293
      %p296 = scmp.ne.s32.totalorder %s279, %s295
      %p297 = scmp.eq.s32.totalorder %s51, 0
      %p298 = por %p296, %p297
      %s299 = ssub.s32 %s53, %s60
      %p300 = scmp.eq.s32.totalorder %s299, 0
      %s302 = sadd.s32 %s301, 1
      %s303 = scalar_select %p300, %s301, %s302
      %p306 = pneg %p300
      %p307 = scmp.eq.s32.totalorder %s45, 3
      %p308 = por %p306, %p307
      %p309 = scmp.ne.s32.totalorder %s301, %s304
      %p310 = scmp.eq.s32.totalorder %s45, 0
      %p311 = por %p309, %p310
      %p312 = scmp.ne.s32.totalorder %s301, %s304
      %p313 = scmp.eq.s32.totalorder %s50, 3
      %p314 = por %p312, %p313
      %p315 = scmp.ne.s32.totalorder %s304, %s305
      %p316 = scmp.eq.s32.totalorder %s50, 0
      %p317 = por %p315, %p316
      %p318 = scmp.ne.s32.totalorder %s304, %s305
      %p319 = scmp.eq.s32.totalorder %s51, 3
      %p320 = por %p318, %p319
      %p322 = scmp.ne.s32.totalorder %s305, %s321
      %p323 = scmp.eq.s32.totalorder %s51, 0
      %p324 = por %p322, %p323
      %s325 = ssub.s32 %s53, %s60
      %p326 = scmp.eq.s32.totalorder %s325, 0
      %s328 = sadd.s32 %s327, 1
      %s329 = scalar_select %p326, %s327, %s328
      %p332 = pneg %p326
      %p333 = scmp.eq.s32.totalorder %s45, 3
      %p334 = por %p332, %p333
      %p335 = scmp.ne.s32.totalorder %s327, %s330
      %p336 = scmp.eq.s32.totalorder %s45, 0
      %p337 = por %p335, %p336
      %p338 = scmp.ne.s32.totalorder %s327, %s330
      %p339 = scmp.eq.s32.totalorder %s50, 3
      %p340 = por %p338, %p339
      %p341 = scmp.ne.s32.totalorder %s330, %s331
      %p342 = scmp.eq.s32.totalorder %s50, 0
      %p343 = por %p341, %p342
      %p344 = scmp.ne.s32.totalorder %s330, %s331
      %p345 = scmp.eq.s32.totalorder %s51, 3
      %p346 = por %p344, %p345
      %p348 = scmp.ne.s32.totalorder %s331, %s347
      %p349 = scmp.eq.s32.totalorder %s51, 0
      %p350 = por %p348, %p349
      %s351 = ssub.s32 %s53, %s60
      %p352 = scmp.eq.s32.totalorder %s351, 0
      %s354 = sadd.s32 %s353, 1
      %s355 = scalar_select %p352, %s353, %s354
      %p358 = pneg %p352
      %p359 = scmp.eq.s32.totalorder %s45, 3
      %p360 = por %p358, %p359
      %p361 = scmp.ne.s32.totalorder %s353, %s356
      %p362 = scmp.eq.s32.totalorder %s45, 0
      %p363 = por %p361, %p362
      %p364 = scmp.ne.s32.totalorder %s353, %s356
      %p365 = scmp.eq.s32.totalorder %s50, 3
      %p366 = por %p364, %p365
      %p367 = scmp.ne.s32.totalorder %s356, %s357
      %p368 = scmp.eq.s32.totalorder %s50, 0
      %p369 = por %p367, %p368
      %p370 = scmp.ne.s32.totalorder %s356, %s357
      %p371 = scmp.eq.s32.totalorder %s51, 3
      %p372 = por %p370, %p371
      %p374 = scmp.ne.s32.totalorder %s357, %s373
      %p375 = scmp.eq.s32.totalorder %s51, 0
      %p376 = por %p374, %p375
      %s377 = ssub.s32 %s53, %s60
      %p378 = scmp.eq.s32.totalorder %s377, 0
      %s380 = sadd.s32 %s379, 1
      %s381 = scalar_select %p378, %s379, %s380
      %p384 = pneg %p378
      %p385 = scmp.eq.s32.totalorder %s45, 3
      %p386 = por %p384, %p385
      %p387 = scmp.ne.s32.totalorder %s379, %s382
      %p388 = scmp.eq.s32.totalorder %s45, 0
      %p389 = por %p387, %p388
      %p390 = scmp.ne.s32.totalorder %s379, %s382
      %p391 = scmp.eq.s32.totalorder %s50, 3
      %p392 = por %p390, %p391
      %p393 = scmp.ne.s32.totalorder %s382, %s383
      %p394 = scmp.eq.s32.totalorder %s50, 0
      %p395 = por %p393, %p394
      %p396 = scmp.ne.s32.totalorder %s382, %s383
      %p397 = scmp.eq.s32.totalorder %s51, 3
      %p398 = por %p396, %p397
      %p400 = scmp.ne.s32.totalorder %s383, %s399
      %p401 = scmp.eq.s32.totalorder %s51, 0
      %p402 = por %p400, %p401
      %s403 = ssub.s32 %s53, %s60
      %p404 = scmp.eq.s32.totalorder %s403, 0
      %s406 = sadd.s32 %s405, 1
      %s407 = scalar_select %p404, %s405, %s406
      %p410 = pneg %p404
      %p411 = scmp.eq.s32.totalorder %s45, 3
      %p412 = por %p410, %p411
      %p413 = scmp.ne.s32.totalorder %s405, %s408
      %p414 = scmp.eq.s32.totalorder %s45, 0
      %p415 = por %p413, %p414
      %p416 = scmp.ne.s32.totalorder %s405, %s408
      %p417 = scmp.eq.s32.totalorder %s50, 3
      %p418 = por %p416, %p417
      %p419 = scmp.ne.s32.totalorder %s408, %s409
      %p420 = scmp.eq.s32.totalorder %s50, 0
      %p421 = por %p419, %p420
      %p422 = scmp.ne.s32.totalorder %s408, %s409
      %p423 = scmp.eq.s32.totalorder %s51, 3
      %p424 = por %p422, %p423
      %p426 = scmp.ne.s32.totalorder %s409, %s425
      %p427 = scmp.eq.s32.totalorder %s51, 0
      %p428 = por %p426, %p427
      %s429 = ssub.s32 %s53, %s60
      %p430 = scmp.eq.s32.totalorder %s429, 0
      %s432 = sadd.s32 %s431, 1
      %s433 = scalar_select %p430, %s431, %s432
      %p436 = pneg %p430
      %p437 = scmp.eq.s32.totalorder %s45, 3
      %p438 = por %p436, %p437
      %p439 = scmp.ne.s32.totalorder %s431, %s434
      %p440 = scmp.eq.s32.totalorder %s45, 0
      %p441 = por %p439, %p440
      %p442 = scmp.ne.s32.totalorder %s431, %s434
      %p443 = scmp.eq.s32.totalorder %s50, 3
      %p444 = por %p442, %p443
      %p445 = scmp.ne.s32.totalorder %s434, %s435
      %p446 = scmp.eq.s32.totalorder %s50, 0
      %p447 = por %p445, %p446
      %p448 = scmp.ne.s32.totalorder %s434, %s435
      %p449 = scmp.eq.s32.totalorder %s51, 3
      %p450 = por %p448, %p449
      %p452 = scmp.ne.s32.totalorder %s435, %s451
      %p453 = scmp.eq.s32.totalorder %s51, 0
      %p454 = por %p452, %p453
      %s455 = ssub.s32 %s53, %s60
      %p456 = scmp.eq.s32.totalorder %s455, 0
      %s458 = sadd.s32 %s457, 1
      %s459 = scalar_select %p456, %s457, %s458
      %p462 = pneg %p456
      %p463 = scmp.eq.s32.totalorder %s45, 3
      %p464 = por %p462, %p463
      %p465 = scmp.ne.s32.totalorder %s457, %s460
      %p466 = scmp.eq.s32.totalorder %s45, 0
      %p467 = por %p465, %p466
      %p468 = scmp.ne.s32.totalorder %s457, %s460
      %p469 = scmp.eq.s32.totalorder %s50, 3
      %p470 = por %p468, %p469
      %p471 = scmp.ne.s32.totalorder %s460, %s461
      %p472 = scmp.eq.s32.totalorder %s50, 0
      %p473 = por %p471, %p472
      %p474 = scmp.ne.s32.totalorder %s460, %s461
      %p475 = scmp.eq.s32.totalorder %s51, 3
      %p476 = por %p474, %p475
      %p478 = scmp.ne.s32.totalorder %s461, %s477
      %p479 = scmp.eq.s32.totalorder %s51, 0
      %p480 = por %p478, %p479
      %s481 = ssub.s32 %s53, %s60
      %p482 = scmp.eq.s32.totalorder %s481, 0
      %s484 = sadd.s32 %s483, 1
      %s485 = scalar_select %p482, %s483, %s484
      %p488 = pneg %p482
      %p489 = scmp.eq.s32.totalorder %s45, 3
      %p490 = por %p488, %p489
      %p491 = scmp.ne.s32.totalorder %s483, %s486
      %p492 = scmp.eq.s32.totalorder %s45, 0
      %p493 = por %p491, %p492
      %p494 = scmp.ne.s32.totalorder %s483, %s486
      %p495 = scmp.eq.s32.totalorder %s50, 3
      %p496 = por %p494, %p495
      %p497 = scmp.ne.s32.totalorder %s486, %s487
      %p498 = scmp.eq.s32.totalorder %s50, 0
      %p499 = por %p497, %p498
      %p500 = scmp.ne.s32.totalorder %s486, %s487
      %p501 = scmp.eq.s32.totalorder %s51, 3
      %p502 = por %p500, %p501
      %p504 = scmp.ne.s32.totalorder %s487, %s503
      %p505 = scmp.eq.s32.totalorder %s51, 0
      %p506 = por %p504, %p505
      %s507 = ssub.s32 %s53, %s60
      %p508 = scmp.eq.s32.totalorder %s507, 0
      %s510 = sadd.s32 %s509, 1
      %s511 = scalar_select %p508, %s509, %s510
      %p514 = pneg %p508
      %p515 = scmp.eq.s32.totalorder %s45, 3
      %p516 = por %p514, %p515
      %p517 = scmp.ne.s32.totalorder %s509, %s512
      %p518 = scmp.eq.s32.totalorder %s45, 0
      %p519 = por %p517, %p518
      %p520 = scmp.ne.s32.totalorder %s509, %s512
      %p521 = scmp.eq.s32.totalorder %s50, 3
      %p522 = por %p520, %p521
      %p523 = scmp.ne.s32.totalorder %s512, %s513
      %p524 = scmp.eq.s32.totalorder %s50, 0
      %p525 = por %p523, %p524
      %p526 = scmp.ne.s32.totalorder %s512, %s513
      %p527 = scmp.eq.s32.totalorder %s51, 3
      %p528 = por %p526, %p527
      %p530 = scmp.ne.s32.totalorder %s513, %s529
      %p531 = scmp.eq.s32.totalorder %s51, 0
      %p532 = por %p530, %p531
      %s533 = ssub.s32 %s53, %s60
      %p534 = scmp.eq.s32.totalorder %s533, 0
      %s536 = sadd.s32 %s535, 1
      %s537 = scalar_select %p534, %s535, %s536
      %p540 = pneg %p534
      %p541 = scmp.eq.s32.totalorder %s45, 3
      %p542 = por %p540, %p541
      %p543 = scmp.ne.s32.totalorder %s535, %s538
      %p544 = scmp.eq.s32.totalorder %s45, 0
      %p545 = por %p543, %p544
      %p546 = scmp.ne.s32.totalorder %s535, %s538
      %p547 = scmp.eq.s32.totalorder %s50, 3
      %p548 = por %p546, %p547
      %p549 = scmp.ne.s32.totalorder %s538, %s539
      %p550 = scmp.eq.s32.totalorder %s50, 0
      %p551 = por %p549, %p550
      %p552 = scmp.ne.s32.totalorder %s538, %s539
      %p553 = scmp.eq.s32.totalorder %s51, 3
      %p554 = por %p552, %p553
      %p556 = scmp.ne.s32.totalorder %s539, %s555
      %p557 = scmp.eq.s32.totalorder %s51, 0
      %p558 = por %p556, %p557
      %s559 = ssub.s32 %s53, %s60
      %p560 = scmp.eq.s32.totalorder %s559, 0
      %s562 = sadd.s32 %s561, 1
      %s563 = scalar_select %p560, %s561, %s562
      %p566 = pneg %p560
      %p567 = scmp.eq.s32.totalorder %s45, 3
      %p568 = por %p566, %p567
      %p569 = scmp.ne.s32.totalorder %s561, %s564
      %p570 = scmp.eq.s32.totalorder %s45, 0
      %p571 = por %p569, %p570
      %p572 = scmp.ne.s32.totalorder %s561, %s564
      %p573 = scmp.eq.s32.totalorder %s50, 3
      %p574 = por %p572, %p573
      %p575 = scmp.ne.s32.totalorder %s564, %s565
      %p576 = scmp.eq.s32.totalorder %s50, 0
      %p577 = por %p575, %p576
      %p578 = scmp.ne.s32.totalorder %s564, %s565
      %p579 = scmp.eq.s32.totalorder %s51, 3
      %p580 = por %p578, %p579
      %p582 = scmp.ne.s32.totalorder %s565, %s581
      %p583 = scmp.eq.s32.totalorder %s51, 0
      %p584 = por %p582, %p583
      %s585 = ssub.s32 %s52, %s64
      %p586 = scmp.eq.s32.totalorder %s585, 0
      %s588 = sadd.s32 %s587, 1
      %s589 = scalar_select %p586, %s587, %s588
      %p592 = pneg %p586
      %p593 = scmp.eq.s32.totalorder %s45, 3
      %p594 = por %p592, %p593
      %p595 = scmp.ne.s32.totalorder %s587, %s590
      %p596 = scmp.eq.s32.totalorder %s45, 0
      %p597 = por %p595, %p596
      %p598 = scmp.ne.s32.totalorder %s587, %s590
      %p599 = scmp.eq.s32.totalorder %s50, 3
      %p600 = por %p598, %p599
      %p601 = scmp.ne.s32.totalorder %s590, %s591
      %p602 = scmp.eq.s32.totalorder %s50, 0
      %p603 = por %p601, %p602
      %p604 = scmp.ne.s32.totalorder %s590, %s591
      %p605 = scmp.eq.s32.totalorder %s51, 3
      %p606 = por %p604, %p605
      %p608 = scmp.ne.s32.totalorder %s591, %s607
      %p609 = scmp.eq.s32.totalorder %s51, 0
      %p610 = por %p608, %p609
      %p611 = scmp.le.s32.totalorder 1, %s45
      %p612 = scmp.lt.s32.totalorder %s45, 5
      %p613 = pnand %p611, %p612
      %p614 = pneg %p613
      // Predicated region
      $region9: #{transformer_decoder_forward.2} parent=5 // pred_check
        _
      $region10: #{transformer_decoder_forward.2} parent=5 // pred_check_branch
        %616 = sbr.rel (%p613) target = $region12
      $region11: #{transformer_decoder_forward.2} parent=5 // pred_region
        %s617 = ssub.s32 %s45, 1
      $region12: #{transformer_decoder_forward.2} parent=5 // pred_fallthru
        _
      %p618 = scmp.lt.s32.totalorder %s45, 4
      // Predicated region
      $region13: #{transformer_decoder_forward.2} parent=5 // pred_check
        %p619 = pneg %p618
      $region14: #{transformer_decoder_forward.2} parent=5 // pred_check_branch
        %621 = sbr.rel (%p619) target = $region16
      $region15: #{transformer_decoder_forward.2} parent=5 // pred_region
        // Predicated region
        $region17: #{transformer_decoder_forward.2} parent=15 // pred_check
          %p622 = pneg %p77
        $region18: #{transformer_decoder_forward.2} parent=15 // pred_check_branch
          %624 = sbr.rel (%p622) target = $region20
        $region19: #{transformer_decoder_forward.2} parent=15 // pred_region
          %p625 = scmp.lt.s32.totalorder %s52, 1
          %s626 = scalar_select %p625, %s52, 1
          %s627 = smul.addr %s626, 2
          %s628 = smul.addr %s627, 8
          %s629 = scalar_lea.vmem %s2, %s628
        $region20: #{transformer_decoder_forward.2} parent=15 // pred_fallthru
          _
        // Predicated region
        $region21: #{transformer_decoder_forward.2} parent=15 // pred_check
          %p630 = pneg %p103
        $region22: #{transformer_decoder_forward.2} parent=15 // pred_check_branch
          %632 = sbr.rel (%p630) target = $region24
        $region23: #{transformer_decoder_forward.2} parent=15 // pred_region
          %p633 = scmp.lt.s32.totalorder %s52, 1
          %s634 = scalar_select %p633, %s52, 1
          %s635 = smul.addr %s634, 3
          %s636 = smul.addr %s635, 4
          %s637 = scalar_lea.vmem %s3, %s636
        $region24: #{transformer_decoder_forward.2} parent=15 // pred_fallthru
          _
        // Predicated region
        $region25: #{transformer_decoder_forward.2} parent=15 // pred_check
          %p638 = pneg %p129
        $region26: #{transformer_decoder_forward.2} parent=15 // pred_check_branch
          %640 = sbr.rel (%p638) target = $region28
        $region27: #{transformer_decoder_forward.2} parent=15 // pred_region
          %p641 = scmp.lt.s32.totalorder %s53, 1
          %s642 = scalar_select %p641, %s53, 1
          %s643 = scalar_lea.vmem %s4, %s642
        $region28: #{transformer_decoder_forward.2} parent=15 // pred_fallthru
          _
        // Predicated region
        $region29: #{transformer_decoder_forward.2} parent=15 // pred_check
          %p644 = pneg %p155
        $region30: #{transformer_decoder_forward.2} parent=15 // pred_check_branch
          %646 = sbr.rel (%p644) target = $region32
        $region31: #{transformer_decoder_forward.2} parent=15 // pred_region
          %p647 = scmp.lt.s32.totalorder %s53, 1
          %s648 = scalar_select %p647, %s53, 1
          %s649 = scalar_lea.vmem %s5, %s648
        $region32: #{transformer_decoder_forward.2} parent=15 // pred_fallthru
          _
        // Predicated region
        $region33: #{transformer_decoder_forward.2} parent=15 // pred_check
          %p650 = pneg %p181
        $region34: #{transformer_decoder_forward.2} parent=15 // pred_check_branch
          %652 = sbr.rel (%p650) target = $region36
        $region35: #{transformer_decoder_forward.2} parent=15 // pred_region
          %p653 = scmp.lt.s32.totalorder %s53, 1
          %s654 = scalar_select %p653, %s53, 1
          %s655 = scalar_lea.vmem %s6, %s654
        $region36: #{transformer_decoder_forward.2} parent=15 // pred_fallthru
          _
        // Predicated region
        $region37: #{transformer_decoder_forward.2} parent=15 // pred_check
          %p656 = pneg %p207
        $region38: #{transformer_decoder_forward.2} parent=15 // pred_check_branch
          %658 = sbr.rel (%p656) target = $region40
        $region39: #{transformer_decoder_forward.2} parent=15 // pred_region
          %p659 = scmp.lt.s32.totalorder %s53, 1
          %s660 = scalar_select %p659, %s53, 1
          %s661 = scalar_lea.vmem %s7, %s660
        $region40: #{transformer_decoder_forward.2} parent=15 // pred_fallthru
          _
        // Predicated region
        $region41: #{transformer_decoder_forward.2} parent=15 // pred_check
          %p662 = pneg %p233
        $region42: #{transformer_decoder_forward.2} parent=15 // pred_check_branch
          %664 = sbr.rel (%p662) target = $region44
        $region43: #{transformer_decoder_forward.2} parent=15 // pred_region
          %p665 = scmp.lt.s32.totalorder %s53, 1
          %s666 = scalar_select %p665, %s53, 1
          %s667 = smul.addr %s666, 48
          %s668 = smul.addr %s667, 4
          %s669 = scalar_lea.vmem %s8, %s668
        $region44: #{transformer_decoder_forward.2} parent=15 // pred_fallthru
          _
        // Predicated region
        $region45: #{transformer_decoder_forward.2} parent=15 // pred_check
          %p670 = pneg %p259
        $region46: #{transformer_decoder_forward.2} parent=15 // pred_check_branch
          %672 = sbr.rel (%p670) target = $region48
        $region47: #{transformer_decoder_forward.2} parent=15 // pred_region
          %p673 = scmp.lt.s32.totalorder %s53, 1
          %s674 = scalar_select %p673, %s53, 1
          %s675 = smul.addr %s674, 3
          %s676 = scalar_lea.vmem %s9, %s675
        $region48: #{transformer_decoder_forward.2} parent=15 // pred_fallthru
          _
        // Predicated region
        $region49: #{transformer_decoder_forward.2} parent=15 // pred_check
          %p677 = pneg %p285
        $region50: #{transformer_decoder_forward.2} parent=15 // pred_check_branch
          %679 = sbr.rel (%p677) target = $region52
        $region51: #{transformer_decoder_forward.2} parent=15 // pred_region
          %s680 = sand.u32 %s275, 1
          %s681 = scalar_lea.sflag [#allocation7], %s680
          %s682 = sand.u32 %s275, 1
          %s683 = smul.addr %s682, 64
          %s684 = scalar_lea.vmem [#allocation6], %s683
          %s686 = ssub.s32 1024, 1024
          %687 = vsyncadd %s681, %s686
          %s688 = smul.addr %s53, 16
          %s689 = smul.addr %s688, 64
          %s690 = scalar_lea.hbm %s10, %s689
          %s691 = sshll.u32 %s684, 4
          %s692 = int_to_ptr.vmem [resolvable:$true] %s691
          %697 = dma.hbm_to_vmem [thread:$0]  %s690, 1024, %s692, %s681, 64, 64, 4
        $region52: #{transformer_decoder_forward.2} parent=15 // pred_fallthru
          _
        // Predicated region
        $region53: #{transformer_decoder_forward.2} parent=15 // pred_check
          %p698 = pneg %p311
        $region54: #{transformer_decoder_forward.2} parent=15 // pred_check_branch
          %700 = sbr.rel (%p698) target = $region56
        $region55: #{transformer_decoder_forward.2} parent=15 // pred_region
          %s701 = sand.u32 %s45, 1
          %s702 = scalar_lea.sflag [#allocation9], %s701
          %s703 = sand.u32 %s301, 1
          %s704 = scalar_lea.vmem [#allocation8], %s703
          %s706 = ssub.s32 16, 16
          %707 = vsyncadd %s702, %s706
          %s708 = smul.addr %s53, 16
          %s709 = scalar_lea.hbm %s11, %s708
          %s711 = sshll.u32 %s704, 4
          %s712 = int_to_ptr.vmem [resolvable:$true] %s711
          %714 = dma.hbm_to_vmem [thread:$0]  %s709, 16, %s712, %s702
        $region56: #{transformer_decoder_forward.2} parent=15 // pred_fallthru
          _
        // Predicated region
        $region57: #{transformer_decoder_forward.2} parent=15 // pred_check
          %p715 = pneg %p337
        $region58: #{transformer_decoder_forward.2} parent=15 // pred_check_branch
          %717 = sbr.rel (%p715) target = $region60
        $region59: #{transformer_decoder_forward.2} parent=15 // pred_region
          %s718 = sand.u32 %s45, 1
          %s719 = scalar_lea.sflag [#allocation9], %s718
          %s720 = sand.u32 %s327, 1
          %s721 = smul.addr %s720, 64
          %s722 = scalar_lea.vmem [#allocation10], %s721
          %s724 = ssub.s32 1024, 1024
          %725 = vsyncadd %s719, %s724
          %s726 = smul.addr %s53, 16
          %s727 = smul.addr %s726, 64
          %s728 = scalar_lea.hbm %s12, %s727
          %s729 = sshll.u32 %s722, 4
          %s730 = int_to_ptr.vmem [resolvable:$true] %s729
          %735 = dma.hbm_to_vmem [thread:$0]  %s728, 1024, %s730, %s719, 64, 64, 4
        $region60: #{transformer_decoder_forward.2} parent=15 // pred_fallthru
          _
        // Predicated region
        $region61: #{transformer_decoder_forward.2} parent=15 // pred_check
          %p736 = pneg %p363
        $region62: #{transformer_decoder_forward.2} parent=15 // pred_check_branch
          %738 = sbr.rel (%p736) target = $region64
        $region63: #{transformer_decoder_forward.2} parent=15 // pred_region
          %p739 = scmp.lt.s32.totalorder %s53, 1
          %s740 = scalar_select %p739, %s53, 1
          %s741 = scalar_lea.vmem %s13, %s740
        $region64: #{transformer_decoder_forward.2} parent=15 // pred_fallthru
          _
        // Predicated region
        $region65: #{transformer_decoder_forward.2} parent=15 // pred_check
          %p742 = pneg %p389
        $region66: #{transformer_decoder_forward.2} parent=15 // pred_check_branch
          %744 = sbr.rel (%p742) target = $region68
        $region67: #{transformer_decoder_forward.2} parent=15 // pred_region
          %p745 = scmp.lt.s32.totalorder %s53, 1
          %s746 = scalar_select %p745, %s53, 1
          %s747 = smul.addr %s746, 32
          %s748 = smul.addr %s747, 4
          %s749 = scalar_lea.vmem %s14, %s748
        $region68: #{transformer_decoder_forward.2} parent=15 // pred_fallthru
          _
        // Predicated region
        $region69: #{transformer_decoder_forward.2} parent=15 // pred_check
          %p750 = pneg %p415
        $region70: #{transformer_decoder_forward.2} parent=15 // pred_check_branch
          %752 = sbr.rel (%p750) target = $region72
        $region71: #{transformer_decoder_forward.2} parent=15 // pred_region
          %p753 = scmp.lt.s32.totalorder %s53, 1
          %s754 = scalar_select %p753, %s53, 1
          %s755 = smul.addr %s754, 2
          %s756 = scalar_lea.vmem %s15, %s755
        $region72: #{transformer_decoder_forward.2} parent=15 // pred_fallthru
          _
        // Predicated region
        $region73: #{transformer_decoder_forward.2} parent=15 // pred_check
          %p757 = pneg %p441
        $region74: #{transformer_decoder_forward.2} parent=15 // pred_check_branch
          %759 = sbr.rel (%p757) target = $region76
        $region75: #{transformer_decoder_forward.2} parent=15 // pred_region
          %s760 = sand.u32 %s45, 1
          %s761 = scalar_lea.sflag [#allocation12], %s760
          %s762 = sand.u32 %s431, 1
          %s763 = smul.addr %s762, 64
          %s764 = scalar_lea.vmem [#allocation11], %s763
          %s766 = ssub.s32 1024, 1024
          %767 = vsyncadd %s761, %s766
          %s768 = smul.addr %s53, 16
          %s769 = smul.addr %s768, 64
          %s770 = scalar_lea.hbm %s16, %s769
          %s771 = sshll.u32 %s764, 4
          %s772 = int_to_ptr.vmem [resolvable:$true] %s771
          %777 = dma.hbm_to_vmem [thread:$0]  %s770, 1024, %s772, %s761, 64, 64, 4
        $region76: #{transformer_decoder_forward.2} parent=15 // pred_fallthru
          _
        // Predicated region
        $region77: #{transformer_decoder_forward.2} parent=15 // pred_check
          %p778 = pneg %p467
        $region78: #{transformer_decoder_forward.2} parent=15 // pred_check_branch
          %780 = sbr.rel (%p778) target = $region80
        $region79: #{transformer_decoder_forward.2} parent=15 // pred_region
          %p781 = scmp.lt.s32.totalorder %s53, 1
          %s782 = scalar_select %p781, %s53, 1
          %s783 = scalar_lea.vmem %s17, %s782
        $region80: #{transformer_decoder_forward.2} parent=15 // pred_fallthru
          _
        // Predicated region
        $region81: #{transformer_decoder_forward.2} parent=15 // pred_check
          %p784 = pneg %p493
        $region82: #{transformer_decoder_forward.2} parent=15 // pred_check_branch
          %786 = sbr.rel (%p784) target = $region84
        $region83: #{transformer_decoder_forward.2} parent=15 // pred_region
          %p787 = scmp.lt.s32.totalorder %s53, 1
          %s788 = scalar_select %p787, %s53, 1
          %s789 = smul.addr %s788, 32
          %s790 = smul.addr %s789, 4
          %s791 = scalar_lea.vmem %s18, %s790
        $region84: #{transformer_decoder_forward.2} parent=15 // pred_fallthru
          _
        // Predicated region
        $region85: #{transformer_decoder_forward.2} parent=15 // pred_check
          %p792 = pneg %p519
        $region86: #{transformer_decoder_forward.2} parent=15 // pred_check_branch
          %794 = sbr.rel (%p792) target = $region88
        $region87: #{transformer_decoder_forward.2} parent=15 // pred_region
          %p795 = scmp.lt.s32.totalorder %s53, 1
          %s796 = scalar_select %p795, %s53, 1
          %s797 = smul.addr %s796, 2
          %s798 = scalar_lea.vmem %s19, %s797
        $region88: #{transformer_decoder_forward.2} parent=15 // pred_fallthru
          _
        // Predicated region
        $region89: #{transformer_decoder_forward.2} parent=15 // pred_check
          %p799 = pneg %p545
        $region90: #{transformer_decoder_forward.2} parent=15 // pred_check_branch
          %801 = sbr.rel (%p799) target = $region92
        $region91: #{transformer_decoder_forward.2} parent=15 // pred_region
          %s802 = sand.u32 %s45, 1
          %s803 = scalar_lea.sflag [#allocation12], %s802
          %s804 = sand.u32 %s535, 1
          %s805 = smul.addr %s804, 128
          %s806 = scalar_lea.vmem [#allocation13], %s805
          %s808 = ssub.s32 2048, 2048
          %809 = vsyncadd %s803, %s808
          %s810 = smul.addr %s53, 32
          %s811 = smul.addr %s810, 64
          %s812 = scalar_lea.hbm %s20, %s811
          %s813 = sshll.u32 %s806, 4
          %s814 = int_to_ptr.vmem [resolvable:$true] %s813
          %819 = dma.hbm_to_vmem [thread:$0]  %s812, 2048, %s814, %s803, 64, 64, 4
        $region92: #{transformer_decoder_forward.2} parent=15 // pred_fallthru
          _
        // Predicated region
        $region93: #{transformer_decoder_forward.2} parent=15 // pred_check
          %p820 = pneg %p571
        $region94: #{transformer_decoder_forward.2} parent=15 // pred_check_branch
          %822 = sbr.rel (%p820) target = $region96
        $region95: #{transformer_decoder_forward.2} parent=15 // pred_region
          %p823 = scmp.lt.s32.totalorder %s53, 1
          %s824 = scalar_select %p823, %s53, 1
          %s825 = scalar_lea.vmem %s21, %s824
        $region96: #{transformer_decoder_forward.2} parent=15 // pred_fallthru
          _
      $region16: #{transformer_decoder_forward.2} parent=5 // pred_fallthru
        _
      %p826 = scmp.le.s32.totalorder 1, %s45
      %p827 = scmp.lt.s32.totalorder %s45, 5
      %p828 = pnand %p826, %p827
      %p829 = pneg %p828
      // Predicated region
      $region97: #{transformer_decoder_forward.2} parent=5 // pred_check
        _
      $region98: #{transformer_decoder_forward.2} parent=5 // pred_check_branch
        %831 = sbr.rel (%p828) target = $region100
      $region99: #{transformer_decoder_forward.2} parent=5 // pred_region
        %s832 = ssub.s32 %s45, 1
        %s833 = sand.u32 %s278, 1
        %s834 = scalar_lea.sflag [#allocation7], %s833
        %s835 = sand.u32 %s278, 1
        %s836 = smul.addr %s835, 64
        %s837 = scalar_lea.vmem [#allocation6], %s836
        // Predicated region
        $region101: #{transformer_decoder_forward.2} parent=99 // pred_check
          %p838 = pneg %p291
        $region102: #{transformer_decoder_forward.2} parent=99 // pred_check_branch
          %840 = sbr.rel (%p838) target = $region104
        $region103: #{transformer_decoder_forward.2} parent=99 // pred_region
          %841 = dma.done %s834, 1024
        $region104: #{transformer_decoder_forward.2} parent=99 // pred_fallthru
          _
        %s842 = sand.u32 %s50, 1
        %s843 = scalar_lea.sflag [#allocation9], %s842
        %s844 = sand.u32 %s304, 1
        %s845 = scalar_lea.vmem [#allocation8], %s844
        // Predicated region
        $region105: #{transformer_decoder_forward.2} parent=99 // pred_check
          %p846 = pneg %p317
        $region106: #{transformer_decoder_forward.2} parent=99 // pred_check_branch
          %848 = sbr.rel (%p846) target = $region108
        $region107: #{transformer_decoder_forward.2} parent=99 // pred_region
          %849 = dma.done %s843, 16
        $region108: #{transformer_decoder_forward.2} parent=99 // pred_fallthru
          _
        %s850 = sand.u32 %s50, 1
        %s851 = scalar_lea.sflag [#allocation9], %s850
        %s852 = sand.u32 %s330, 1
        %s853 = smul.addr %s852, 64
        %s854 = scalar_lea.vmem [#allocation10], %s853
        // Predicated region
        $region109: #{transformer_decoder_forward.2} parent=99 // pred_check
          %p855 = pneg %p343
        $region110: #{transformer_decoder_forward.2} parent=99 // pred_check_branch
          %857 = sbr.rel (%p855) target = $region112
        $region111: #{transformer_decoder_forward.2} parent=99 // pred_region
          %858 = dma.done %s851, 1024
        $region112: #{transformer_decoder_forward.2} parent=99 // pred_fallthru
          _
        %s859 = sand.u32 %s50, 1
        %s860 = scalar_lea.sflag [#allocation12], %s859
        %s861 = sand.u32 %s434, 1
        %s862 = smul.addr %s861, 64
        %s863 = scalar_lea.vmem [#allocation11], %s862
        // Predicated region
        $region113: #{transformer_decoder_forward.2} parent=99 // pred_check
          %p864 = pneg %p447
        $region114: #{transformer_decoder_forward.2} parent=99 // pred_check_branch
          %866 = sbr.rel (%p864) target = $region116
        $region115: #{transformer_decoder_forward.2} parent=99 // pred_region
          %867 = dma.done %s860, 1024
        $region116: #{transformer_decoder_forward.2} parent=99 // pred_fallthru
          _
        %s868 = sand.u32 %s50, 1
        %s869 = scalar_lea.sflag [#allocation12], %s868
        %s870 = sand.u32 %s538, 1
        %s871 = smul.addr %s870, 128
        %s872 = scalar_lea.vmem [#allocation13], %s871
        // Predicated region
        $region117: #{transformer_decoder_forward.2} parent=99 // pred_check
          %p873 = pneg %p551
        $region118: #{transformer_decoder_forward.2} parent=99 // pred_check_branch
          %875 = sbr.rel (%p873) target = $region120
        $region119: #{transformer_decoder_forward.2} parent=99 // pred_region
          %876 = dma.done %s869, 2048
        $region120: #{transformer_decoder_forward.2} parent=99 // pred_fallthru
          _
        %p877 = scmp.lt.s32.totalorder %s54, 1
        %s878 = scalar_select %p877, %s54, 1
        %s879 = smul.addr %s878, 2
        %s880 = smul.addr %s879, 8
        %s881 = scalar_lea.vmem %s2, %s880
        %p882 = pneg %p83
        %p883 = pneg %p80
        %p884 = scmp.lt.s32.totalorder %s54, 1
        %s885 = scalar_select %p884, %s54, 1
        %s886 = smul.addr %s885, 3
        %s887 = smul.addr %s886, 4
        %s888 = scalar_lea.vmem %s3, %s887
        %p889 = pneg %p109
        %p890 = pneg %p106
        %p891 = scmp.lt.s32.totalorder %s55, 1
        %s892 = scalar_select %p891, %s55, 1
        %s893 = scalar_lea.vmem %s4, %s892
        %p894 = pneg %p135
        %p895 = pneg %p132
        %p896 = scmp.lt.s32.totalorder %s55, 1
        %s897 = scalar_select %p896, %s55, 1
        %s898 = scalar_lea.vmem %s5, %s897
        %p899 = pneg %p161
        %p900 = pneg %p158
        %p901 = scmp.lt.s32.totalorder %s55, 1
        %s902 = scalar_select %p901, %s55, 1
        %s903 = scalar_lea.vmem %s6, %s902
        %p904 = pneg %p187
        %p905 = pneg %p184
        %p906 = scmp.lt.s32.totalorder %s55, 1
        %s907 = scalar_select %p906, %s55, 1
        %s908 = scalar_lea.vmem %s7, %s907
        %p909 = pneg %p213
        %p910 = pneg %p210
        %p911 = scmp.lt.s32.totalorder %s55, 1
        %s912 = scalar_select %p911, %s55, 1
        %s913 = smul.addr %s912, 48
        %s914 = smul.addr %s913, 4
        %s915 = scalar_lea.vmem %s8, %s914
        %p916 = pneg %p239
        %p917 = pneg %p236
        %p918 = scmp.lt.s32.totalorder %s55, 1
        %s919 = scalar_select %p918, %s55, 1
        %s920 = smul.addr %s919, 3
        %s921 = scalar_lea.vmem %s9, %s920
        %p922 = pneg %p265
        %p923 = pneg %p262
        %s924 = sand.u32 %s278, 1
        %s925 = scalar_lea.sflag [#allocation7], %s924
        %s926 = sand.u32 %s278, 1
        %s927 = smul.addr %s926, 64
        %s928 = scalar_lea.vmem [#allocation6], %s927
        %p929 = pneg %p291
        %p930 = pneg %p288
        %s931 = sand.u32 %s50, 1
        %s932 = scalar_lea.sflag [#allocation9], %s931
        %s933 = sand.u32 %s304, 1
        %s934 = scalar_lea.vmem [#allocation8], %s933
        %p935 = pneg %p317
        %p936 = pneg %p314
        %s937 = sand.u32 %s50, 1
        %s938 = scalar_lea.sflag [#allocation9], %s937
        %s939 = sand.u32 %s330, 1
        %s940 = smul.addr %s939, 64
        %s941 = scalar_lea.vmem [#allocation10], %s940
        %p942 = pneg %p343
        %p943 = pneg %p340
        %p944 = scmp.lt.s32.totalorder %s55, 1
        %s945 = scalar_select %p944, %s55, 1
        %s946 = scalar_lea.vmem %s13, %s945
        %p947 = pneg %p369
        %p948 = pneg %p366
        %p949 = scmp.lt.s32.totalorder %s55, 1
        %s950 = scalar_select %p949, %s55, 1
        %s951 = smul.addr %s950, 32
        %s952 = smul.addr %s951, 4
        %s953 = scalar_lea.vmem %s14, %s952
        %p954 = pneg %p395
        %p955 = pneg %p392
        %p956 = scmp.lt.s32.totalorder %s55, 1
        %s957 = scalar_select %p956, %s55, 1
        %s958 = smul.addr %s957, 2
        %s959 = scalar_lea.vmem %s15, %s958
        %p960 = pneg %p421
        %p961 = pneg %p418
        %s962 = sand.u32 %s50, 1
        %s963 = scalar_lea.sflag [#allocation12], %s962
        %s964 = sand.u32 %s434, 1
        %s965 = smul.addr %s964, 64
        %s966 = scalar_lea.vmem [#allocation11], %s965
        %p967 = pneg %p447
        %p968 = pneg %p444
        %p969 = scmp.lt.s32.totalorder %s55, 1
        %s970 = scalar_select %p969, %s55, 1
        %s971 = scalar_lea.vmem %s17, %s970
        %p972 = pneg %p473
        %p973 = pneg %p470
        %p974 = scmp.lt.s32.totalorder %s55, 1
        %s975 = scalar_select %p974, %s55, 1
        %s976 = smul.addr %s975, 32
        %s977 = smul.addr %s976, 4
        %s978 = scalar_lea.vmem %s18, %s977
        %p979 = pneg %p499
        %p980 = pneg %p496
        %p981 = scmp.lt.s32.totalorder %s55, 1
        %s982 = scalar_select %p981, %s55, 1
        %s983 = smul.addr %s982, 2
        %s984 = scalar_lea.vmem %s19, %s983
        %p985 = pneg %p525
        %p986 = pneg %p522
        %s987 = sand.u32 %s50, 1
        %s988 = scalar_lea.sflag [#allocation12], %s987
        %s989 = sand.u32 %s538, 1
        %s990 = smul.addr %s989, 128
        %s991 = scalar_lea.vmem [#allocation13], %s990
        %p992 = pneg %p551
        %p993 = pneg %p548
        %p994 = scmp.lt.s32.totalorder %s55, 1
        %s995 = scalar_select %p994, %s55, 1
        %s996 = scalar_lea.vmem %s21, %s995
        %p997 = pneg %p577
        %p998 = pneg %p574
        %p999 = pneg %p603
        %p1000 = pneg %p600
        %p1001 = scmp.lt.s32.totalorder %s54, 1
        %s1002 = scalar_select %p1001, %s54, 1
        %s1003 = smul.addr %s1002, 2
        %s1004 = smul.addr %s1003, 8
        %s1005 = scalar_lea.vmem %s22, %s1004
        %p1006 = scmp.lt.s32.totalorder %s54, 1
        %s1007 = scalar_select %p1006, %s54, 1
        %s1008 = smul.addr %s1007, 2
        %s1009 = smul.addr %s1008, 8
        %s1010 = scalar_lea.vmem %s2, %s1009
        %p1011 = scmp.lt.s32.totalorder %s54, 1
        %s1012 = scalar_select %p1011, %s54, 1
        %s1013 = smul.addr %s1012, 3
        %s1014 = smul.addr %s1013, 4
        %s1015 = scalar_lea.vmem %s3, %s1014
        %p1016 = scmp.lt.s32.totalorder %s55, 1
        %s1017 = scalar_select %p1016, %s55, 1
        %s1018 = scalar_lea.vmem %s4, %s1017
        %p1019 = scmp.lt.s32.totalorder %s55, 1
        %s1020 = scalar_select %p1019, %s55, 1
        %s1021 = scalar_lea.vmem %s5, %s1020
        %p1022 = scmp.lt.s32.totalorder %s55, 1
        %s1023 = scalar_select %p1022, %s55, 1
        %s1024 = scalar_lea.vmem %s6, %s1023
        %p1025 = scmp.lt.s32.totalorder %s55, 1
        %s1026 = scalar_select %p1025, %s55, 1
        %s1027 = scalar_lea.vmem %s7, %s1026
        %p1028 = scmp.lt.s32.totalorder %s55, 1
        %s1029 = scalar_select %p1028, %s55, 1
        %s1030 = smul.addr %s1029, 48
        %s1031 = smul.addr %s1030, 4
        %s1032 = scalar_lea.vmem %s8, %s1031
        %p1033 = scmp.lt.s32.totalorder %s55, 1
        %s1034 = scalar_select %p1033, %s55, 1
        %s1035 = smul.addr %s1034, 3
        %s1036 = scalar_lea.vmem %s9, %s1035
        %p1037 = scmp.lt.s32.totalorder %s55, 1
        %s1038 = scalar_select %p1037, %s55, 1
        %s1039 = scalar_lea.vmem %s13, %s1038
        %p1040 = scmp.lt.s32.totalorder %s55, 1
        %s1041 = scalar_select %p1040, %s55, 1
        %s1042 = smul.addr %s1041, 32
        %s1043 = smul.addr %s1042, 4
        %s1044 = scalar_lea.vmem %s14, %s1043
        %p1045 = scmp.lt.s32.totalorder %s55, 1
        %s1046 = scalar_select %p1045, %s55, 1
        %s1047 = smul.addr %s1046, 2
        %s1048 = scalar_lea.vmem %s15, %s1047
        %p1049 = scmp.lt.s32.totalorder %s55, 1
        %s1050 = scalar_select %p1049, %s55, 1
        %s1051 = scalar_lea.vmem %s17, %s1050
        %p1052 = scmp.lt.s32.totalorder %s55, 1
        %s1053 = scalar_select %p1052, %s55, 1
        %s1054 = smul.addr %s1053, 32
        %s1055 = smul.addr %s1054, 4
        %s1056 = scalar_lea.vmem %s18, %s1055
        %p1057 = scmp.lt.s32.totalorder %s55, 1
        %s1058 = scalar_select %p1057, %s55, 1
        %s1059 = smul.addr %s1058, 2
        %s1060 = scalar_lea.vmem %s19, %s1059
        %p1061 = scmp.lt.s32.totalorder %s55, 1
        %s1062 = scalar_select %p1061, %s55, 1
        %s1063 = scalar_lea.vmem %s21, %s1062
        %p1064 = scmp.lt.s32.totalorder %s54, 1
        %s1065 = scalar_select %p1064, %s54, 1
        %s1066 = smul.addr %s1065, 2
        %s1067 = smul.addr %s1066, 8
        %s1068 = scalar_lea.vmem %s22, %s1067
        %s1070 = sld [smem:[#allocation4 + %s54]]
        %s1071 = sld [smem:[#allocation5 + %s54]]
        %p1072 = scmp.eq.s32.totalorder %s55, 0
        // Predicated region
        $region121: #{transformer_decoder_forward.2} parent=99 // pred_check
          %p1073 = pneg %p1072
        $region122: #{transformer_decoder_forward.2} parent=99 // pred_check_branch
          %1075 = sbr.rel (%p1073) target = $region124
        $region123: #{transformer_decoder_forward.2} parent=99 // pred_region
          %v1076 = vld [vmem:[%s1010] sm:$0xff]
          %v1077 = vld [vmem:[%s1010 + $0x8] sm:$0xff]
          %1078 = vst [vmem:[#allocation2] sm:$0xff] %v1076
          %1079 = vst [vmem:[#allocation2 + $0x8] sm:$0xff] %v1077
        $region124: #{transformer_decoder_forward.2} parent=99 // pred_fallthru
          _
        %v1080 = vld [vmem:[#allocation2] sm:$0xff]
        %v1081 = vld [vmem:[#allocation2 + $0x8] sm:$0xff]
        %v1082 = vlaneseq
        %v1083 = vshrl.u32 %v1082, 7
        %v1084 = vadd.s32 %v1083, 8
        %v1085 = vlaneseq
        %v1086 = vand.u32 %v1085, 127
        %v1087 = vstv %s1070
        %vm1088 = vcmp.lt.s32.totalorder %v1086, %v1087
        %vm1089 = vcmp.le.s32.totalorder %v1086, %v1083
        %vm1090 = vcmp.le.s32.totalorder %v1086, %v1084
        %vm1091 = vmand %vm1088, %vm1089
        %vm1092 = vmand %vm1088, %vm1090
        %v1093 = vsel %vm1091, 0.0, -1e+30
        %v1094 = vsel %vm1092, 0.0, -1e+30
        %v1095 = vstv %s1071
        %vm1096 = vcmp.lt.s32.totalorder %v1086, %v1095
        %v1097 = vsel %vm1096, 0.0, -1e+30
        %v1098 = vld [vmem:[%s1018] sm:$0x1]
        %v1099 = vld [vmem:[%s1021] sm:$0x1]
        %1100 = vadd.xlane.f32.xlu0 %v1080
        %v1101 = vpop.xlane.xlu0 %1100
        %1102 = vadd.xlane.f32.xlu0 %v1081
        %v1103 = vpop.xlane.xlu0 %1102
        %v1104 = vrcp.pop 128.0
        %v1105 = vmul.f32 %v1101, %v1104
        %v1106 = vmul.f32 %v1103, %v1104
        %v1107 = vsub.f32 %v1080, %v1105
        %v1108 = vsub.f32 %v1081, %v1106
        %v1109 = vmul.f32 %v1107, %v1107
        %v1110 = vmul.f32 %v1108, %v1108
        %1111 = vadd.xlane.f32.xlu0 %v1109
        %v1112 = vpop.xlane.xlu0 %1111
        %1113 = vadd.xlane.f32.xlu0 %v1110
        %v1114 = vpop.xlane.xlu0 %1113
        %v1115 = vmul.f32 %v1112, %v1104
        %v1116 = vmul.f32 %v1114, %v1104
        %v1117 = vadd.f32 %v1115, 1e-05
        %v1118 = vadd.f32 %v1116, 1e-05
        %v1119 = vrsqrt.pop %v1117
        %v1120 = vrsqrt.pop %v1118
        %v1121 = vmul.f32 %v1107, %v1119
        %v1122 = vmul.f32 %v1108, %v1120
        %v1124 = vlaneseq
        %v1125 = vshrl.u32 %v1124, 7
        %v1126 = vsub.s32 0, %v1125
        %v1127 = vrot.slane %v1098, %v1126
        %v1129 = vmul.f32 %v1121, %v1127
        %v1130 = vmul.f32 %v1122, %v1127
        %v1132 = vlaneseq
        %v1133 = vshrl.u32 %v1132, 7
        %v1134 = vsub.s32 0, %v1133
        %v1135 = vrot.slane %v1099, %v1134
        %v1137 = vadd.f32 %v1129, %v1135
        %v1138 = vadd.f32 %v1130, %v1135
        %v1139 = vpack.c.bf16 %v1138, %v1137
        %v1140 = vld [vmem:[%s1032] sm:$0xff]
        %v1141 = vld [vmem:[%s1032 + $0x8] sm:$0xf]
        %v1142 = vld [vmem:[%s1032 + $0xc] sm:$0xff]
        %v1143 = vld [vmem:[%s1032 + $0x14] sm:$0xf]
        %v1144 = vld [vmem:[%s1032 + $0x18] sm:$0xff]
        %v1145 = vld [vmem:[%s1032 + $0x20] sm:$0xf]
        %v1146 = vld [vmem:[%s1032 + $0x24] sm:$0xff]
        %v1147 = vld [vmem:[%s1032 + $0x2c] sm:$0xf]
        %v1148 = vld [vmem:[%s1032 + $0x30] sm:$0xff]
        %v1149 = vld [vmem:[%s1032 + $0x38] sm:$0xf]
        %v1150 = vld [vmem:[%s1032 + $0x3c] sm:$0xff]
        %v1151 = vld [vmem:[%s1032 + $0x44] sm:$0xf]
        %v1152 = vld [vmem:[%s1032 + $0x48] sm:$0xff]
        %v1153 = vld [vmem:[%s1032 + $0x50] sm:$0xf]
        %v1154 = vld [vmem:[%s1032 + $0x54] sm:$0xff]
        %v1155 = vld [vmem:[%s1032 + $0x5c] sm:$0xf]
        %v1156 = vld [vmem:[%s1032 + $0x60] sm:$0xff]
        %v1157 = vld [vmem:[%s1032 + $0x68] sm:$0xf]
        %v1158 = vld [vmem:[%s1032 + $0x6c] sm:$0xff]
        %v1159 = vld [vmem:[%s1032 + $0x74] sm:$0xf]
        %v1160 = vld [vmem:[%s1032 + $0x78] sm:$0xff]
        %v1161 = vld [vmem:[%s1032 + $0x80] sm:$0xf]
        %v1162 = vld [vmem:[%s1032 + $0x84] sm:$0xff]
        %v1163 = vld [vmem:[%s1032 + $0x8c] sm:$0xf]
        %v1164 = vld [vmem:[%s1032 + $0x90] sm:$0xff]
        %v1165 = vld [vmem:[%s1032 + $0x98] sm:$0xf]
        %v1166 = vld [vmem:[%s1032 + $0x9c] sm:$0xff]
        %v1167 = vld [vmem:[%s1032 + $0xa4] sm:$0xf]
        %v1168 = vld [vmem:[%s1032 + $0xa8] sm:$0xff]
        %v1169 = vld [vmem:[%s1032 + $0xb0] sm:$0xf]
        %v1170 = vld [vmem:[%s1032 + $0xb4] sm:$0xff]
        %v1171 = vld [vmem:[%s1032 + $0xbc] sm:$0xf]
        %v1172 = vld [vmem:[%s1036] sm:$0x7]
        %v1174 = vlaneseq
        %v1175 = vshrl.u32 %v1174, 7
        %v1176 = vsub.s32 0, %v1175
        %v1177 = vrot.slane %v1172, %v1176
        %v1178 = vlaneseq
        %v1179 = vshrl.u32 %v1178, 7
        %v1180 = vsub.s32 1, %v1179
        %v1181 = vrot.slane %v1172, %v1180
        %v1182 = vlaneseq
        %v1183 = vshrl.u32 %v1182, 7
        %v1184 = vsub.s32 2, %v1183
        %v1185 = vrot.slane %v1172, %v1184
        %v1221 = vunpack.c.l.b16 %v1140
        %v1222 = vunpack.c.h.b16 %v1140
        %v1223 = vunpack.c.l.b16 %v1141
        %v1224 = vunpack.c.l.b16 %v1142
        %v1225 = vunpack.c.h.b16 %v1142
        %v1226 = vunpack.c.l.b16 %v1143
        %v1227 = vunpack.c.l.b16 %v1144
        %v1228 = vunpack.c.h.b16 %v1144
        %v1229 = vunpack.c.l.b16 %v1145
        %v1230 = vunpack.c.l.b16 %v1146
        %v1231 = vunpack.c.h.b16 %v1146
        %v1232 = vunpack.c.l.b16 %v1147
        %v1233 = vunpack.c.l.b16 %v1148
        %v1234 = vunpack.c.h.b16 %v1148
        %v1235 = vunpack.c.l.b16 %v1149
        %v1236 = vunpack.c.l.b16 %v1150
        %v1237 = vunpack.c.h.b16 %v1150
        %v1238 = vunpack.c.l.b16 %v1151
        %v1239 = vunpack.c.l.b16 %v1152
        %v1240 = vunpack.c.h.b16 %v1152
        %v1241 = vunpack.c.l.b16 %v1153
        %v1242 = vunpack.c.l.b16 %v1154
        %v1243 = vunpack.c.h.b16 %v1154
        %v1244 = vunpack.c.l.b16 %v1155
        %v1245 = vunpack.c.l.b16 %v1156
        %v1246 = vunpack.c.h.b16 %v1156
        %v1247 = vunpack.c.l.b16 %v1157
        %v1248 = vunpack.c.l.b16 %v1158
        %v1249 = vunpack.c.h.b16 %v1158
        %v1250 = vunpack.c.l.b16 %v1159
        %v1251 = vunpack.c.l.b16 %v1160
        %v1252 = vunpack.c.h.b16 %v1160
        %v1253 = vunpack.c.l.b16 %v1161
        %v1254 = vunpack.c.l.b16 %v1162
        %v1255 = vunpack.c.h.b16 %v1162
        %v1256 = vunpack.c.l.b16 %v1163
        %v1257 = vunpack.c.l.b16 %v1164
        %v1258 = vunpack.c.h.b16 %v1164
        %v1259 = vunpack.c.l.b16 %v1165
        %v1260 = vunpack.c.l.b16 %v1166
        %v1261 = vunpack.c.h.b16 %v1166
        %v1262 = vunpack.c.l.b16 %v1167
        %v1263 = vunpack.c.l.b16 %v1168
        %v1264 = vunpack.c.h.b16 %v1168
        %v1265 = vunpack.c.l.b16 %v1169
        %v1266 = vunpack.c.l.b16 %v1170
        %v1267 = vunpack.c.h.b16 %v1170
        %v1268 = vunpack.c.l.b16 %v1171
        %v1269 = vpack.c.b16 %v1224, %v1221
        %v1270 = vpack.c.b16 %v1225, %v1222
        %v1271 = vpack.c.b16 %v1226, %v1223
        %v1272 = vpack.c.b16 %v1230, %v1227
        %v1273 = vpack.c.b16 %v1231, %v1228
        %v1274 = vpack.c.b16 %v1232, %v1229
        %v1275 = vpack.c.b16 %v1236, %v1233
        %v1276 = vpack.c.b16 %v1237, %v1234
        %v1277 = vpack.c.b16 %v1238, %v1235
        %v1278 = vpack.c.b16 %v1242, %v1239
        %v1279 = vpack.c.b16 %v1243, %v1240
        %v1280 = vpack.c.b16 %v1244, %v1241
        %v1281 = vpack.c.b16 %v1248, %v1245
        %v1282 = vpack.c.b16 %v1249, %v1246
        %v1283 = vpack.c.b16 %v1250, %v1247
        %v1284 = vpack.c.b16 %v1254, %v1251
        %v1285 = vpack.c.b16 %v1255, %v1252
        %v1286 = vpack.c.b16 %v1256, %v1253
        %v1287 = vpack.c.b16 %v1260, %v1257
        %v1288 = vpack.c.b16 %v1261, %v1258
        %v1289 = vpack.c.b16 %v1262, %v1259
        %v1290 = vpack.c.b16 %v1266, %v1263
        %v1291 = vpack.c.b16 %v1267, %v1264
        %v1292 = vpack.c.b16 %v1268, %v1265
        %1317 = vmatprep.subr.bf16.mxu0 %v1270
        %1318 = vmatpush1.bf16.msra.mxu0 %v1269
        %1319 = vmatprep.subr.bf16.mxu0 %v1273
        %1320 = vmatpush1.bf16.msra.mxu0 %v1272
        %1321 = vmatprep.subr.bf16.mxu0 %v1276
        %1322 = vmatpush1.bf16.msra.mxu0 %v1275
        %1323 = vmatprep.subr.bf16.mxu0 %v1279
        %1324 = vmatpush1.bf16.msra.mxu0 %v1278
        %1325 = vmatprep.subr.bf16.mxu0 %v1282
        %1326 = vmatpush1.bf16.msra.mxu0 %v1281
        %1327 = vmatprep.subr.bf16.mxu0 %v1285
        %1328 = vmatpush1.bf16.msra.mxu0 %v1284
        %1329 = vmatprep.subr.bf16.mxu0 %v1288
        %1330 = vmatpush1.bf16.msra.mxu0 %v1287
        %1331 = vmatprep.subr.bf16.mxu0 %v1291
        %1332 = vmatpush1.bf16.msra.mxu0 %v1290
        %1333 = vmatprep.subr.bf16.mxu0 0
        %1334 = vmatpush1.bf16.msra.mxu0 0
        %1335 = vmatprep.subr.bf16.mxu0 0
        %1336 = vmatpush1.bf16.msra.mxu0 0
        %1337 = vmatprep.subr.bf16.mxu0 0
        %1338 = vmatpush1.bf16.msra.mxu0 0
        %1339 = vmatprep.subr.bf16.mxu0 0
        %1340 = vmatpush1.bf16.msra.mxu0 0
        %1341 = vmatprep.subr.bf16.mxu0 0
        %1342 = vmatpush1.bf16.msra.mxu0 0
        %1343 = vmatprep.subr.bf16.mxu0 0
        %1344 = vmatpush1.bf16.msra.mxu0 0
        %1345 = vmatprep.subr.bf16.mxu0 0
        %1346 = vmatpush1.bf16.msra.mxu0 0
        %1347 = vmatprep.subr.bf16.mxu0 0
        %1348 = vmatpush1.bf16.msra.mxu0 0
        %1349 = vmatprep.mubr.bf16.mxu0 0
        %1350 = vmatmul.mubr.bf16.gmra.mrb[0].mxu0 %v1139
        %v1351 = vpop.f32.mrb[0].mxu0
        %v1352 = vadd.f32 %v1177, %v1351
        %v1353 = vpop.f32.mrb[0].mxu0
        %v1354 = vadd.f32 %v1181, %v1353
        %v1355 = vpop.f32.mrb[0].mxu0
        %v1356 = vadd.f32 %v1177, %v1355
        %v1357 = vpop.f32.mrb[0].mxu0
        %v1358 = vadd.f32 %v1181, %v1357
        %1359 = vdwg.mxu0
        %1360 = vmatprep.subr.bf16.mxu0 0
        %1361 = vmatpush1.bf16.msra.mxu0 %v1271
        %1362 = vmatprep.subr.bf16.mxu0 0
        %1363 = vmatpush1.bf16.msra.mxu0 %v1274
        %1364 = vmatprep.subr.bf16.mxu0 0
        %1365 = vmatpush1.bf16.msra.mxu0 %v1277
        %1366 = vmatprep.subr.bf16.mxu0 0
        %1367 = vmatpush1.bf16.msra.mxu0 %v1280
        %1368 = vmatprep.subr.bf16.mxu0 0
        %1369 = vmatpush1.bf16.msra.mxu0 %v1283
        %1370 = vmatprep.subr.bf16.mxu0 0
        %1371 = vmatpush1.bf16.msra.mxu0 %v1286
        %1372 = vmatprep.subr.bf16.mxu0 0
        %1373 = vmatpush1.bf16.msra.mxu0 %v1289
        %1374 = vmatprep.subr.bf16.mxu0 0
        %1375 = vmatpush1.bf16.msra.mxu0 %v1292
        %1376 = vmatprep.subr.bf16.mxu0 0
        %1377 = vmatpush1.bf16.msra.mxu0 0
        %1378 = vmatprep.subr.bf16.mxu0 0
        %1379 = vmatpush1.bf16.msra.mxu0 0
        %1380 = vmatprep.subr.bf16.mxu0 0
        %1381 = vmatpush1.bf16.msra.mxu0 0
        %1382 = vmatprep.subr.bf16.mxu0 0
        %1383 = vmatpush1.bf16.msra.mxu0 0
        %1384 = vmatprep.subr.bf16.mxu0 0
        %1385 = vmatpush1.bf16.msra.mxu0 0
        %1386 = vmatprep.subr.bf16.mxu0 0
        %1387 = vmatpush1.bf16.msra.mxu0 0
        %1388 = vmatprep.subr.bf16.mxu0 0
        %1389 = vmatpush1.bf16.msra.mxu0 0
        %1390 = vmatprep.subr.bf16.mxu0 0
        %1391 = vmatpush1.bf16.msra.mxu0 0
        %1392 = vmatprep.mubr.bf16.mxu0 0
        %1393 = vmatmul.mubr.bf16.gmra.mrb[0].mxu0 %v1139
        %v1394 = vpop.f32.mrb[0].mxu0
        %v1395 = vadd.f32 %v1185, %v1394
        %v1396 = vpop.f32.mrb[0].mxu0
        %v1397 = vpop.f32.mrb[0].mxu0
        %v1398 = vadd.f32 %v1185, %v1397
        %v1399 = vpop.f32.mrb[0].mxu0
        %1400 = vdwg.mxu0
        %v1401 = vld [vmem:[%s837] sm:$0xf]
        %v1402 = vld [vmem:[%s837 + $0x4] sm:$0xf]
        %v1403 = vld [vmem:[%s837 + $0x8] sm:$0xf]
        %v1404 = vld [vmem:[%s837 + $0xc] sm:$0xf]
        %v1405 = vld [vmem:[%s837 + $0x10] sm:$0xf]
        %v1406 = vld [vmem:[%s837 + $0x14] sm:$0xf]
        %v1407 = vld [vmem:[%s837 + $0x18] sm:$0xf]
        %v1408 = vld [vmem:[%s837 + $0x1c] sm:$0xf]
        %v1409 = vld [vmem:[%s837 + $0x20] sm:$0xf]
        %v1410 = vld [vmem:[%s837 + $0x24] sm:$0xf]
        %v1411 = vld [vmem:[%s837 + $0x28] sm:$0xf]
        %v1412 = vld [vmem:[%s837 + $0x2c] sm:$0xf]
        %v1413 = vld [vmem:[%s837 + $0x30] sm:$0xf]
        %v1414 = vld [vmem:[%s837 + $0x34] sm:$0xf]
        %v1415 = vld [vmem:[%s837 + $0x38] sm:$0xf]
        %v1416 = vld [vmem:[%s837 + $0x3c] sm:$0xf]
        %v1417 = vld [vmem:[%s845] sm:$0x1]
        %v1418 = vpack.c.bf16 %v1356, %v1352
        %v1419 = vpack.c.bf16 %v1358, %v1354
        %v1420 = vpack.c.bf16 %v1398, %v1395
        %vm1421 = vcmp.lt.f32.partialorder %v1093, -1e+20
        %vm1422 = vcmp.lt.f32.partialorder %v1094, -1e+20
        %vm1423 = vcmask 261120
        %v1425 = vsel %vm1423, %v1418, 0
        %v1428 = vsel %vm1423, %v1419, 0
        %1430 = vmatprep.subr.bf16.mxu0 0
        %1431 = vmatpush1.bf16.xpose.msra.mxu0 %v1428
        %1432 = vmatprep.subr.bf16.mxu0 0
        %1433 = vmatpush1.bf16.xpose.msra.mxu0 0
        %1434 = vmatprep.subr.bf16.mxu0 0
        %1435 = vmatpush1.bf16.xpose.msra.mxu0 0
        %1436 = vmatprep.subr.bf16.mxu0 0
        %1437 = vmatpush1.bf16.xpose.msra.mxu0 0
        %1438 = vmatprep.subr.bf16.mxu0 0
        %1439 = vmatpush1.bf16.xpose.msra.mxu0 0
        %1440 = vmatprep.subr.bf16.mxu0 0
        %1441 = vmatpush1.bf16.xpose.msra.mxu0 0
        %1442 = vmatprep.subr.bf16.mxu0 0
        %1443 = vmatpush1.bf16.xpose.msra.mxu0 0
        %1444 = vmatprep.subr.bf16.mxu0 0
        %1445 = vmatpush1.bf16.xpose.msra.mxu0 0
        %1446 = vmatprep.subr.bf16.mxu0 0
        %1447 = vmatpush1.bf16.xpose.msra.mxu0 0
        %1448 = vmatprep.subr.bf16.mxu0 0
        %1449 = vmatpush1.bf16.xpose.msra.mxu0 0
        %1450 = vmatprep.subr.bf16.mxu0 0
        %1451 = vmatpush1.bf16.xpose.msra.mxu0 0
        %1452 = vmatprep.subr.bf16.mxu0 0
        %1453 = vmatpush1.bf16.xpose.msra.mxu0 0
        %1454 = vmatprep.subr.bf16.mxu0 0
        %1455 = vmatpush1.bf16.xpose.msra.mxu0 0
        %1456 = vmatprep.subr.bf16.mxu0 0
        %1457 = vmatpush1.bf16.xpose.msra.mxu0 0
        %1458 = vmatprep.subr.bf16.mxu0 0
        %1459 = vmatpush1.bf16.xpose.msra.mxu0 0
        %1460 = vmatprep.subr.bf16.mxu0 0
        %1461 = vmatpush1.bf16.xpose.msra.mxu0 0
        %1462 = vmatprep.mubr.bf16.mxu0 0
        %1463 = vmatmul.mubr.bf16.gmra.mrb[0].mxu0 %v1425
        %v1464 = vpop.f32.mrb[0].mxu0
        %v1465 = vadd.f32 0.0, %v1464
        %v1466 = vpop.f32.mrb[0].mxu0
        %v1467 = vpop.f32.mrb[0].mxu0
        %v1468 = vadd.f32 0.0, %v1467
        %v1469 = vpop.f32.mrb[0].mxu0
        %1470 = vdwg.mxu0
        %v1471 = vmul.f32 %v1465, 0.17677669
        %v1472 = vmul.f32 %v1468, 0.17677669
        %v1473 = vadd.f32 %v1471, %v1093
        %v1474 = vadd.f32 %v1472, %v1094
        %vm1475 = vcmask 130048
        %v1476 = vsel %vm1475, %v1473, -inf
        %1477 = vmax.xlane.f32.xlu0 %v1476
        %v1478 = vpop.xlane.xlu0 %1477
        %v1479 = vsel %vm1475, %v1474, -inf
        %1480 = vmax.xlane.f32.xlu0 %v1479
        %v1481 = vpop.xlane.xlu0 %1480
        %v1482 = vsub.f32 %v1473, %v1478
        %v1483 = vsub.f32 %v1474, %v1481
        %v1484 = vmul.f32 %v1482, 1.442695
        %v1485 = vpow.pop %v1484
        %v1486 = vmul.f32 %v1483, 1.442695
        %v1487 = vpow.pop %v1486
        %v1488 = vsel %vm1475, %v1485, 0.0
        %1489 = vadd.xlane.f32.xlu0 %v1488
        %v1490 = vpop.xlane.xlu0 %1489
        %v1491 = vsel %vm1475, %v1487, 0.0
        %1492 = vadd.xlane.f32.xlu0 %v1491
        %v1493 = vpop.xlane.xlu0 %1492
        %v1494 = vrcp.pop %v1490
        %v1495 = vrcp.pop %v1493
        %v1496 = vmul.f32 %v1485, %v1494
        %v1497 = vmul.f32 %v1487, %v1495
        %v1498 = vsel %vm1421, 0.0, %v1496
        %v1499 = vsel %vm1422, 0.0, %v1497
        %v1500 = vpack.c.bf16 %v1499, %v1498
        %v1502 = vsel %vm1475, %v1500, 0
        %1504 = vmatprep.subr.bf16.mxu0 0
        %1505 = vmatpush1.bf16.msra.mxu0 %v1420
        %1506 = vmatprep.subr.bf16.mxu0 0
        %1507 = vmatpush1.bf16.msra.mxu0 0
        %1508 = vmatprep.subr.bf16.mxu0 0
        %1509 = vmatpush1.bf16.msra.mxu0 0
        %1510 = vmatprep.subr.bf16.mxu0 0
        %1511 = vmatpush1.bf16.msra.mxu0 0
        %1512 = vmatprep.subr.bf16.mxu0 0
        %1513 = vmatpush1.bf16.msra.mxu0 0
        %1514 = vmatprep.subr.bf16.mxu0 0
        %1515 = vmatpush1.bf16.msra.mxu0 0
        %1516 = vmatprep.subr.bf16.mxu0 0
        %1517 = vmatpush1.bf16.msra.mxu0 0
        %1518 = vmatprep.subr.bf16.mxu0 0
        %1519 = vmatpush1.bf16.msra.mxu0 0
        %1520 = vmatprep.subr.bf16.mxu0 0
        %1521 = vmatpush1.bf16.msra.mxu0 0
        %1522 = vmatprep.subr.bf16.mxu0 0
        %1523 = vmatpush1.bf16.msra.mxu0 0
        %1524 = vmatprep.subr.bf16.mxu0 0
        %1525 = vmatpush1.bf16.msra.mxu0 0
        %1526 = vmatprep.subr.bf16.mxu0 0
        %1527 = vmatpush1.bf16.msra.mxu0 0
        %1528 = vmatprep.subr.bf16.mxu0 0
        %1529 = vmatpush1.bf16.msra.mxu0 0
        %1530 = vmatprep.subr.bf16.mxu0 0
        %1531 = vmatpush1.bf16.msra.mxu0 0
        %1532 = vmatprep.subr.bf16.mxu0 0
        %1533 = vmatpush1.bf16.msra.mxu0 0
        %1534 = vmatprep.subr.bf16.mxu0 0
        %1535 = vmatpush1.bf16.msra.mxu0 0
        %1536 = vmatprep.mubr.bf16.mxu0 0
        %1537 = vmatmul.mubr.bf16.gmra.mrb[0].mxu0 %v1502
        %v1538 = vpop.f32.mrb[0].mxu0
        %v1539 = vadd.f32 0.0, %v1538
        %v1540 = vpop.f32.mrb[0].mxu0
        %v1541 = vpop.f32.mrb[0].mxu0
        %v1542 = vadd.f32 0.0, %v1541
        %v1543 = vpop.f32.mrb[0].mxu0
        %1544 = vdwg.mxu0
        %1546 = vrot.lane.b32.xlu0 %v1418, 96
        %v1547 = vpop.permute.xlu0 %1546
        %1549 = vrot.lane.b32.xlu0 %v1419, 96
        %v1550 = vpop.permute.xlu0 %1549
        %v1552 = vsel %vm1423, %v1547, 0
        %v1555 = vsel %vm1423, %v1550, 0
        %1557 = vmatprep.subr.bf16.mxu0 0
        %1558 = vmatpush1.bf16.xpose.msra.mxu0 %v1555
        %1559 = vmatprep.subr.bf16.mxu0 0
        %1560 = vmatpush1.bf16.xpose.msra.mxu0 0
        %1561 = vmatprep.subr.bf16.mxu0 0
        %1562 = vmatpush1.bf16.xpose.msra.mxu0 0
        %1563 = vmatprep.subr.bf16.mxu0 0
        %1564 = vmatpush1.bf16.xpose.msra.mxu0 0
        %1565 = vmatprep.subr.bf16.mxu0 0
        %1566 = vmatpush1.bf16.xpose.msra.mxu0 0
        %1567 = vmatprep.subr.bf16.mxu0 0
        %1568 = vmatpush1.bf16.xpose.msra.mxu0 0
        %1569 = vmatprep.subr.bf16.mxu0 0
        %1570 = vmatpush1.bf16.xpose.msra.mxu0 0
        %1571 = vmatprep.subr.bf16.mxu0 0
        %1572 = vmatpush1.bf16.xpose.msra.mxu0 0
        %1573 = vmatprep.subr.bf16.mxu0 0
        %1574 = vmatpush1.bf16.xpose.msra.mxu0 0
        %1575 = vmatprep.subr.bf16.mxu0 0
        %1576 = vmatpush1.bf16.xpose.msra.mxu0 0
        %1577 = vmatprep.subr.bf16.mxu0 0
        %1578 = vmatpush1.bf16.xpose.msra.mxu0 0
        %1579 = vmatprep.subr.bf16.mxu0 0
        %1580 = vmatpush1.bf16.xpose.msra.mxu0 0
        %1581 = vmatprep.subr.bf16.mxu0 0
        %1582 = vmatpush1.bf16.xpose.msra.mxu0 0
        %1583 = vmatprep.subr.bf16.mxu0 0
        %1584 = vmatpush1.bf16.xpose.msra.mxu0 0
        %1585 = vmatprep.subr.bf16.mxu0 0
        %1586 = vmatpush1.bf16.xpose.msra.mxu0 0
        %1587 = vmatprep.subr.bf16.mxu0 0
        %1588 = vmatpush1.bf16.xpose.msra.mxu0 0
        %1589 = vmatprep.mubr.bf16.mxu0 0
        %1590 = vmatmul.mubr.bf16.gmra.mrb[0].mxu0 %v1552
        %v1591 = vpop.f32.mrb[0].mxu0
        %v1592 = vadd.f32 0.0, %v1591
        %v1593 = vpop.f32.mrb[0].mxu0
        %v1594 = vpop.f32.mrb[0].mxu0
        %v1595 = vadd.f32 0.0, %v1594
        %v1596 = vpop.f32.mrb[0].mxu0
        %1597 = vdwg.mxu0
        %v1598 = vmul.f32 %v1592, 0.17677669
        %v1599 = vmul.f32 %v1595, 0.17677669
        %v1600 = vadd.f32 %v1598, %v1093
        %v1601 = vadd.f32 %v1599, %v1094
        %v1602 = vsel %vm1475, %v1600, -inf
        %1603 = vmax.xlane.f32.xlu0 %v1602
        %v1604 = vpop.xlane.xlu0 %1603
        %v1605 = vsel %vm1475, %v1601, -inf
        %1606 = vmax.xlane.f32.xlu0 %v1605
        %v1607 = vpop.xlane.xlu0 %1606
        %v1608 = vsub.f32 %v1600, %v1604
        %v1609 = vsub.f32 %v1601, %v1607
        %v1610 = vmul.f32 %v1608, 1.442695
        %v1611 = vpow.pop %v1610
        %v1612 = vmul.f32 %v1609, 1.442695
        %v1613 = vpow.pop %v1612
        %v1614 = vsel %vm1475, %v1611, 0.0
        %1615 = vadd.xlane.f32.xlu0 %v1614
        %v1616 = vpop.xlane.xlu0 %1615
        %v1617 = vsel %vm1475, %v1613, 0.0
        %1618 = vadd.xlane.f32.xlu0 %v1617
        %v1619 = vpop.xlane.xlu0 %1618
        %v1620 = vrcp.pop %v1616
        %v1621 = vrcp.pop %v1619
        %v1622 = vmul.f32 %v1611, %v1620
        %v1623 = vmul.f32 %v1613, %v1621
        %v1624 = vsel %vm1421, 0.0, %v1622
        %v1625 = vsel %vm1422, 0.0, %v1623
        %v1626 = vpack.c.bf16 %v1625, %v1624
        %1628 = vrot.lane.b32.xlu0 %v1420, 96
        %v1629 = vpop.permute.xlu0 %1628
        %v1632 = vsel %vm1475, %v1626, 0
        %1634 = vmatprep.subr.bf16.mxu0 0
        %1635 = vmatpush1.bf16.msra.mxu0 %v1629
        %1636 = vmatprep.subr.bf16.mxu0 0
        %1637 = vmatpush1.bf16.msra.mxu0 0
        %1638 = vmatprep.subr.bf16.mxu0 0
        %1639 = vmatpush1.bf16.msra.mxu0 0
        %1640 = vmatprep.subr.bf16.mxu0 0
        %1641 = vmatpush1.bf16.msra.mxu0 0
        %1642 = vmatprep.subr.bf16.mxu0 0
        %1643 = vmatpush1.bf16.msra.mxu0 0
        %1644 = vmatprep.subr.bf16.mxu0 0
        %1645 = vmatpush1.bf16.msra.mxu0 0
        %1646 = vmatprep.subr.bf16.mxu0 0
        %1647 = vmatpush1.bf16.msra.mxu0 0
        %1648 = vmatprep.subr.bf16.mxu0 0
        %1649 = vmatpush1.bf16.msra.mxu0 0
        %1650 = vmatprep.subr.bf16.mxu0 0
        %1651 = vmatpush1.bf16.msra.mxu0 0
        %1652 = vmatprep.subr.bf16.mxu0 0
        %1653 = vmatpush1.bf16.msra.mxu0 0
        %1654 = vmatprep.subr.bf16.mxu0 0
        %1655 = vmatpush1.bf16.msra.mxu0 0
        %1656 = vmatprep.subr.bf16.mxu0 0
        %1657 = vmatpush1.bf16.msra.mxu0 0
        %1658 = vmatprep.subr.bf16.mxu0 0
        %1659 = vmatpush1.bf16.msra.mxu0 0
        %1660 = vmatprep.subr.bf16.mxu0 0
        %1661 = vmatpush1.bf16.msra.mxu0 0
        %1662 = vmatprep.subr.bf16.mxu0 0
        %1663 = vmatpush1.bf16.msra.mxu0 0
        %1664 = vmatprep.subr.bf16.mxu0 0
        %1665 = vmatpush1.bf16.msra.mxu0 0
        %1666 = vmatprep.mubr.bf16.mxu0 0
        %1667 = vmatmul.mubr.bf16.gmra.mrb[0].mxu0 %v1632
        %v1668 = vpop.f32.mrb[0].mxu0
        %v1669 = vadd.f32 0.0, %v1668
        %v1670 = vpop.f32.mrb[0].mxu0
        %v1671 = vpop.f32.mrb[0].mxu0
        %v1672 = vadd.f32 0.0, %v1671
        %v1673 = vpop.f32.mrb[0].mxu0
        %1674 = vdwg.mxu0
        %1675 = vrot.lane.b32.xlu0 %v1418, 64
        %v1676 = vpop.permute.xlu0 %1675
        %1677 = vrot.lane.b32.xlu0 %v1419, 64
        %v1678 = vpop.permute.xlu0 %1677
        %v1680 = vsel %vm1423, %v1676, 0
        %v1683 = vsel %vm1423, %v1678, 0
        %1685 = vmatprep.subr.bf16.mxu0 0
        %1686 = vmatpush1.bf16.xpose.msra.mxu0 %v1683
        %1687 = vmatprep.subr.bf16.mxu0 0
        %1688 = vmatpush1.bf16.xpose.msra.mxu0 0
        %1689 = vmatprep.subr.bf16.mxu0 0
        %1690 = vmatpush1.bf16.xpose.msra.mxu0 0
        %1691 = vmatprep.subr.bf16.mxu0 0
        %1692 = vmatpush1.bf16.xpose.msra.mxu0 0
        %1693 = vmatprep.subr.bf16.mxu0 0
        %1694 = vmatpush1.bf16.xpose.msra.mxu0 0
        %1695 = vmatprep.subr.bf16.mxu0 0
        %1696 = vmatpush1.bf16.xpose.msra.mxu0 0
        %1697 = vmatprep.subr.bf16.mxu0 0
        %1698 = vmatpush1.bf16.xpose.msra.mxu0 0
        %1699 = vmatprep.subr.bf16.mxu0 0
        %1700 = vmatpush1.bf16.xpose.msra.mxu0 0
        %1701 = vmatprep.subr.bf16.mxu0 0
        %1702 = vmatpush1.bf16.xpose.msra.mxu0 0
        %1703 = vmatprep.subr.bf16.mxu0 0
        %1704 = vmatpush1.bf16.xpose.msra.mxu0 0
        %1705 = vmatprep.subr.bf16.mxu0 0
        %1706 = vmatpush1.bf16.xpose.msra.mxu0 0
        %1707 = vmatprep.subr.bf16.mxu0 0
        %1708 = vmatpush1.bf16.xpose.msra.mxu0 0
        %1709 = vmatprep.subr.bf16.mxu0 0
        %1710 = vmatpush1.bf16.xpose.msra.mxu0 0
        %1711 = vmatprep.subr.bf16.mxu0 0
        %1712 = vmatpush1.bf16.xpose.msra.mxu0 0
        %1713 = vmatprep.subr.bf16.mxu0 0
        %1714 = vmatpush1.bf16.xpose.msra.mxu0 0
        %1715 = vmatprep.subr.bf16.mxu0 0
        %1716 = vmatpush1.bf16.xpose.msra.mxu0 0
        %1717 = vmatprep.mubr.bf16.mxu0 0
        %1718 = vmatmul.mubr.bf16.gmra.mrb[0].mxu0 %v1680
        %v1719 = vpop.f32.mrb[0].mxu0
        %v1720 = vadd.f32 0.0, %v1719
        %v1721 = vpop.f32.mrb[0].mxu0
        %v1722 = vpop.f32.mrb[0].mxu0
        %v1723 = vadd.f32 0.0, %v1722
        %v1724 = vpop.f32.mrb[0].mxu0
        %1725 = vdwg.mxu0
        %v1726 = vmul.f32 %v1720, 0.17677669
        %v1727 = vmul.f32 %v1723, 0.17677669
        %v1728 = vadd.f32 %v1726, %v1093
        %v1729 = vadd.f32 %v1727, %v1094
        %v1730 = vsel %vm1475, %v1728, -inf
        %1731 = vmax.xlane.f32.xlu0 %v1730
        %v1732 = vpop.xlane.xlu0 %1731
        %v1733 = vsel %vm1475, %v1729, -inf
        %1734 = vmax.xlane.f32.xlu0 %v1733
        %v1735 = vpop.xlane.xlu0 %1734
        %v1736 = vsub.f32 %v1728, %v1732
        %v1737 = vsub.f32 %v1729, %v1735
        %v1738 = vmul.f32 %v1736, 1.442695
        %v1739 = vpow.pop %v1738
        %v1740 = vmul.f32 %v1737, 1.442695
        %v1741 = vpow.pop %v1740
        %v1742 = vsel %vm1475, %v1739, 0.0
        %1743 = vadd.xlane.f32.xlu0 %v1742
        %v1744 = vpop.xlane.xlu0 %1743
        %v1745 = vsel %vm1475, %v1741, 0.0
        %1746 = vadd.xlane.f32.xlu0 %v1745
        %v1747 = vpop.xlane.xlu0 %1746
        %v1748 = vrcp.pop %v1744
        %v1749 = vrcp.pop %v1747
        %v1750 = vmul.f32 %v1739, %v1748
        %v1751 = vmul.f32 %v1741, %v1749
        %v1752 = vsel %vm1421, 0.0, %v1750
        %v1753 = vsel %vm1422, 0.0, %v1751
        %v1754 = vpack.c.bf16 %v1753, %v1752
        %1755 = vrot.lane.b32.xlu0 %v1420, 64
        %v1756 = vpop.permute.xlu0 %1755
        %v1759 = vsel %vm1475, %v1754, 0
        %1761 = vmatprep.subr.bf16.mxu0 0
        %1762 = vmatpush1.bf16.msra.mxu0 %v1756
        %1763 = vmatprep.subr.bf16.mxu0 0
        %1764 = vmatpush1.bf16.msra.mxu0 0
        %1765 = vmatprep.subr.bf16.mxu0 0
        %1766 = vmatpush1.bf16.msra.mxu0 0
        %1767 = vmatprep.subr.bf16.mxu0 0
        %1768 = vmatpush1.bf16.msra.mxu0 0
        %1769 = vmatprep.subr.bf16.mxu0 0
        %1770 = vmatpush1.bf16.msra.mxu0 0
        %1771 = vmatprep.subr.bf16.mxu0 0
        %1772 = vmatpush1.bf16.msra.mxu0 0
        %1773 = vmatprep.subr.bf16.mxu0 0
        %1774 = vmatpush1.bf16.msra.mxu0 0
        %1775 = vmatprep.subr.bf16.mxu0 0
        %1776 = vmatpush1.bf16.msra.mxu0 0
        %1777 = vmatprep.subr.bf16.mxu0 0
        %1778 = vmatpush1.bf16.msra.mxu0 0
        %1779 = vmatprep.subr.bf16.mxu0 0
        %1780 = vmatpush1.bf16.msra.mxu0 0
        %1781 = vmatprep.subr.bf16.mxu0 0
        %1782 = vmatpush1.bf16.msra.mxu0 0
        %1783 = vmatprep.subr.bf16.mxu0 0
        %1784 = vmatpush1.bf16.msra.mxu0 0
        %1785 = vmatprep.subr.bf16.mxu0 0
        %1786 = vmatpush1.bf16.msra.mxu0 0
        %1787 = vmatprep.subr.bf16.mxu0 0
        %1788 = vmatpush1.bf16.msra.mxu0 0
        %1789 = vmatprep.subr.bf16.mxu0 0
        %1790 = vmatpush1.bf16.msra.mxu0 0
        %1791 = vmatprep.subr.bf16.mxu0 0
        %1792 = vmatpush1.bf16.msra.mxu0 0
        %1793 = vmatprep.mubr.bf16.mxu0 0
        %1794 = vmatmul.mubr.bf16.gmra.mrb[0].mxu0 %v1759
        %v1795 = vpop.f32.mrb[0].mxu0
        %v1796 = vadd.f32 0.0, %v1795
        %v1797 = vpop.f32.mrb[0].mxu0
        %v1798 = vpop.f32.mrb[0].mxu0
        %v1799 = vadd.f32 0.0, %v1798
        %v1800 = vpop.f32.mrb[0].mxu0
        %1801 = vdwg.mxu0
        %1802 = vrot.lane.b32.xlu0 %v1418, 32
        %v1803 = vpop.permute.xlu0 %1802
        %1804 = vrot.lane.b32.xlu0 %v1419, 32
        %v1805 = vpop.permute.xlu0 %1804
        %v1807 = vsel %vm1423, %v1803, 0
        %v1810 = vsel %vm1423, %v1805, 0
        %1812 = vmatprep.subr.bf16.mxu0 0
        %1813 = vmatpush1.bf16.xpose.msra.mxu0 %v1810
        %1814 = vmatprep.subr.bf16.mxu0 0
        %1815 = vmatpush1.bf16.xpose.msra.mxu0 0
        %1816 = vmatprep.subr.bf16.mxu0 0
        %1817 = vmatpush1.bf16.xpose.msra.mxu0 0
        %1818 = vmatprep.subr.bf16.mxu0 0
        %1819 = vmatpush1.bf16.xpose.msra.mxu0 0
        %1820 = vmatprep.subr.bf16.mxu0 0
        %1821 = vmatpush1.bf16.xpose.msra.mxu0 0
        %1822 = vmatprep.subr.bf16.mxu0 0
        %1823 = vmatpush1.bf16.xpose.msra.mxu0 0
        %1824 = vmatprep.subr.bf16.mxu0 0
        %1825 = vmatpush1.bf16.xpose.msra.mxu0 0
        %1826 = vmatprep.subr.bf16.mxu0 0
        %1827 = vmatpush1.bf16.xpose.msra.mxu0 0
        %1828 = vmatprep.subr.bf16.mxu0 0
        %1829 = vmatpush1.bf16.xpose.msra.mxu0 0
        %1830 = vmatprep.subr.bf16.mxu0 0
        %1831 = vmatpush1.bf16.xpose.msra.mxu0 0
        %1832 = vmatprep.subr.bf16.mxu0 0
        %1833 = vmatpush1.bf16.xpose.msra.mxu0 0
        %1834 = vmatprep.subr.bf16.mxu0 0
        %1835 = vmatpush1.bf16.xpose.msra.mxu0 0
        %1836 = vmatprep.subr.bf16.mxu0 0
        %1837 = vmatpush1.bf16.xpose.msra.mxu0 0
        %1838 = vmatprep.subr.bf16.mxu0 0
        %1839 = vmatpush1.bf16.xpose.msra.mxu0 0
        %1840 = vmatprep.subr.bf16.mxu0 0
        %1841 = vmatpush1.bf16.xpose.msra.mxu0 0
        %1842 = vmatprep.subr.bf16.mxu0 0
        %1843 = vmatpush1.bf16.xpose.msra.mxu0 0
        %1844 = vmatprep.mubr.bf16.mxu0 0
        %1845 = vmatmul.mubr.bf16.gmra.mrb[0].mxu0 %v1807
        %v1846 = vpop.f32.mrb[0].mxu0
        %v1847 = vadd.f32 0.0, %v1846
        %v1848 = vpop.f32.mrb[0].mxu0
        %v1849 = vpop.f32.mrb[0].mxu0
        %v1850 = vadd.f32 0.0, %v1849
        %v1851 = vpop.f32.mrb[0].mxu0
        %1852 = vdwg.mxu0
        %v1853 = vmul.f32 %v1847, 0.17677669
        %v1854 = vmul.f32 %v1850, 0.17677669
        %v1855 = vadd.f32 %v1853, %v1093
        %v1856 = vadd.f32 %v1854, %v1094
        %v1857 = vsel %vm1475, %v1855, -inf
        %1858 = vmax.xlane.f32.xlu0 %v1857
        %v1859 = vpop.xlane.xlu0 %1858
        %v1860 = vsel %vm1475, %v1856, -inf
        %1861 = vmax.xlane.f32.xlu0 %v1860
        %v1862 = vpop.xlane.xlu0 %1861
        %v1863 = vsub.f32 %v1855, %v1859
        %v1864 = vsub.f32 %v1856, %v1862
        %v1865 = vmul.f32 %v1863, 1.442695
        %v1866 = vpow.pop %v1865
        %v1867 = vmul.f32 %v1864, 1.442695
        %v1868 = vpow.pop %v1867
        %v1869 = vsel %vm1475, %v1866, 0.0
        %1870 = vadd.xlane.f32.xlu0 %v1869
        %v1871 = vpop.xlane.xlu0 %1870
        %v1872 = vsel %vm1475, %v1868, 0.0
        %1873 = vadd.xlane.f32.xlu0 %v1872
        %v1874 = vpop.xlane.xlu0 %1873
        %v1875 = vrcp.pop %v1871
        %v1876 = vrcp.pop %v1874
        %v1877 = vmul.f32 %v1866, %v1875
        %v1878 = vmul.f32 %v1868, %v1876
        %v1879 = vsel %vm1421, 0.0, %v1877
        %v1880 = vsel %vm1422, 0.0, %v1878
        %v1881 = vpack.c.bf16 %v1880, %v1879
        %1882 = vrot.lane.b32.xlu0 %v1420, 32
        %v1883 = vpop.permute.xlu0 %1882
        %v1886 = vsel %vm1475, %v1881, 0
        %1888 = vmatprep.subr.bf16.mxu0 0
        %1889 = vmatpush1.bf16.msra.mxu0 %v1883
        %1890 = vmatprep.subr.bf16.mxu0 0
        %1891 = vmatpush1.bf16.msra.mxu0 0
        %1892 = vmatprep.subr.bf16.mxu0 0
        %1893 = vmatpush1.bf16.msra.mxu0 0
        %1894 = vmatprep.subr.bf16.mxu0 0
        %1895 = vmatpush1.bf16.msra.mxu0 0
        %1896 = vmatprep.subr.bf16.mxu0 0
        %1897 = vmatpush1.bf16.msra.mxu0 0
        %1898 = vmatprep.subr.bf16.mxu0 0
        %1899 = vmatpush1.bf16.msra.mxu0 0
        %1900 = vmatprep.subr.bf16.mxu0 0
        %1901 = vmatpush1.bf16.msra.mxu0 0
        %1902 = vmatprep.subr.bf16.mxu0 0
        %1903 = vmatpush1.bf16.msra.mxu0 0
        %1904 = vmatprep.subr.bf16.mxu0 0
        %1905 = vmatpush1.bf16.msra.mxu0 0
        %1906 = vmatprep.subr.bf16.mxu0 0
        %1907 = vmatpush1.bf16.msra.mxu0 0
        %1908 = vmatprep.subr.bf16.mxu0 0
        %1909 = vmatpush1.bf16.msra.mxu0 0
        %1910 = vmatprep.subr.bf16.mxu0 0
        %1911 = vmatpush1.bf16.msra.mxu0 0
        %1912 = vmatprep.subr.bf16.mxu0 0
        %1913 = vmatpush1.bf16.msra.mxu0 0
        %1914 = vmatprep.subr.bf16.mxu0 0
        %1915 = vmatpush1.bf16.msra.mxu0 0
        %1916 = vmatprep.subr.bf16.mxu0 0
        %1917 = vmatpush1.bf16.msra.mxu0 0
        %1918 = vmatprep.subr.bf16.mxu0 0
        %1919 = vmatpush1.bf16.msra.mxu0 0
        %1920 = vmatprep.mubr.bf16.mxu0 0
        %1921 = vmatmul.mubr.bf16.gmra.mrb[0].mxu0 %v1886
        %v1922 = vpop.f32.mrb[0].mxu0
        %v1923 = vadd.f32 0.0, %v1922
        %v1924 = vpop.f32.mrb[0].mxu0
        %v1925 = vpop.f32.mrb[0].mxu0
        %v1926 = vadd.f32 0.0, %v1925
        %v1927 = vpop.f32.mrb[0].mxu0
        %1928 = vdwg.mxu0
        %1931 = vrot.lane.b32.xlu0 %v1669, 32
        %v1932 = vpop.permute.xlu0 %1931
        %1933 = vrot.lane.b32.xlu0 %v1672, 32
        %v1934 = vpop.permute.xlu0 %1933
        %1939 = vrot.lane.b32.xlu0 %v1796, 64
        %v1940 = vpop.permute.xlu0 %1939
        %1941 = vrot.lane.b32.xlu0 %v1799, 64
        %v1942 = vpop.permute.xlu0 %1941
        %1947 = vrot.lane.b32.xlu0 %v1923, 96
        %v1948 = vpop.permute.xlu0 %1947
        %1949 = vrot.lane.b32.xlu0 %v1926, 96
        %v1950 = vpop.permute.xlu0 %1949
        %v1953 = vsel %vm1423, %v1539, %v1932
        %v1954 = vsel %vm1423, %v1542, %v1934
        %vm1955 = vcmask 523264
        %v1956 = vsel %vm1955, %v1953, %v1940
        %v1957 = vsel %vm1955, %v1954, %v1942
        %vm1958 = vcmask 785408
        %v1959 = vsel %vm1958, %v1956, %v1948
        %v1960 = vsel %vm1958, %v1957, %v1950
        %v1961 = vpack.c.bf16 %v1960, %v1959
        %v1963 = vlaneseq
        %v1964 = vshrl.u32 %v1963, 7
        %v1965 = vsub.s32 0, %v1964
        %v1966 = vrot.slane %v1417, %v1965
        %v1984 = vunpack.c.l.b16 %v1401
        %v1985 = vunpack.c.l.b16 %v1402
        %v1986 = vunpack.c.l.b16 %v1403
        %v1987 = vunpack.c.l.b16 %v1404
        %v1988 = vunpack.c.l.b16 %v1405
        %v1989 = vunpack.c.l.b16 %v1406
        %v1990 = vunpack.c.l.b16 %v1407
        %v1991 = vunpack.c.l.b16 %v1408
        %v1992 = vunpack.c.l.b16 %v1409
        %v1993 = vunpack.c.l.b16 %v1410
        %v1994 = vunpack.c.l.b16 %v1411
        %v1995 = vunpack.c.l.b16 %v1412
        %v1996 = vunpack.c.l.b16 %v1413
        %v1997 = vunpack.c.l.b16 %v1414
        %v1998 = vunpack.c.l.b16 %v1415
        %v1999 = vunpack.c.l.b16 %v1416
        %v2000 = vpack.c.b16 %v1985, %v1984
        %v2001 = vpack.c.b16 %v1987, %v1986
        %v2002 = vpack.c.b16 %v1989, %v1988
        %v2003 = vpack.c.b16 %v1991, %v1990
        %v2004 = vpack.c.b16 %v1993, %v1992
        %v2005 = vpack.c.b16 %v1995, %v1994
        %v2006 = vpack.c.b16 %v1997, %v1996
        %v2007 = vpack.c.b16 %v1999, %v1998
        %2016 = vmatprep.subr.bf16.mxu0 0
        %2017 = vmatpush1.bf16.msra.mxu0 %v2000
        %2018 = vmatprep.subr.bf16.mxu0 0
        %2019 = vmatpush1.bf16.msra.mxu0 %v2001
        %2020 = vmatprep.subr.bf16.mxu0 0
        %2021 = vmatpush1.bf16.msra.mxu0 %v2002
        %2022 = vmatprep.subr.bf16.mxu0 0
        %2023 = vmatpush1.bf16.msra.mxu0 %v2003
        %2024 = vmatprep.subr.bf16.mxu0 0
        %2025 = vmatpush1.bf16.msra.mxu0 %v2004
        %2026 = vmatprep.subr.bf16.mxu0 0
        %2027 = vmatpush1.bf16.msra.mxu0 %v2005
        %2028 = vmatprep.subr.bf16.mxu0 0
        %2029 = vmatpush1.bf16.msra.mxu0 %v2006
        %2030 = vmatprep.subr.bf16.mxu0 0
        %2031 = vmatpush1.bf16.msra.mxu0 %v2007
        %2032 = vmatprep.subr.bf16.mxu0 0
        %2033 = vmatpush1.bf16.msra.mxu0 0
        %2034 = vmatprep.subr.bf16.mxu0 0
        %2035 = vmatpush1.bf16.msra.mxu0 0
        %2036 = vmatprep.subr.bf16.mxu0 0
        %2037 = vmatpush1.bf16.msra.mxu0 0
        %2038 = vmatprep.subr.bf16.mxu0 0
        %2039 = vmatpush1.bf16.msra.mxu0 0
        %2040 = vmatprep.subr.bf16.mxu0 0
        %2041 = vmatpush1.bf16.msra.mxu0 0
        %2042 = vmatprep.subr.bf16.mxu0 0
        %2043 = vmatpush1.bf16.msra.mxu0 0
        %2044 = vmatprep.subr.bf16.mxu0 0
        %2045 = vmatpush1.bf16.msra.mxu0 0
        %2046 = vmatprep.subr.bf16.mxu0 0
        %2047 = vmatpush1.bf16.msra.mxu0 0
        %2048 = vmatprep.mubr.bf16.mxu0 0
        %2049 = vmatmul.mubr.bf16.gmra.mrb[0].mxu0 %v1961
        %v2050 = vpop.f32.mrb[0].mxu0
        %v2051 = vadd.f32 %v1966, %v2050
        %v2052 = vpop.f32.mrb[0].mxu0
        %v2053 = vpop.f32.mrb[0].mxu0
        %v2054 = vadd.f32 %v1966, %v2053
        %v2055 = vpop.f32.mrb[0].mxu0
        %2056 = vdwg.mxu0
        %v2057 = vadd.f32 %v1080, %v2051
        %v2058 = vadd.f32 %v1081, %v2054
        %v2059 = vld [vmem:[%s1024] sm:$0x1]
        %v2060 = vld [vmem:[%s1027] sm:$0x1]
        %2061 = vadd.xlane.f32.xlu0 %v2057
        %v2062 = vpop.xlane.xlu0 %2061
        %2063 = vadd.xlane.f32.xlu0 %v2058
        %v2064 = vpop.xlane.xlu0 %2063
        %v2065 = vmul.f32 %v2062, %v1104
        %v2066 = vmul.f32 %v2064, %v1104
        %v2067 = vsub.f32 %v2057, %v2065
        %v2068 = vsub.f32 %v2058, %v2066
        %v2069 = vmul.f32 %v2067, %v2067
        %v2070 = vmul.f32 %v2068, %v2068
        %2071 = vadd.xlane.f32.xlu0 %v2069
        %v2072 = vpop.xlane.xlu0 %2071
        %2073 = vadd.xlane.f32.xlu0 %v2070
        %v2074 = vpop.xlane.xlu0 %2073
        %v2075 = vmul.f32 %v2072, %v1104
        %v2076 = vmul.f32 %v2074, %v1104
        %v2077 = vadd.f32 %v2075, 1e-05
        %v2078 = vadd.f32 %v2076, 1e-05
        %v2079 = vrsqrt.pop %v2077
        %v2080 = vrsqrt.pop %v2078
        %v2081 = vmul.f32 %v2067, %v2079
        %v2082 = vmul.f32 %v2068, %v2080
        %v2084 = vlaneseq
        %v2085 = vshrl.u32 %v2084, 7
        %v2086 = vsub.s32 0, %v2085
        %v2087 = vrot.slane %v2059, %v2086
        %v2089 = vmul.f32 %v2081, %v2087
        %v2090 = vmul.f32 %v2082, %v2087
        %v2092 = vlaneseq
        %v2093 = vshrl.u32 %v2092, 7
        %v2094 = vsub.s32 0, %v2093
        %v2095 = vrot.slane %v2060, %v2094
        %v2097 = vadd.f32 %v2089, %v2095
        %v2098 = vadd.f32 %v2090, %v2095
        %v2099 = vld [vmem:[%s1015] sm:$0xf]
        %v2100 = vld [vmem:[%s1015 + $0x4] sm:$0xf]
        %v2101 = vld [vmem:[%s1015 + $0x8] sm:$0xf]
        %v2102 = vpack.c.bf16 %v2098, %v2097
        %v2103 = vld [vmem:[%s854] sm:$0xf]
        %v2104 = vld [vmem:[%s854 + $0x4] sm:$0xf]
        %v2105 = vld [vmem:[%s854 + $0x8] sm:$0xf]
        %v2106 = vld [vmem:[%s854 + $0xc] sm:$0xf]
        %v2107 = vld [vmem:[%s854 + $0x10] sm:$0xf]
        %v2108 = vld [vmem:[%s854 + $0x14] sm:$0xf]
        %v2109 = vld [vmem:[%s854 + $0x18] sm:$0xf]
        %v2110 = vld [vmem:[%s854 + $0x1c] sm:$0xf]
        %v2111 = vld [vmem:[%s854 + $0x20] sm:$0xf]
        %v2112 = vld [vmem:[%s854 + $0x24] sm:$0xf]
        %v2113 = vld [vmem:[%s854 + $0x28] sm:$0xf]
        %v2114 = vld [vmem:[%s854 + $0x2c] sm:$0xf]
        %v2115 = vld [vmem:[%s854 + $0x30] sm:$0xf]
        %v2116 = vld [vmem:[%s854 + $0x34] sm:$0xf]
        %v2117 = vld [vmem:[%s854 + $0x38] sm:$0xf]
        %v2118 = vld [vmem:[%s854 + $0x3c] sm:$0xf]
        %v2119 = vld [vmem:[%s1039] sm:$0x1]
        %v2121 = vlaneseq
        %v2122 = vshrl.u32 %v2121, 7
        %v2123 = vsub.s32 0, %v2122
        %v2124 = vrot.slane %v2119, %v2123
        %v2142 = vunpack.c.l.b16 %v2103
        %v2143 = vunpack.c.l.b16 %v2104
        %v2144 = vunpack.c.l.b16 %v2105
        %v2145 = vunpack.c.l.b16 %v2106
        %v2146 = vunpack.c.l.b16 %v2107
        %v2147 = vunpack.c.l.b16 %v2108
        %v2148 = vunpack.c.l.b16 %v2109
        %v2149 = vunpack.c.l.b16 %v2110
        %v2150 = vunpack.c.l.b16 %v2111
        %v2151 = vunpack.c.l.b16 %v2112
        %v2152 = vunpack.c.l.b16 %v2113
        %v2153 = vunpack.c.l.b16 %v2114
        %v2154 = vunpack.c.l.b16 %v2115
        %v2155 = vunpack.c.l.b16 %v2116
        %v2156 = vunpack.c.l.b16 %v2117
        %v2157 = vunpack.c.l.b16 %v2118
        %v2158 = vpack.c.b16 %v2143, %v2142
        %v2159 = vpack.c.b16 %v2145, %v2144
        %v2160 = vpack.c.b16 %v2147, %v2146
        %v2161 = vpack.c.b16 %v2149, %v2148
        %v2162 = vpack.c.b16 %v2151, %v2150
        %v2163 = vpack.c.b16 %v2153, %v2152
        %v2164 = vpack.c.b16 %v2155, %v2154
        %v2165 = vpack.c.b16 %v2157, %v2156
        %2174 = vmatprep.subr.bf16.mxu0 0
        %2175 = vmatpush1.bf16.msra.mxu0 %v2158
        %2176 = vmatprep.subr.bf16.mxu0 0
        %2177 = vmatpush1.bf16.msra.mxu0 %v2159
        %2178 = vmatprep.subr.bf16.mxu0 0
        %2179 = vmatpush1.bf16.msra.mxu0 %v2160
        %2180 = vmatprep.subr.bf16.mxu0 0
        %2181 = vmatpush1.bf16.msra.mxu0 %v2161
        %2182 = vmatprep.subr.bf16.mxu0 0
        %2183 = vmatpush1.bf16.msra.mxu0 %v2162
        %2184 = vmatprep.subr.bf16.mxu0 0
        %2185 = vmatpush1.bf16.msra.mxu0 %v2163
        %2186 = vmatprep.subr.bf16.mxu0 0
        %2187 = vmatpush1.bf16.msra.mxu0 %v2164
        %2188 = vmatprep.subr.bf16.mxu0 0
        %2189 = vmatpush1.bf16.msra.mxu0 %v2165
        %2190 = vmatprep.subr.bf16.mxu0 0
        %2191 = vmatpush1.bf16.msra.mxu0 0
        %2192 = vmatprep.subr.bf16.mxu0 0
        %2193 = vmatpush1.bf16.msra.mxu0 0
        %2194 = vmatprep.subr.bf16.mxu0 0
        %2195 = vmatpush1.bf16.msra.mxu0 0
        %2196 = vmatprep.subr.bf16.mxu0 0
        %2197 = vmatpush1.bf16.msra.mxu0 0
        %2198 = vmatprep.subr.bf16.mxu0 0
        %2199 = vmatpush1.bf16.msra.mxu0 0
        %2200 = vmatprep.subr.bf16.mxu0 0
        %2201 = vmatpush1.bf16.msra.mxu0 0
        %2202 = vmatprep.subr.bf16.mxu0 0
        %2203 = vmatpush1.bf16.msra.mxu0 0
        %2204 = vmatprep.subr.bf16.mxu0 0
        %2205 = vmatpush1.bf16.msra.mxu0 0
        %2206 = vmatprep.mubr.bf16.mxu0 0
        %2207 = vmatmul.mubr.bf16.gmra.mrb[0].mxu0 %v2102
        %v2208 = vpop.f32.mrb[0].mxu0
        %v2209 = vadd.f32 %v2124, %v2208
        %v2210 = vpop.f32.mrb[0].mxu0
        %v2211 = vpop.f32.mrb[0].mxu0
        %v2212 = vadd.f32 %v2124, %v2211
        %v2213 = vpop.f32.mrb[0].mxu0
        %2214 = vdwg.mxu0
        %v2215 = vld [vmem:[%s1044] sm:$0xff]
        %v2216 = vld [vmem:[%s1044 + $0x8] sm:$0xff]
        %v2217 = vld [vmem:[%s1044 + $0x10] sm:$0xff]
        %v2218 = vld [vmem:[%s1044 + $0x18] sm:$0xff]
        %v2219 = vld [vmem:[%s1044 + $0x20] sm:$0xff]
        %v2220 = vld [vmem:[%s1044 + $0x28] sm:$0xff]
        %v2221 = vld [vmem:[%s1044 + $0x30] sm:$0xff]
        %v2222 = vld [vmem:[%s1044 + $0x38] sm:$0xff]
        %v2223 = vld [vmem:[%s1044 + $0x40] sm:$0xff]
        %v2224 = vld [vmem:[%s1044 + $0x48] sm:$0xff]
        %v2225 = vld [vmem:[%s1044 + $0x50] sm:$0xff]
        %v2226 = vld [vmem:[%s1044 + $0x58] sm:$0xff]
        %v2227 = vld [vmem:[%s1044 + $0x60] sm:$0xff]
        %v2228 = vld [vmem:[%s1044 + $0x68] sm:$0xff]
        %v2229 = vld [vmem:[%s1044 + $0x70] sm:$0xff]
        %v2230 = vld [vmem:[%s1044 + $0x78] sm:$0xff]
        %v2231 = vld [vmem:[%s1048] sm:$0x3]
        %v2233 = vlaneseq
        %v2234 = vshrl.u32 %v2233, 7
        %v2235 = vsub.s32 0, %v2234
        %v2236 = vrot.slane %v2231, %v2235
        %v2237 = vlaneseq
        %v2238 = vshrl.u32 %v2237, 7
        %v2239 = vsub.s32 1, %v2238
        %v2240 = vrot.slane %v2231, %v2239
        %v2246 = vunpack.c.l.b16 %v2099
        %v2247 = vunpack.c.l.b16 %v2100
        %v2248 = vunpack.c.l.b16 %v2101
        %v2249 = vpack.c.b16 %v2247, %v2246
        %v2250 = vpack.c.b16 %v2248, %v2248
        %v2269 = vunpack.c.l.b16 %v2215
        %v2270 = vunpack.c.h.b16 %v2215
        %v2271 = vunpack.c.l.b16 %v2216
        %v2272 = vunpack.c.h.b16 %v2216
        %v2273 = vunpack.c.l.b16 %v2217
        %v2274 = vunpack.c.h.b16 %v2217
        %v2275 = vunpack.c.l.b16 %v2218
        %v2276 = vunpack.c.h.b16 %v2218
        %v2277 = vunpack.c.l.b16 %v2219
        %v2278 = vunpack.c.h.b16 %v2219
        %v2279 = vunpack.c.l.b16 %v2220
        %v2280 = vunpack.c.h.b16 %v2220
        %v2281 = vunpack.c.l.b16 %v2221
        %v2282 = vunpack.c.h.b16 %v2221
        %v2283 = vunpack.c.l.b16 %v2222
        %v2284 = vunpack.c.h.b16 %v2222
        %v2285 = vunpack.c.l.b16 %v2223
        %v2286 = vunpack.c.h.b16 %v2223
        %v2287 = vunpack.c.l.b16 %v2224
        %v2288 = vunpack.c.h.b16 %v2224
        %v2289 = vunpack.c.l.b16 %v2225
        %v2290 = vunpack.c.h.b16 %v2225
        %v2291 = vunpack.c.l.b16 %v2226
        %v2292 = vunpack.c.h.b16 %v2226
        %v2293 = vunpack.c.l.b16 %v2227
        %v2294 = vunpack.c.h.b16 %v2227
        %v2295 = vunpack.c.l.b16 %v2228
        %v2296 = vunpack.c.h.b16 %v2228
        %v2297 = vunpack.c.l.b16 %v2229
        %v2298 = vunpack.c.h.b16 %v2229
        %v2299 = vunpack.c.l.b16 %v2230
        %v2300 = vunpack.c.h.b16 %v2230
        %v2301 = vpack.c.b16 %v2271, %v2269
        %v2302 = vpack.c.b16 %v2272, %v2270
        %v2303 = vpack.c.b16 %v2275, %v2273
        %v2304 = vpack.c.b16 %v2276, %v2274
        %v2305 = vpack.c.b16 %v2279, %v2277
        %v2306 = vpack.c.b16 %v2280, %v2278
        %v2307 = vpack.c.b16 %v2283, %v2281
        %v2308 = vpack.c.b16 %v2284, %v2282
        %v2309 = vpack.c.b16 %v2287, %v2285
        %v2310 = vpack.c.b16 %v2288, %v2286
        %v2311 = vpack.c.b16 %v2291, %v2289
        %v2312 = vpack.c.b16 %v2292, %v2290
        %v2313 = vpack.c.b16 %v2295, %v2293
        %v2314 = vpack.c.b16 %v2296, %v2294
        %v2315 = vpack.c.b16 %v2299, %v2297
        %v2316 = vpack.c.b16 %v2300, %v2298
        %2333 = vmatprep.subr.bf16.mxu0 %v2302
        %2334 = vmatpush1.bf16.msra.mxu0 %v2301
        %2335 = vmatprep.subr.bf16.mxu0 %v2304
        %2336 = vmatpush1.bf16.msra.mxu0 %v2303
        %2337 = vmatprep.subr.bf16.mxu0 %v2306
        %2338 = vmatpush1.bf16.msra.mxu0 %v2305
        %2339 = vmatprep.subr.bf16.mxu0 %v2308
        %2340 = vmatpush1.bf16.msra.mxu0 %v2307
        %2341 = vmatprep.subr.bf16.mxu0 %v2310
        %2342 = vmatpush1.bf16.msra.mxu0 %v2309
        %2343 = vmatprep.subr.bf16.mxu0 %v2312
        %2344 = vmatpush1.bf16.msra.mxu0 %v2311
        %2345 = vmatprep.subr.bf16.mxu0 %v2314
        %2346 = vmatpush1.bf16.msra.mxu0 %v2313
        %2347 = vmatprep.subr.bf16.mxu0 %v2316
        %2348 = vmatpush1.bf16.msra.mxu0 %v2315
        %2349 = vmatprep.subr.bf16.mxu0 0
        %2350 = vmatpush1.bf16.msra.mxu0 0
        %2351 = vmatprep.subr.bf16.mxu0 0
        %2352 = vmatpush1.bf16.msra.mxu0 0
        %2353 = vmatprep.subr.bf16.mxu0 0
        %2354 = vmatpush1.bf16.msra.mxu0 0
        %2355 = vmatprep.subr.bf16.mxu0 0
        %2356 = vmatpush1.bf16.msra.mxu0 0
        %2357 = vmatprep.subr.bf16.mxu0 0
        %2358 = vmatpush1.bf16.msra.mxu0 0
        %2359 = vmatprep.subr.bf16.mxu0 0
        %2360 = vmatpush1.bf16.msra.mxu0 0
        %2361 = vmatprep.subr.bf16.mxu0 0
        %2362 = vmatpush1.bf16.msra.mxu0 0
        %2363 = vmatprep.subr.bf16.mxu0 0
        %2364 = vmatpush1.bf16.msra.mxu0 0
        %2365 = vmatprep.mubr.bf16.mxu0 0
        %2366 = vmatmul.mubr.bf16.gmra.mrb[0].mxu0 %v2249
        %v2367 = vpop.f32.mrb[0].mxu0
        %v2368 = vadd.f32 %v2236, %v2367
        %v2369 = vpop.f32.mrb[0].mxu0
        %v2370 = vadd.f32 %v2240, %v2369
        %v2371 = vpop.f32.mrb[0].mxu0
        %v2372 = vadd.f32 %v2236, %v2371
        %v2373 = vpop.f32.mrb[0].mxu0
        %v2374 = vadd.f32 %v2240, %v2373
        %2375 = vmatprep.mubr.bf16.mxu0 0
        %2376 = vmatmul.mubr.bf16.gmra.mrb[0].mxu0 %v2250
        %v2377 = vpop.f32.mrb[0].mxu0
        %v2378 = vadd.f32 %v2236, %v2377
        %v2379 = vpop.f32.mrb[0].mxu0
        %v2380 = vadd.f32 %v2240, %v2379
        %v2381 = vpop.f32.mrb[0].mxu0
        %v2382 = vpop.f32.mrb[0].mxu0
        %2383 = vdwg.mxu0
        %v2384 = vld [vmem:[%s863] sm:$0xf]
        %v2385 = vld [vmem:[%s863 + $0x4] sm:$0xf]
        %v2386 = vld [vmem:[%s863 + $0x8] sm:$0xf]
        %v2387 = vld [vmem:[%s863 + $0xc] sm:$0xf]
        %v2388 = vld [vmem:[%s863 + $0x10] sm:$0xf]
        %v2389 = vld [vmem:[%s863 + $0x14] sm:$0xf]
        %v2390 = vld [vmem:[%s863 + $0x18] sm:$0xf]
        %v2391 = vld [vmem:[%s863 + $0x1c] sm:$0xf]
        %v2392 = vld [vmem:[%s863 + $0x20] sm:$0xf]
        %v2393 = vld [vmem:[%s863 + $0x24] sm:$0xf]
        %v2394 = vld [vmem:[%s863 + $0x28] sm:$0xf]
        %v2395 = vld [vmem:[%s863 + $0x2c] sm:$0xf]
        %v2396 = vld [vmem:[%s863 + $0x30] sm:$0xf]
        %v2397 = vld [vmem:[%s863 + $0x34] sm:$0xf]
        %v2398 = vld [vmem:[%s863 + $0x38] sm:$0xf]
        %v2399 = vld [vmem:[%s863 + $0x3c] sm:$0xf]
        %v2400 = vld [vmem:[%s1051] sm:$0x1]
        %v2401 = vpack.c.bf16 %v2212, %v2209
        %v2402 = vpack.c.bf16 %v2372, %v2368
        %v2403 = vpack.c.bf16 %v2378, %v2378
        %v2404 = vpack.c.bf16 %v2374, %v2370
        %v2405 = vpack.c.bf16 %v2380, %v2380
        %vm2406 = vcmp.lt.f32.partialorder %v1097, -1e+20
        %v2408 = vsel %vm1423, %v2401, 0
        %v2411 = vsel %vm1423, %v2402, 0
        %v2414 = vsel %vm1423, %v2403, 0
        %2416 = vmatprep.subr.bf16.mxu0 0
        %2417 = vmatpush1.bf16.xpose.msra.mxu0 %v2411
        %2418 = vmatprep.subr.bf16.mxu0 0
        %2419 = vmatpush1.bf16.xpose.msra.mxu0 %v2414
        %2420 = vmatprep.subr.bf16.mxu0 0
        %2421 = vmatpush1.bf16.xpose.msra.mxu0 0
        %2422 = vmatprep.subr.bf16.mxu0 0
        %2423 = vmatpush1.bf16.xpose.msra.mxu0 0
        %2424 = vmatprep.subr.bf16.mxu0 0
        %2425 = vmatpush1.bf16.xpose.msra.mxu0 0
        %2426 = vmatprep.subr.bf16.mxu0 0
        %2427 = vmatpush1.bf16.xpose.msra.mxu0 0
        %2428 = vmatprep.subr.bf16.mxu0 0
        %2429 = vmatpush1.bf16.xpose.msra.mxu0 0
        %2430 = vmatprep.subr.bf16.mxu0 0
        %2431 = vmatpush1.bf16.xpose.msra.mxu0 0
        %2432 = vmatprep.subr.bf16.mxu0 0
        %2433 = vmatpush1.bf16.xpose.msra.mxu0 0
        %2434 = vmatprep.subr.bf16.mxu0 0
        %2435 = vmatpush1.bf16.xpose.msra.mxu0 0
        %2436 = vmatprep.subr.bf16.mxu0 0
        %2437 = vmatpush1.bf16.xpose.msra.mxu0 0
        %2438 = vmatprep.subr.bf16.mxu0 0
        %2439 = vmatpush1.bf16.xpose.msra.mxu0 0
        %2440 = vmatprep.subr.bf16.mxu0 0
        %2441 = vmatpush1.bf16.xpose.msra.mxu0 0
        %2442 = vmatprep.subr.bf16.mxu0 0
        %2443 = vmatpush1.bf16.xpose.msra.mxu0 0
        %2444 = vmatprep.subr.bf16.mxu0 0
        %2445 = vmatpush1.bf16.xpose.msra.mxu0 0
        %2446 = vmatprep.subr.bf16.mxu0 0
        %2447 = vmatpush1.bf16.xpose.msra.mxu0 0
        %2448 = vmatprep.mubr.bf16.mxu0 0
        %2449 = vmatmul.mubr.bf16.gmra.mrb[0].mxu0 %v2408
        %v2450 = vpop.f32.mrb[0].mxu0
        %v2451 = vadd.f32 0.0, %v2450
        %v2452 = vpop.f32.mrb[0].mxu0
        %v2453 = vpop.f32.mrb[0].mxu0
        %v2454 = vadd.f32 0.0, %v2453
        %v2455 = vpop.f32.mrb[0].mxu0
        %2456 = vdwg.mxu0
        %v2457 = vmul.f32 %v2451, 0.17677669
        %v2458 = vmul.f32 %v2454, 0.17677669
        %v2459 = vadd.f32 %v2457, %v1097
        %v2460 = vadd.f32 %v2458, %v1097
        %vm2461 = vcmask 195584
        %v2462 = vsel %vm2461, %v2459, -inf
        %2463 = vmax.xlane.f32.xlu0 %v2462
        %v2464 = vpop.xlane.xlu0 %2463
        %v2465 = vsel %vm2461, %v2460, -inf
        %2466 = vmax.xlane.f32.xlu0 %v2465
        %v2467 = vpop.xlane.xlu0 %2466
        %v2468 = vsub.f32 %v2459, %v2464
        %v2469 = vsub.f32 %v2460, %v2467
        %v2470 = vmul.f32 %v2468, 1.442695
        %v2471 = vpow.pop %v2470
        %v2472 = vmul.f32 %v2469, 1.442695
        %v2473 = vpow.pop %v2472
        %v2474 = vsel %vm2461, %v2471, 0.0
        %2475 = vadd.xlane.f32.xlu0 %v2474
        %v2476 = vpop.xlane.xlu0 %2475
        %v2477 = vsel %vm2461, %v2473, 0.0
        %2478 = vadd.xlane.f32.xlu0 %v2477
        %v2479 = vpop.xlane.xlu0 %2478
        %v2480 = vrcp.pop %v2476
        %v2481 = vrcp.pop %v2479
        %v2482 = vmul.f32 %v2471, %v2480
        %v2483 = vmul.f32 %v2473, %v2481
        %v2484 = vsel %vm2406, 1, 0
        %vm2485 = vcmp.eq.s32.totalorder %v2484, 1
        %v2486 = vsel %vm2485, 0.0, %v2482
        %v2487 = vsel %vm2485, 0.0, %v2483
        %v2488 = vpack.c.bf16 %v2487, %v2486
        %v2490 = vsel %vm2461, %v2488, 0
        %vm2492 = vcmask 1043456
        %v2494 = vsel %vm2492, %v2405, 0
        %2496 = vmatprep.subr.bf16.mxu0 0
        %2497 = vmatpush1.bf16.msra.mxu0 %v2404
        %2498 = vmatprep.subr.bf16.mxu0 0
        %2499 = vmatpush1.bf16.msra.mxu0 %v2494
        %2500 = vmatprep.subr.bf16.mxu0 0
        %2501 = vmatpush1.bf16.msra.mxu0 0
        %2502 = vmatprep.subr.bf16.mxu0 0
        %2503 = vmatpush1.bf16.msra.mxu0 0
        %2504 = vmatprep.subr.bf16.mxu0 0
        %2505 = vmatpush1.bf16.msra.mxu0 0
        %2506 = vmatprep.subr.bf16.mxu0 0
        %2507 = vmatpush1.bf16.msra.mxu0 0
        %2508 = vmatprep.subr.bf16.mxu0 0
        %2509 = vmatpush1.bf16.msra.mxu0 0
        %2510 = vmatprep.subr.bf16.mxu0 0
        %2511 = vmatpush1.bf16.msra.mxu0 0
        %2512 = vmatprep.subr.bf16.mxu0 0
        %2513 = vmatpush1.bf16.msra.mxu0 0
        %2514 = vmatprep.subr.bf16.mxu0 0
        %2515 = vmatpush1.bf16.msra.mxu0 0
        %2516 = vmatprep.subr.bf16.mxu0 0
        %2517 = vmatpush1.bf16.msra.mxu0 0
        %2518 = vmatprep.subr.bf16.mxu0 0
        %2519 = vmatpush1.bf16.msra.mxu0 0
        %2520 = vmatprep.subr.bf16.mxu0 0
        %2521 = vmatpush1.bf16.msra.mxu0 0
        %2522 = vmatprep.subr.bf16.mxu0 0
        %2523 = vmatpush1.bf16.msra.mxu0 0
        %2524 = vmatprep.subr.bf16.mxu0 0
        %2525 = vmatpush1.bf16.msra.mxu0 0
        %2526 = vmatprep.subr.bf16.mxu0 0
        %2527 = vmatpush1.bf16.msra.mxu0 0
        %2528 = vmatprep.mubr.bf16.mxu0 0
        %2529 = vmatmul.mubr.bf16.gmra.mrb[0].mxu0 %v2490
        %v2530 = vpop.f32.mrb[0].mxu0
        %v2531 = vadd.f32 0.0, %v2530
        %v2532 = vpop.f32.mrb[0].mxu0
        %v2533 = vpop.f32.mrb[0].mxu0
        %v2534 = vadd.f32 0.0, %v2533
        %v2535 = vpop.f32.mrb[0].mxu0
        %2536 = vdwg.mxu0
        %2538 = vrot.lane.b32.xlu0 %v2401, 96
        %v2539 = vpop.permute.xlu0 %2538
        %2542 = vrot.lane.b32.xlu0 %v2402, 96
        %v2543 = vpop.permute.xlu0 %2542
        %2544 = vrot.lane.b32.xlu0 %v2403, 96
        %v2545 = vpop.permute.xlu0 %2544
        %v2547 = vsel %vm1423, %v2539, 0
        %v2550 = vsel %vm1423, %v2543, 0
        %v2553 = vsel %vm1423, %v2545, 0
        %2555 = vmatprep.subr.bf16.mxu0 0
        %2556 = vmatpush1.bf16.xpose.msra.mxu0 %v2550
        %2557 = vmatprep.subr.bf16.mxu0 0
        %2558 = vmatpush1.bf16.xpose.msra.mxu0 %v2553
        %2559 = vmatprep.subr.bf16.mxu0 0
        %2560 = vmatpush1.bf16.xpose.msra.mxu0 0
        %2561 = vmatprep.subr.bf16.mxu0 0
        %2562 = vmatpush1.bf16.xpose.msra.mxu0 0
        %2563 = vmatprep.subr.bf16.mxu0 0
        %2564 = vmatpush1.bf16.xpose.msra.mxu0 0
        %2565 = vmatprep.subr.bf16.mxu0 0
        %2566 = vmatpush1.bf16.xpose.msra.mxu0 0
        %2567 = vmatprep.subr.bf16.mxu0 0
        %2568 = vmatpush1.bf16.xpose.msra.mxu0 0
        %2569 = vmatprep.subr.bf16.mxu0 0
        %2570 = vmatpush1.bf16.xpose.msra.mxu0 0
        %2571 = vmatprep.subr.bf16.mxu0 0
        %2572 = vmatpush1.bf16.xpose.msra.mxu0 0
        %2573 = vmatprep.subr.bf16.mxu0 0
        %2574 = vmatpush1.bf16.xpose.msra.mxu0 0
        %2575 = vmatprep.subr.bf16.mxu0 0
        %2576 = vmatpush1.bf16.xpose.msra.mxu0 0
        %2577 = vmatprep.subr.bf16.mxu0 0
        %2578 = vmatpush1.bf16.xpose.msra.mxu0 0
        %2579 = vmatprep.subr.bf16.mxu0 0
        %2580 = vmatpush1.bf16.xpose.msra.mxu0 0
        %2581 = vmatprep.subr.bf16.mxu0 0
        %2582 = vmatpush1.bf16.xpose.msra.mxu0 0
        %2583 = vmatprep.subr.bf16.mxu0 0
        %2584 = vmatpush1.bf16.xpose.msra.mxu0 0
        %2585 = vmatprep.subr.bf16.mxu0 0
        %2586 = vmatpush1.bf16.xpose.msra.mxu0 0
        %2587 = vmatprep.mubr.bf16.mxu0 0
        %2588 = vmatmul.mubr.bf16.gmra.mrb[0].mxu0 %v2547
        %v2589 = vpop.f32.mrb[0].mxu0
        %v2590 = vadd.f32 0.0, %v2589
        %v2591 = vpop.f32.mrb[0].mxu0
        %v2592 = vpop.f32.mrb[0].mxu0
        %v2593 = vadd.f32 0.0, %v2592
        %v2594 = vpop.f32.mrb[0].mxu0
        %2595 = vdwg.mxu0
        %v2596 = vmul.f32 %v2590, 0.17677669
        %v2597 = vmul.f32 %v2593, 0.17677669
        %v2598 = vadd.f32 %v2596, %v1097
        %v2599 = vadd.f32 %v2597, %v1097
        %v2600 = vsel %vm2461, %v2598, -inf
        %2601 = vmax.xlane.f32.xlu0 %v2600
        %v2602 = vpop.xlane.xlu0 %2601
        %v2603 = vsel %vm2461, %v2599, -inf
        %2604 = vmax.xlane.f32.xlu0 %v2603
        %v2605 = vpop.xlane.xlu0 %2604
        %v2606 = vsub.f32 %v2598, %v2602
        %v2607 = vsub.f32 %v2599, %v2605
        %v2608 = vmul.f32 %v2606, 1.442695
        %v2609 = vpow.pop %v2608
        %v2610 = vmul.f32 %v2607, 1.442695
        %v2611 = vpow.pop %v2610
        %v2612 = vsel %vm2461, %v2609, 0.0
        %2613 = vadd.xlane.f32.xlu0 %v2612
        %v2614 = vpop.xlane.xlu0 %2613
        %v2615 = vsel %vm2461, %v2611, 0.0
        %2616 = vadd.xlane.f32.xlu0 %v2615
        %v2617 = vpop.xlane.xlu0 %2616
        %v2618 = vrcp.pop %v2614
        %v2619 = vrcp.pop %v2617
        %v2620 = vmul.f32 %v2609, %v2618
        %v2621 = vmul.f32 %v2611, %v2619
        %v2622 = vsel %vm2485, 0.0, %v2620
        %v2623 = vsel %vm2485, 0.0, %v2621
        %v2624 = vpack.c.bf16 %v2623, %v2622
        %2627 = vrot.lane.b32.xlu0 %v2404, 96
        %v2628 = vpop.permute.xlu0 %2627
        %2629 = vrot.lane.b32.xlu0 %v2405, 96
        %v2630 = vpop.permute.xlu0 %2629
        %v2633 = vsel %vm2461, %v2624, 0
        %v2636 = vsel %vm2492, %v2630, 0
        %2638 = vmatprep.subr.bf16.mxu0 0
        %2639 = vmatpush1.bf16.msra.mxu0 %v2628
        %2640 = vmatprep.subr.bf16.mxu0 0
        %2641 = vmatpush1.bf16.msra.mxu0 %v2636
        %2642 = vmatprep.subr.bf16.mxu0 0
        %2643 = vmatpush1.bf16.msra.mxu0 0
        %2644 = vmatprep.subr.bf16.mxu0 0
        %2645 = vmatpush1.bf16.msra.mxu0 0
        %2646 = vmatprep.subr.bf16.mxu0 0
        %2647 = vmatpush1.bf16.msra.mxu0 0
        %2648 = vmatprep.subr.bf16.mxu0 0
        %2649 = vmatpush1.bf16.msra.mxu0 0
        %2650 = vmatprep.subr.bf16.mxu0 0
        %2651 = vmatpush1.bf16.msra.mxu0 0
        %2652 = vmatprep.subr.bf16.mxu0 0
        %2653 = vmatpush1.bf16.msra.mxu0 0
        %2654 = vmatprep.subr.bf16.mxu0 0
        %2655 = vmatpush1.bf16.msra.mxu0 0
        %2656 = vmatprep.subr.bf16.mxu0 0
        %2657 = vmatpush1.bf16.msra.mxu0 0
        %2658 = vmatprep.subr.bf16.mxu0 0
        %2659 = vmatpush1.bf16.msra.mxu0 0
        %2660 = vmatprep.subr.bf16.mxu0 0
        %2661 = vmatpush1.bf16.msra.mxu0 0
        %2662 = vmatprep.subr.bf16.mxu0 0
        %2663 = vmatpush1.bf16.msra.mxu0 0
        %2664 = vmatprep.subr.bf16.mxu0 0
        %2665 = vmatpush1.bf16.msra.mxu0 0
        %2666 = vmatprep.subr.bf16.mxu0 0
        %2667 = vmatpush1.bf16.msra.mxu0 0
        %2668 = vmatprep.subr.bf16.mxu0 0
        %2669 = vmatpush1.bf16.msra.mxu0 0
        %2670 = vmatprep.mubr.bf16.mxu0 0
        %2671 = vmatmul.mubr.bf16.gmra.mrb[0].mxu0 %v2633
        %v2672 = vpop.f32.mrb[0].mxu0
        %v2673 = vadd.f32 0.0, %v2672
        %v2674 = vpop.f32.mrb[0].mxu0
        %v2675 = vpop.f32.mrb[0].mxu0
        %v2676 = vadd.f32 0.0, %v2675
        %v2677 = vpop.f32.mrb[0].mxu0
        %2678 = vdwg.mxu0
        %2679 = vrot.lane.b32.xlu0 %v2401, 64
        %v2680 = vpop.permute.xlu0 %2679
        %2681 = vrot.lane.b32.xlu0 %v2402, 64
        %v2682 = vpop.permute.xlu0 %2681
        %2683 = vrot.lane.b32.xlu0 %v2403, 64
        %v2684 = vpop.permute.xlu0 %2683
        %v2686 = vsel %vm1423, %v2680, 0
        %v2689 = vsel %vm1423, %v2682, 0
        %v2692 = vsel %vm1423, %v2684, 0
        %2694 = vmatprep.subr.bf16.mxu0 0
        %2695 = vmatpush1.bf16.xpose.msra.mxu0 %v2689
        %2696 = vmatprep.subr.bf16.mxu0 0
        %2697 = vmatpush1.bf16.xpose.msra.mxu0 %v2692
        %2698 = vmatprep.subr.bf16.mxu0 0
        %2699 = vmatpush1.bf16.xpose.msra.mxu0 0
        %2700 = vmatprep.subr.bf16.mxu0 0
        %2701 = vmatpush1.bf16.xpose.msra.mxu0 0
        %2702 = vmatprep.subr.bf16.mxu0 0
        %2703 = vmatpush1.bf16.xpose.msra.mxu0 0
        %2704 = vmatprep.subr.bf16.mxu0 0
        %2705 = vmatpush1.bf16.xpose.msra.mxu0 0
        %2706 = vmatprep.subr.bf16.mxu0 0
        %2707 = vmatpush1.bf16.xpose.msra.mxu0 0
        %2708 = vmatprep.subr.bf16.mxu0 0
        %2709 = vmatpush1.bf16.xpose.msra.mxu0 0
        %2710 = vmatprep.subr.bf16.mxu0 0
        %2711 = vmatpush1.bf16.xpose.msra.mxu0 0
        %2712 = vmatprep.subr.bf16.mxu0 0
        %2713 = vmatpush1.bf16.xpose.msra.mxu0 0
        %2714 = vmatprep.subr.bf16.mxu0 0
        %2715 = vmatpush1.bf16.xpose.msra.mxu0 0
        %2716 = vmatprep.subr.bf16.mxu0 0
        %2717 = vmatpush1.bf16.xpose.msra.mxu0 0
        %2718 = vmatprep.subr.bf16.mxu0 0
        %2719 = vmatpush1.bf16.xpose.msra.mxu0 0
        %2720 = vmatprep.subr.bf16.mxu0 0
        %2721 = vmatpush1.bf16.xpose.msra.mxu0 0
        %2722 = vmatprep.subr.bf16.mxu0 0
        %2723 = vmatpush1.bf16.xpose.msra.mxu0 0
        %2724 = vmatprep.subr.bf16.mxu0 0
        %2725 = vmatpush1.bf16.xpose.msra.mxu0 0
        %2726 = vmatprep.mubr.bf16.mxu0 0
        %2727 = vmatmul.mubr.bf16.gmra.mrb[0].mxu0 %v2686
        %v2728 = vpop.f32.mrb[0].mxu0
        %v2729 = vadd.f32 0.0, %v2728
        %v2730 = vpop.f32.mrb[0].mxu0
        %v2731 = vpop.f32.mrb[0].mxu0
        %v2732 = vadd.f32 0.0, %v2731
        %v2733 = vpop.f32.mrb[0].mxu0
        %2734 = vdwg.mxu0
        %v2735 = vmul.f32 %v2729, 0.17677669
        %v2736 = vmul.f32 %v2732, 0.17677669
        %v2737 = vadd.f32 %v2735, %v1097
        %v2738 = vadd.f32 %v2736, %v1097
        %v2739 = vsel %vm2461, %v2737, -inf
        %2740 = vmax.xlane.f32.xlu0 %v2739
        %v2741 = vpop.xlane.xlu0 %2740
        %v2742 = vsel %vm2461, %v2738, -inf
        %2743 = vmax.xlane.f32.xlu0 %v2742
        %v2744 = vpop.xlane.xlu0 %2743
        %v2745 = vsub.f32 %v2737, %v2741
        %v2746 = vsub.f32 %v2738, %v2744
        %v2747 = vmul.f32 %v2745, 1.442695
        %v2748 = vpow.pop %v2747
        %v2749 = vmul.f32 %v2746, 1.442695
        %v2750 = vpow.pop %v2749
        %v2751 = vsel %vm2461, %v2748, 0.0
        %2752 = vadd.xlane.f32.xlu0 %v2751
        %v2753 = vpop.xlane.xlu0 %2752
        %v2754 = vsel %vm2461, %v2750, 0.0
        %2755 = vadd.xlane.f32.xlu0 %v2754
        %v2756 = vpop.xlane.xlu0 %2755
        %v2757 = vrcp.pop %v2753
        %v2758 = vrcp.pop %v2756
        %v2759 = vmul.f32 %v2748, %v2757
        %v2760 = vmul.f32 %v2750, %v2758
        %v2761 = vsel %vm2485, 0.0, %v2759
        %v2762 = vsel %vm2485, 0.0, %v2760
        %v2763 = vpack.c.bf16 %v2762, %v2761
        %2764 = vrot.lane.b32.xlu0 %v2404, 64
        %v2765 = vpop.permute.xlu0 %2764
        %2766 = vrot.lane.b32.xlu0 %v2405, 64
        %v2767 = vpop.permute.xlu0 %2766
        %v2770 = vsel %vm2461, %v2763, 0
        %v2773 = vsel %vm2492, %v2767, 0
        %2775 = vmatprep.subr.bf16.mxu0 0
        %2776 = vmatpush1.bf16.msra.mxu0 %v2765
        %2777 = vmatprep.subr.bf16.mxu0 0
        %2778 = vmatpush1.bf16.msra.mxu0 %v2773
        %2779 = vmatprep.subr.bf16.mxu0 0
        %2780 = vmatpush1.bf16.msra.mxu0 0
        %2781 = vmatprep.subr.bf16.mxu0 0
        %2782 = vmatpush1.bf16.msra.mxu0 0
        %2783 = vmatprep.subr.bf16.mxu0 0
        %2784 = vmatpush1.bf16.msra.mxu0 0
        %2785 = vmatprep.subr.bf16.mxu0 0
        %2786 = vmatpush1.bf16.msra.mxu0 0
        %2787 = vmatprep.subr.bf16.mxu0 0
        %2788 = vmatpush1.bf16.msra.mxu0 0
        %2789 = vmatprep.subr.bf16.mxu0 0
        %2790 = vmatpush1.bf16.msra.mxu0 0
        %2791 = vmatprep.subr.bf16.mxu0 0
        %2792 = vmatpush1.bf16.msra.mxu0 0
        %2793 = vmatprep.subr.bf16.mxu0 0
        %2794 = vmatpush1.bf16.msra.mxu0 0
        %2795 = vmatprep.subr.bf16.mxu0 0
        %2796 = vmatpush1.bf16.msra.mxu0 0
        %2797 = vmatprep.subr.bf16.mxu0 0
        %2798 = vmatpush1.bf16.msra.mxu0 0
        %2799 = vmatprep.subr.bf16.mxu0 0
        %2800 = vmatpush1.bf16.msra.mxu0 0
        %2801 = vmatprep.subr.bf16.mxu0 0
        %2802 = vmatpush1.bf16.msra.mxu0 0
        %2803 = vmatprep.subr.bf16.mxu0 0
        %2804 = vmatpush1.bf16.msra.mxu0 0
        %2805 = vmatprep.subr.bf16.mxu0 0
        %2806 = vmatpush1.bf16.msra.mxu0 0
        %2807 = vmatprep.mubr.bf16.mxu0 0
        %2808 = vmatmul.mubr.bf16.gmra.mrb[0].mxu0 %v2770
        %v2809 = vpop.f32.mrb[0].mxu0
        %v2810 = vadd.f32 0.0, %v2809
        %v2811 = vpop.f32.mrb[0].mxu0
        %v2812 = vpop.f32.mrb[0].mxu0
        %v2813 = vadd.f32 0.0, %v2812
        %v2814 = vpop.f32.mrb[0].mxu0
        %2815 = vdwg.mxu0
        %2816 = vrot.lane.b32.xlu0 %v2401, 32
        %v2817 = vpop.permute.xlu0 %2816
        %2818 = vrot.lane.b32.xlu0 %v2402, 32
        %v2819 = vpop.permute.xlu0 %2818
        %2820 = vrot.lane.b32.xlu0 %v2403, 32
        %v2821 = vpop.permute.xlu0 %2820
        %v2823 = vsel %vm1423, %v2817, 0
        %v2826 = vsel %vm1423, %v2819, 0
        %v2829 = vsel %vm1423, %v2821, 0
        %2831 = vmatprep.subr.bf16.mxu0 0
        %2832 = vmatpush1.bf16.xpose.msra.mxu0 %v2826
        %2833 = vmatprep.subr.bf16.mxu0 0
        %2834 = vmatpush1.bf16.xpose.msra.mxu0 %v2829
        %2835 = vmatprep.subr.bf16.mxu0 0
        %2836 = vmatpush1.bf16.xpose.msra.mxu0 0
        %2837 = vmatprep.subr.bf16.mxu0 0
        %2838 = vmatpush1.bf16.xpose.msra.mxu0 0
        %2839 = vmatprep.subr.bf16.mxu0 0
        %2840 = vmatpush1.bf16.xpose.msra.mxu0 0
        %2841 = vmatprep.subr.bf16.mxu0 0
        %2842 = vmatpush1.bf16.xpose.msra.mxu0 0
        %2843 = vmatprep.subr.bf16.mxu0 0
        %2844 = vmatpush1.bf16.xpose.msra.mxu0 0
        %2845 = vmatprep.subr.bf16.mxu0 0
        %2846 = vmatpush1.bf16.xpose.msra.mxu0 0
        %2847 = vmatprep.subr.bf16.mxu0 0
        %2848 = vmatpush1.bf16.xpose.msra.mxu0 0
        %2849 = vmatprep.subr.bf16.mxu0 0
        %2850 = vmatpush1.bf16.xpose.msra.mxu0 0
        %2851 = vmatprep.subr.bf16.mxu0 0
        %2852 = vmatpush1.bf16.xpose.msra.mxu0 0
        %2853 = vmatprep.subr.bf16.mxu0 0
        %2854 = vmatpush1.bf16.xpose.msra.mxu0 0
        %2855 = vmatprep.subr.bf16.mxu0 0
        %2856 = vmatpush1.bf16.xpose.msra.mxu0 0
        %2857 = vmatprep.subr.bf16.mxu0 0
        %2858 = vmatpush1.bf16.xpose.msra.mxu0 0
        %2859 = vmatprep.subr.bf16.mxu0 0
        %2860 = vmatpush1.bf16.xpose.msra.mxu0 0
        %2861 = vmatprep.subr.bf16.mxu0 0
        %2862 = vmatpush1.bf16.xpose.msra.mxu0 0
        %2863 = vmatprep.mubr.bf16.mxu0 0
        %2864 = vmatmul.mubr.bf16.gmra.mrb[0].mxu0 %v2823
        %v2865 = vpop.f32.mrb[0].mxu0
        %v2866 = vadd.f32 0.0, %v2865
        %v2867 = vpop.f32.mrb[0].mxu0
        %v2868 = vpop.f32.mrb[0].mxu0
        %v2869 = vadd.f32 0.0, %v2868
        %v2870 = vpop.f32.mrb[0].mxu0
        %2871 = vdwg.mxu0
        %v2872 = vmul.f32 %v2866, 0.17677669
        %v2873 = vmul.f32 %v2869, 0.17677669
        %v2874 = vadd.f32 %v2872, %v1097
        %v2875 = vadd.f32 %v2873, %v1097
        %v2876 = vsel %vm2461, %v2874, -inf
        %2877 = vmax.xlane.f32.xlu0 %v2876
        %v2878 = vpop.xlane.xlu0 %2877
        %v2879 = vsel %vm2461, %v2875, -inf
        %2880 = vmax.xlane.f32.xlu0 %v2879
        %v2881 = vpop.xlane.xlu0 %2880
        %v2882 = vsub.f32 %v2874, %v2878
        %v2883 = vsub.f32 %v2875, %v2881
        %v2884 = vmul.f32 %v2882, 1.442695
        %v2885 = vpow.pop %v2884
        %v2886 = vmul.f32 %v2883, 1.442695
        %v2887 = vpow.pop %v2886
        %v2888 = vsel %vm2461, %v2885, 0.0
        %2889 = vadd.xlane.f32.xlu0 %v2888
        %v2890 = vpop.xlane.xlu0 %2889
        %v2891 = vsel %vm2461, %v2887, 0.0
        %2892 = vadd.xlane.f32.xlu0 %v2891
        %v2893 = vpop.xlane.xlu0 %2892
        %v2894 = vrcp.pop %v2890
        %v2895 = vrcp.pop %v2893
        %v2896 = vmul.f32 %v2885, %v2894
        %v2897 = vmul.f32 %v2887, %v2895
        %v2898 = vsel %vm2485, 0.0, %v2896
        %v2899 = vsel %vm2485, 0.0, %v2897
        %v2900 = vpack.c.bf16 %v2899, %v2898
        %2901 = vrot.lane.b32.xlu0 %v2404, 32
        %v2902 = vpop.permute.xlu0 %2901
        %2903 = vrot.lane.b32.xlu0 %v2405, 32
        %v2904 = vpop.permute.xlu0 %2903
        %v2907 = vsel %vm2461, %v2900, 0
        %v2910 = vsel %vm2492, %v2904, 0
        %2912 = vmatprep.subr.bf16.mxu0 0
        %2913 = vmatpush1.bf16.msra.mxu0 %v2902
        %2914 = vmatprep.subr.bf16.mxu0 0
        %2915 = vmatpush1.bf16.msra.mxu0 %v2910
        %2916 = vmatprep.subr.bf16.mxu0 0
        %2917 = vmatpush1.bf16.msra.mxu0 0
        %2918 = vmatprep.subr.bf16.mxu0 0
        %2919 = vmatpush1.bf16.msra.mxu0 0
        %2920 = vmatprep.subr.bf16.mxu0 0
        %2921 = vmatpush1.bf16.msra.mxu0 0
        %2922 = vmatprep.subr.bf16.mxu0 0
        %2923 = vmatpush1.bf16.msra.mxu0 0
        %2924 = vmatprep.subr.bf16.mxu0 0
        %2925 = vmatpush1.bf16.msra.mxu0 0
        %2926 = vmatprep.subr.bf16.mxu0 0
        %2927 = vmatpush1.bf16.msra.mxu0 0
        %2928 = vmatprep.subr.bf16.mxu0 0
        %2929 = vmatpush1.bf16.msra.mxu0 0
        %2930 = vmatprep.subr.bf16.mxu0 0
        %2931 = vmatpush1.bf16.msra.mxu0 0
        %2932 = vmatprep.subr.bf16.mxu0 0
        %2933 = vmatpush1.bf16.msra.mxu0 0
        %2934 = vmatprep.subr.bf16.mxu0 0
        %2935 = vmatpush1.bf16.msra.mxu0 0
        %2936 = vmatprep.subr.bf16.mxu0 0
        %2937 = vmatpush1.bf16.msra.mxu0 0
        %2938 = vmatprep.subr.bf16.mxu0 0
        %2939 = vmatpush1.bf16.msra.mxu0 0
        %2940 = vmatprep.subr.bf16.mxu0 0
        %2941 = vmatpush1.bf16.msra.mxu0 0
        %2942 = vmatprep.subr.bf16.mxu0 0
        %2943 = vmatpush1.bf16.msra.mxu0 0
        %2944 = vmatprep.mubr.bf16.mxu0 0
        %2945 = vmatmul.mubr.bf16.gmra.mrb[0].mxu0 %v2907
        %v2946 = vpop.f32.mrb[0].mxu0
        %v2947 = vadd.f32 0.0, %v2946
        %v2948 = vpop.f32.mrb[0].mxu0
        %v2949 = vpop.f32.mrb[0].mxu0
        %v2950 = vadd.f32 0.0, %v2949
        %v2951 = vpop.f32.mrb[0].mxu0
        %2952 = vdwg.mxu0
        %2955 = vrot.lane.b32.xlu0 %v2673, 32
        %v2956 = vpop.permute.xlu0 %2955
        %2957 = vrot.lane.b32.xlu0 %v2676, 32
        %v2958 = vpop.permute.xlu0 %2957
        %2963 = vrot.lane.b32.xlu0 %v2810, 64
        %v2964 = vpop.permute.xlu0 %2963
        %2965 = vrot.lane.b32.xlu0 %v2813, 64
        %v2966 = vpop.permute.xlu0 %2965
        %2971 = vrot.lane.b32.xlu0 %v2947, 96
        %v2972 = vpop.permute.xlu0 %2971
        %2973 = vrot.lane.b32.xlu0 %v2950, 96
        %v2974 = vpop.permute.xlu0 %2973
        %v2977 = vsel %vm1423, %v2531, %v2956
        %v2978 = vsel %vm1423, %v2534, %v2958
        %v2979 = vsel %vm1955, %v2977, %v2964
        %v2980 = vsel %vm1955, %v2978, %v2966
        %v2981 = vsel %vm1958, %v2979, %v2972
        %v2982 = vsel %vm1958, %v2980, %v2974
        %v2983 = vpack.c.bf16 %v2982, %v2981
        %v2985 = vlaneseq
        %v2986 = vshrl.u32 %v2985, 7
        %v2987 = vsub.s32 0, %v2986
        %v2988 = vrot.slane %v2400, %v2987
        %v3006 = vunpack.c.l.b16 %v2384
        %v3007 = vunpack.c.l.b16 %v2385
        %v3008 = vunpack.c.l.b16 %v2386
        %v3009 = vunpack.c.l.b16 %v2387
        %v3010 = vunpack.c.l.b16 %v2388
        %v3011 = vunpack.c.l.b16 %v2389
        %v3012 = vunpack.c.l.b16 %v2390
        %v3013 = vunpack.c.l.b16 %v2391
        %v3014 = vunpack.c.l.b16 %v2392
        %v3015 = vunpack.c.l.b16 %v2393
        %v3016 = vunpack.c.l.b16 %v2394
        %v3017 = vunpack.c.l.b16 %v2395
        %v3018 = vunpack.c.l.b16 %v2396
        %v3019 = vunpack.c.l.b16 %v2397
        %v3020 = vunpack.c.l.b16 %v2398
        %v3021 = vunpack.c.l.b16 %v2399
        %v3022 = vpack.c.b16 %v3007, %v3006
        %v3023 = vpack.c.b16 %v3009, %v3008
        %v3024 = vpack.c.b16 %v3011, %v3010
        %v3025 = vpack.c.b16 %v3013, %v3012
        %v3026 = vpack.c.b16 %v3015, %v3014
        %v3027 = vpack.c.b16 %v3017, %v3016
        %v3028 = vpack.c.b16 %v3019, %v3018
        %v3029 = vpack.c.b16 %v3021, %v3020
        %3038 = vmatprep.subr.bf16.mxu0 0
        %3039 = vmatpush1.bf16.msra.mxu0 %v3022
        %3040 = vmatprep.subr.bf16.mxu0 0
        %3041 = vmatpush1.bf16.msra.mxu0 %v3023
        %3042 = vmatprep.subr.bf16.mxu0 0
        %3043 = vmatpush1.bf16.msra.mxu0 %v3024
        %3044 = vmatprep.subr.bf16.mxu0 0
        %3045 = vmatpush1.bf16.msra.mxu0 %v3025
        %3046 = vmatprep.subr.bf16.mxu0 0
        %3047 = vmatpush1.bf16.msra.mxu0 %v3026
        %3048 = vmatprep.subr.bf16.mxu0 0
        %3049 = vmatpush1.bf16.msra.mxu0 %v3027
        %3050 = vmatprep.subr.bf16.mxu0 0
        %3051 = vmatpush1.bf16.msra.mxu0 %v3028
        %3052 = vmatprep.subr.bf16.mxu0 0
        %3053 = vmatpush1.bf16.msra.mxu0 %v3029
        %3054 = vmatprep.subr.bf16.mxu0 0
        %3055 = vmatpush1.bf16.msra.mxu0 0
        %3056 = vmatprep.subr.bf16.mxu0 0
        %3057 = vmatpush1.bf16.msra.mxu0 0
        %3058 = vmatprep.subr.bf16.mxu0 0
        %3059 = vmatpush1.bf16.msra.mxu0 0
        %3060 = vmatprep.subr.bf16.mxu0 0
        %3061 = vmatpush1.bf16.msra.mxu0 0
        %3062 = vmatprep.subr.bf16.mxu0 0
        %3063 = vmatpush1.bf16.msra.mxu0 0
        %3064 = vmatprep.subr.bf16.mxu0 0
        %3065 = vmatpush1.bf16.msra.mxu0 0
        %3066 = vmatprep.subr.bf16.mxu0 0
        %3067 = vmatpush1.bf16.msra.mxu0 0
        %3068 = vmatprep.subr.bf16.mxu0 0
        %3069 = vmatpush1.bf16.msra.mxu0 0
        %3070 = vmatprep.mubr.bf16.mxu0 0
        %3071 = vmatmul.mubr.bf16.gmra.mrb[0].mxu0 %v2983
        %v3072 = vpop.f32.mrb[0].mxu0
        %v3073 = vadd.f32 %v2988, %v3072
        %v3074 = vpop.f32.mrb[0].mxu0
        %v3075 = vpop.f32.mrb[0].mxu0
        %v3076 = vadd.f32 %v2988, %v3075
        %v3077 = vpop.f32.mrb[0].mxu0
        %3078 = vdwg.mxu0
        %v3079 = vadd.f32 %v2057, %v3073
        %v3080 = vadd.f32 %v2058, %v3076
        %v3081 = vpack.c.bf16 %v3080, %v3079
        %v3082 = vld [vmem:[%s1056] sm:$0xff]
        %v3083 = vld [vmem:[%s1056 + $0x8] sm:$0xff]
        %v3084 = vld [vmem:[%s1056 + $0x10] sm:$0xff]
        %v3085 = vld [vmem:[%s1056 + $0x18] sm:$0xff]
        %v3086 = vld [vmem:[%s1056 + $0x20] sm:$0xff]
        %v3087 = vld [vmem:[%s1056 + $0x28] sm:$0xff]
        %v3088 = vld [vmem:[%s1056 + $0x30] sm:$0xff]
        %v3089 = vld [vmem:[%s1056 + $0x38] sm:$0xff]
        %v3090 = vld [vmem:[%s1056 + $0x40] sm:$0xff]
        %v3091 = vld [vmem:[%s1056 + $0x48] sm:$0xff]
        %v3092 = vld [vmem:[%s1056 + $0x50] sm:$0xff]
        %v3093 = vld [vmem:[%s1056 + $0x58] sm:$0xff]
        %v3094 = vld [vmem:[%s1056 + $0x60] sm:$0xff]
        %v3095 = vld [vmem:[%s1056 + $0x68] sm:$0xff]
        %v3096 = vld [vmem:[%s1056 + $0x70] sm:$0xff]
        %v3097 = vld [vmem:[%s1056 + $0x78] sm:$0xff]
        %v3098 = vld [vmem:[%s1060] sm:$0x3]
        %v3100 = vlaneseq
        %v3101 = vshrl.u32 %v3100, 7
        %v3102 = vsub.s32 0, %v3101
        %v3103 = vrot.slane %v3098, %v3102
        %v3104 = vlaneseq
        %v3105 = vshrl.u32 %v3104, 7
        %v3106 = vsub.s32 1, %v3105
        %v3107 = vrot.slane %v3098, %v3106
        %v3126 = vunpack.c.l.b16 %v3082
        %v3127 = vunpack.c.h.b16 %v3082
        %v3128 = vunpack.c.l.b16 %v3083
        %v3129 = vunpack.c.h.b16 %v3083
        %v3130 = vunpack.c.l.b16 %v3084
        %v3131 = vunpack.c.h.b16 %v3084
        %v3132 = vunpack.c.l.b16 %v3085
        %v3133 = vunpack.c.h.b16 %v3085
        %v3134 = vunpack.c.l.b16 %v3086
        %v3135 = vunpack.c.h.b16 %v3086
        %v3136 = vunpack.c.l.b16 %v3087
        %v3137 = vunpack.c.h.b16 %v3087
        %v3138 = vunpack.c.l.b16 %v3088
        %v3139 = vunpack.c.h.b16 %v3088
        %v3140 = vunpack.c.l.b16 %v3089
        %v3141 = vunpack.c.h.b16 %v3089
        %v3142 = vunpack.c.l.b16 %v3090
        %v3143 = vunpack.c.h.b16 %v3090
        %v3144 = vunpack.c.l.b16 %v3091
        %v3145 = vunpack.c.h.b16 %v3091
        %v3146 = vunpack.c.l.b16 %v3092
        %v3147 = vunpack.c.h.b16 %v3092
        %v3148 = vunpack.c.l.b16 %v3093
        %v3149 = vunpack.c.h.b16 %v3093
        %v3150 = vunpack.c.l.b16 %v3094
        %v3151 = vunpack.c.h.b16 %v3094
        %v3152 = vunpack.c.l.b16 %v3095
        %v3153 = vunpack.c.h.b16 %v3095
        %v3154 = vunpack.c.l.b16 %v3096
        %v3155 = vunpack.c.h.b16 %v3096
        %v3156 = vunpack.c.l.b16 %v3097
        %v3157 = vunpack.c.h.b16 %v3097
        %v3158 = vpack.c.b16 %v3128, %v3126
        %v3159 = vpack.c.b16 %v3129, %v3127
        %v3160 = vpack.c.b16 %v3132, %v3130
        %v3161 = vpack.c.b16 %v3133, %v3131
        %v3162 = vpack.c.b16 %v3136, %v3134
        %v3163 = vpack.c.b16 %v3137, %v3135
        %v3164 = vpack.c.b16 %v3140, %v3138
        %v3165 = vpack.c.b16 %v3141, %v3139
        %v3166 = vpack.c.b16 %v3144, %v3142
        %v3167 = vpack.c.b16 %v3145, %v3143
        %v3168 = vpack.c.b16 %v3148, %v3146
        %v3169 = vpack.c.b16 %v3149, %v3147
        %v3170 = vpack.c.b16 %v3152, %v3150
        %v3171 = vpack.c.b16 %v3153, %v3151
        %v3172 = vpack.c.b16 %v3156, %v3154
        %v3173 = vpack.c.b16 %v3157, %v3155
        %3190 = vmatprep.subr.bf16.mxu0 %v3159
        %3191 = vmatpush1.bf16.msra.mxu0 %v3158
        %3192 = vmatprep.subr.bf16.mxu0 %v3161
        %3193 = vmatpush1.bf16.msra.mxu0 %v3160
        %3194 = vmatprep.subr.bf16.mxu0 %v3163
        %3195 = vmatpush1.bf16.msra.mxu0 %v3162
        %3196 = vmatprep.subr.bf16.mxu0 %v3165
        %3197 = vmatpush1.bf16.msra.mxu0 %v3164
        %3198 = vmatprep.subr.bf16.mxu0 %v3167
        %3199 = vmatpush1.bf16.msra.mxu0 %v3166
        %3200 = vmatprep.subr.bf16.mxu0 %v3169
        %3201 = vmatpush1.bf16.msra.mxu0 %v3168
        %3202 = vmatprep.subr.bf16.mxu0 %v3171
        %3203 = vmatpush1.bf16.msra.mxu0 %v3170
        %3204 = vmatprep.subr.bf16.mxu0 %v3173
        %3205 = vmatpush1.bf16.msra.mxu0 %v3172
        %3206 = vmatprep.subr.bf16.mxu0 0
        %3207 = vmatpush1.bf16.msra.mxu0 0
        %3208 = vmatprep.subr.bf16.mxu0 0
        %3209 = vmatpush1.bf16.msra.mxu0 0
        %3210 = vmatprep.subr.bf16.mxu0 0
        %3211 = vmatpush1.bf16.msra.mxu0 0
        %3212 = vmatprep.subr.bf16.mxu0 0
        %3213 = vmatpush1.bf16.msra.mxu0 0
        %3214 = vmatprep.subr.bf16.mxu0 0
        %3215 = vmatpush1.bf16.msra.mxu0 0
        %3216 = vmatprep.subr.bf16.mxu0 0
        %3217 = vmatpush1.bf16.msra.mxu0 0
        %3218 = vmatprep.subr.bf16.mxu0 0
        %3219 = vmatpush1.bf16.msra.mxu0 0
        %3220 = vmatprep.subr.bf16.mxu0 0
        %3221 = vmatpush1.bf16.msra.mxu0 0
        %3222 = vmatprep.mubr.bf16.mxu0 0
        %3223 = vmatmul.mubr.bf16.gmra.mrb[0].mxu0 %v3081
        %v3224 = vpop.f32.mrb[0].mxu0
        %v3225 = vadd.f32 %v3103, %v3224
        %v3226 = vpop.f32.mrb[0].mxu0
        %v3227 = vadd.f32 %v3107, %v3226
        %v3228 = vpop.f32.mrb[0].mxu0
        %v3229 = vadd.f32 %v3103, %v3228
        %v3230 = vpop.f32.mrb[0].mxu0
        %v3231 = vadd.f32 %v3107, %v3230
        %3232 = vdwg.mxu0
        %v3233 = vmax.f32 %v3225, 0.0
        %v3234 = vmax.f32 %v3227, 0.0
        %v3235 = vmax.f32 %v3229, 0.0
        %v3236 = vmax.f32 %v3231, 0.0
        %v3237 = vpack.c.bf16 %v3235, %v3233
        %v3238 = vpack.c.bf16 %v3236, %v3234
        %v3239 = vld [vmem:[%s872] sm:$0xf]
        %v3240 = vld [vmem:[%s872 + $0x4] sm:$0xf]
        %v3241 = vld [vmem:[%s872 + $0x8] sm:$0xf]
        %v3242 = vld [vmem:[%s872 + $0xc] sm:$0xf]
        %v3243 = vld [vmem:[%s872 + $0x10] sm:$0xf]
        %v3244 = vld [vmem:[%s872 + $0x14] sm:$0xf]
        %v3245 = vld [vmem:[%s872 + $0x18] sm:$0xf]
        %v3246 = vld [vmem:[%s872 + $0x1c] sm:$0xf]
        %v3247 = vld [vmem:[%s872 + $0x20] sm:$0xf]
        %v3248 = vld [vmem:[%s872 + $0x24] sm:$0xf]
        %v3249 = vld [vmem:[%s872 + $0x28] sm:$0xf]
        %v3250 = vld [vmem:[%s872 + $0x2c] sm:$0xf]
        %v3251 = vld [vmem:[%s872 + $0x30] sm:$0xf]
        %v3252 = vld [vmem:[%s872 + $0x34] sm:$0xf]
        %v3253 = vld [vmem:[%s872 + $0x38] sm:$0xf]
        %v3254 = vld [vmem:[%s872 + $0x3c] sm:$0xf]
        %v3255 = vld [vmem:[%s872 + $0x40] sm:$0xf]
        %v3256 = vld [vmem:[%s872 + $0x44] sm:$0xf]
        %v3257 = vld [vmem:[%s872 + $0x48] sm:$0xf]
        %v3258 = vld [vmem:[%s872 + $0x4c] sm:$0xf]
        %v3259 = vld [vmem:[%s872 + $0x50] sm:$0xf]
        %v3260 = vld [vmem:[%s872 + $0x54] sm:$0xf]
        %v3261 = vld [vmem:[%s872 + $0x58] sm:$0xf]
        %v3262 = vld [vmem:[%s872 + $0x5c] sm:$0xf]
        %v3263 = vld [vmem:[%s872 + $0x60] sm:$0xf]
        %v3264 = vld [vmem:[%s872 + $0x64] sm:$0xf]
        %v3265 = vld [vmem:[%s872 + $0x68] sm:$0xf]
        %v3266 = vld [vmem:[%s872 + $0x6c] sm:$0xf]
        %v3267 = vld [vmem:[%s872 + $0x70] sm:$0xf]
        %v3268 = vld [vmem:[%s872 + $0x74] sm:$0xf]
        %v3269 = vld [vmem:[%s872 + $0x78] sm:$0xf]
        %v3270 = vld [vmem:[%s872 + $0x7c] sm:$0xf]
        %v3271 = vld [vmem:[%s1063] sm:$0x1]
        %v3273 = vlaneseq
        %v3274 = vshrl.u32 %v3273, 7
        %v3275 = vsub.s32 0, %v3274
        %v3276 = vrot.slane %v3271, %v3275
        %v3310 = vunpack.c.l.b16 %v3239
        %v3311 = vunpack.c.l.b16 %v3240
        %v3312 = vunpack.c.l.b16 %v3241
        %v3313 = vunpack.c.l.b16 %v3242
        %v3314 = vunpack.c.l.b16 %v3243
        %v3315 = vunpack.c.l.b16 %v3244
        %v3316 = vunpack.c.l.b16 %v3245
        %v3317 = vunpack.c.l.b16 %v3246
        %v3318 = vunpack.c.l.b16 %v3247
        %v3319 = vunpack.c.l.b16 %v3248
        %v3320 = vunpack.c.l.b16 %v3249
        %v3321 = vunpack.c.l.b16 %v3250
        %v3322 = vunpack.c.l.b16 %v3251
        %v3323 = vunpack.c.l.b16 %v3252
        %v3324 = vunpack.c.l.b16 %v3253
        %v3325 = vunpack.c.l.b16 %v3254
        %v3326 = vunpack.c.l.b16 %v3255
        %v3327 = vunpack.c.l.b16 %v3256
        %v3328 = vunpack.c.l.b16 %v3257
        %v3329 = vunpack.c.l.b16 %v3258
        %v3330 = vunpack.c.l.b16 %v3259
        %v3331 = vunpack.c.l.b16 %v3260
        %v3332 = vunpack.c.l.b16 %v3261
        %v3333 = vunpack.c.l.b16 %v3262
        %v3334 = vunpack.c.l.b16 %v3263
        %v3335 = vunpack.c.l.b16 %v3264
        %v3336 = vunpack.c.l.b16 %v3265
        %v3337 = vunpack.c.l.b16 %v3266
        %v3338 = vunpack.c.l.b16 %v3267
        %v3339 = vunpack.c.l.b16 %v3268
        %v3340 = vunpack.c.l.b16 %v3269
        %v3341 = vunpack.c.l.b16 %v3270
        %v3342 = vpack.c.b16 %v3311, %v3310
        %v3343 = vpack.c.b16 %v3313, %v3312
        %v3344 = vpack.c.b16 %v3315, %v3314
        %v3345 = vpack.c.b16 %v3317, %v3316
        %v3346 = vpack.c.b16 %v3319, %v3318
        %v3347 = vpack.c.b16 %v3321, %v3320
        %v3348 = vpack.c.b16 %v3323, %v3322
        %v3349 = vpack.c.b16 %v3325, %v3324
        %v3350 = vpack.c.b16 %v3327, %v3326
        %v3351 = vpack.c.b16 %v3329, %v3328
        %v3352 = vpack.c.b16 %v3331, %v3330
        %v3353 = vpack.c.b16 %v3333, %v3332
        %v3354 = vpack.c.b16 %v3335, %v3334
        %v3355 = vpack.c.b16 %v3337, %v3336
        %v3356 = vpack.c.b16 %v3339, %v3338
        %v3357 = vpack.c.b16 %v3341, %v3340
        %3374 = vmatprep.subr.bf16.mxu0 0
        %3375 = vmatpush1.bf16.msra.mxu0 %v3342
        %3376 = vmatprep.subr.bf16.mxu0 0
        %3377 = vmatpush1.bf16.msra.mxu0 %v3343
        %3378 = vmatprep.subr.bf16.mxu0 0
        %3379 = vmatpush1.bf16.msra.mxu0 %v3344
        %3380 = vmatprep.subr.bf16.mxu0 0
        %3381 = vmatpush1.bf16.msra.mxu0 %v3345
        %3382 = vmatprep.subr.bf16.mxu0 0
        %3383 = vmatpush1.bf16.msra.mxu0 %v3346
        %3384 = vmatprep.subr.bf16.mxu0 0
        %3385 = vmatpush1.bf16.msra.mxu0 %v3347
        %3386 = vmatprep.subr.bf16.mxu0 0
        %3387 = vmatpush1.bf16.msra.mxu0 %v3348
        %3388 = vmatprep.subr.bf16.mxu0 0
        %3389 = vmatpush1.bf16.msra.mxu0 %v3349
        %3390 = vmatprep.subr.bf16.mxu0 0
        %3391 = vmatpush1.bf16.msra.mxu0 %v3350
        %3392 = vmatprep.subr.bf16.mxu0 0
        %3393 = vmatpush1.bf16.msra.mxu0 %v3351
        %3394 = vmatprep.subr.bf16.mxu0 0
        %3395 = vmatpush1.bf16.msra.mxu0 %v3352
        %3396 = vmatprep.subr.bf16.mxu0 0
        %3397 = vmatpush1.bf16.msra.mxu0 %v3353
        %3398 = vmatprep.subr.bf16.mxu0 0
        %3399 = vmatpush1.bf16.msra.mxu0 %v3354
        %3400 = vmatprep.subr.bf16.mxu0 0
        %3401 = vmatpush1.bf16.msra.mxu0 %v3355
        %3402 = vmatprep.subr.bf16.mxu0 0
        %3403 = vmatpush1.bf16.msra.mxu0 %v3356
        %3404 = vmatprep.subr.bf16.mxu0 0
        %3405 = vmatpush1.bf16.msra.mxu0 %v3357
        %3406 = vmatprep.mubr.bf16.mxu0 %v3238
        %3407 = vmatmul.mubr.bf16.gmra.mrb[0].mxu0 %v3237
        %v3408 = vpop.f32.mrb[0].mxu0
        %v3409 = vadd.f32 %v3276, %v3408
        %v3410 = vpop.f32.mrb[0].mxu0
        %v3411 = vpop.f32.mrb[0].mxu0
        %v3412 = vadd.f32 %v3276, %v3411
        %v3413 = vpop.f32.mrb[0].mxu0
        %3414 = vdwg.mxu0
        %v3415 = vadd.f32 %v3079, %v3409
        %v3416 = vadd.f32 %v3080, %v3412
        %3417 = vst [vmem:[#allocation2] sm:$0xff] %v3415
        %3418 = vst [vmem:[#allocation2 + $0x8] sm:$0xff] %v3416
        %p3419 = scmp.eq.s32.totalorder %s55, 1
        // Predicated region
        $region125: #{transformer_decoder_forward.2} parent=99 // pred_check
          %p3420 = pneg %p3419
        $region126: #{transformer_decoder_forward.2} parent=99 // pred_check_branch
          %3422 = sbr.rel (%p3420) target = $region128
        $region127: #{transformer_decoder_forward.2} parent=99 // pred_region
          %3423 = vst [vmem:[%s1068] sm:$0xff] %v3415
          %3424 = vst [vmem:[%s1068 + $0x8] sm:$0xff] %v3416
        $region128: #{transformer_decoder_forward.2} parent=99 // pred_fallthru
          _
        %p3425 = scmp.lt.s32.totalorder %s54, 1
        %s3426 = scalar_select %p3425, %s54, 1
        %s3427 = smul.addr %s3426, 2
        %s3428 = smul.addr %s3427, 8
        %s3429 = scalar_lea.vmem %s22, %s3428
        // Predicated region
        $region129: #{transformer_decoder_forward.2} parent=99 // pred_check
          %p3430 = pneg %p600
        $region130: #{transformer_decoder_forward.2} parent=99 // pred_check_branch
          %3432 = sbr.rel (%p3430) target = $region132
        $region131: #{transformer_decoder_forward.2} parent=99 // pred_region
          _
        $region132: #{transformer_decoder_forward.2} parent=99 // pred_fallthru
          _
      $region100: #{transformer_decoder_forward.2} parent=5 // pred_fallthru
        _
      %p3433 = scmp.le.s32.totalorder 2, %s45
      // Predicated region
      $region133: #{transformer_decoder_forward.2} parent=5 // pred_check
        %p3434 = pneg %p3433
      $region134: #{transformer_decoder_forward.2} parent=5 // pred_check_branch
        %3436 = sbr.rel (%p3434) target = $region136
      $region135: #{transformer_decoder_forward.2} parent=5 // pred_region
        %s3437 = ssub.s32 %s45, 2
        // Predicated region
        $region137: #{transformer_decoder_forward.2} parent=135 // pred_check
          %p3438 = pneg %p606
        $region138: #{transformer_decoder_forward.2} parent=135 // pred_check_branch
          %3440 = sbr.rel (%p3438) target = $region140
        $region139: #{transformer_decoder_forward.2} parent=135 // pred_region
          %p3441 = scmp.lt.s32.totalorder %s56, 1
          %s3442 = scalar_select %p3441, %s56, 1
          %s3443 = smul.addr %s3442, 2
          %s3444 = smul.addr %s3443, 8
          %s3445 = scalar_lea.vmem %s22, %s3444
        $region140: #{transformer_decoder_forward.2} parent=135 // pred_fallthru
          _
      $region136: #{transformer_decoder_forward.2} parent=5 // pred_fallthru
        _
    $region6: #{transformer_decoder_forward.2} parent=1 // loop_footer
      %s49 = sadd.s32 1, %s45
    $region7: #{transformer_decoder_forward.2} parent=1 // loop_footer_branch
      %44 = sbr.rel target = $region3
    $region8: #{transformer_decoder_forward.2} parent=1 // loop_exit
      _
    %3446 = vsyncpa [#allocation7], 1
    %s3447 = scalar_lea.sflag [#allocation7], 1
    %3448 = vsyncpa %s3447, 1
    %3449 = vsyncpa [#allocation9], 1
    %s3450 = scalar_lea.sflag [#allocation9], 1
    %3451 = vsyncpa %s3450, 1
    %3452 = vsyncpa [#allocation12], 1
    %s3453 = scalar_lea.sflag [#allocation12], 1
    %3454 = vsyncpa %s3453, 1

</llo_original>
